<compile_context>
chip_gen: v7x
topology: tpu7x:2x2x1
jax: 0.10.0
libtpu: 0.0.40
codegen_flags: <defaults>
</compile_context>

<pallas_src>
import functools

import jax
import jax.numpy as jnp
from jax.experimental import pallas as pl
from jax.experimental.pallas import tpu as pltpu


_LANE = 128      # vreg lane width  (last-dim tiling)
_SUBLANE = 8     # vreg sublane width (second-to-last-dim tiling)
_MAX_CHUNK = 32  # max timesteps processed per grid step


def _round_up(x, m):
    return ((x + m - 1) // m) * m


# ---------------------------------------------------------------------------
# Feature probe: single-buffered BlockSpecs (pipeline_mode=pl.Buffered(1)).
# Runs once, eagerly (outside jit), so unsupported JAX versions cleanly fall
# back to default double-buffered BlockSpecs.
# ---------------------------------------------------------------------------
_SINGLE_BUFFER_OK = None


def _single_buffer_supported():
    global _SINGLE_BUFFER_OK
    if _SINGLE_BUFFER_OK is None:
        try:
            def k(x_ref, o_ref):
                o_ref[...] = x_ref[...] + 1.0

            spec = pl.BlockSpec((_SUBLANE, _LANE), lambda i: (0, 0),
                                pipeline_mode=pl.Buffered(1))
            out = pl.pallas_call(
                k,
                out_shape=jax.ShapeDtypeStruct((_SUBLANE, _LANE), jnp.float32),
                grid=(1,),
                in_specs=[spec],
                out_specs=pl.BlockSpec((_SUBLANE, _LANE), lambda i: (0, 0)),
            )(jnp.zeros((_SUBLANE, _LANE), jnp.float32))
            jax.block_until_ready(out)
            _SINGLE_BUFFER_OK = True
        except Exception:  # feature detection only; fall back safely
            _SINGLE_BUFFER_OK = False
    return _SINGLE_BUFFER_OK


# ---------------------------------------------------------------------------
# Fused multi-layer LSTM kernel (chunked over time, batch-tiled).
# ---------------------------------------------------------------------------
def _make_encoder_kernel(num_layers, seq_len, tc, tb, h_pad, unroll):
    """Kernel refs (in order):
      x_ref               : (tc, tb, Ep)     embedded input chunk (f32)
      w_ih_0..w_ih_{L-1}  : (In_p, 4*Hp)     input-projection weights (bf16)
      w_hh_0..w_hh_{L-1}  : (Hp, 4*Hp)       recurrent weights (bf16)
      b_0..b_{L-1}        : (1, 4*Hp)        combined bias (f32)
      h_out_ref, c_out_ref: (L, tb, Hp)      resident h/c carry == final out
      seq_sc              : (tc, tb, Hp)     inter-layer chunk (VMEM, f32)
      gx_sc               : (tc, tb, 4*Hp)   hoisted input gates (VMEM, f32)
    """

    def kernel(*args):
        x_ref = args[0]
        w_ih_refs = args[1:1 + num_layers]
        w_hh_refs = args[1 + num_layers:1 + 2 * num_layers]
        b_refs = args[1 + 2 * num_layers:1 + 3 * num_layers]
        h_out_ref = args[1 + 3 * num_layers]
        c_out_ref = args[2 + 3 * num_layers]
        seq_sc = args[3 + 3 * num_layers]
        gx_sc = args[4 + 3 * num_layers]

        ci = pl.program_id(1)        # time-chunk index ("arbitrary" axis)
        t0 = ci * tc                 # global timestep offset of this chunk

        # First chunk for this batch tile: zero-init the resident h/c carry.
        @pl.when(ci == 0)
        def _():
            h_out_ref[...] = jnp.zeros_like(h_out_ref)
            c_out_ref[...] = jnp.zeros_like(c_out_ref)

        for layer in range(num_layers):
            # ---- Hoisted input projection + bias: ONE big MXU matmul with
            # ---- M = tc*tb per chunk (instead of M = tb per timestep). -----
            if layer == 0:
                x2d = x_ref[...].reshape(tc * tb, x_ref.shape[-1])
            else:
                x2d = seq_sc[...].reshape(tc * tb, h_pad)
            gx = jnp.dot(x2d.astype(jnp.bfloat16), w_ih_refs[layer][...],
                         preferred_element_type=jnp.float32)
            gx = gx + b_refs[layer][...]          # bias folded in once/chunk
            gx_sc[...] = gx.reshape(tc, tb, 4 * h_pad)

            w_hh_ref = w_hh_refs[layer]
            write_seq = layer < num_layers - 1

            # ---- Serial recurrence over the chunk: only h @ W_hh remains on
            # ---- the critical path. ----------------------------------------
            def step(t, carry, w_hh_ref=w_hh_ref, write_seq=write_seq):
                h, c = carry
                gates = gx_sc[t] + jnp.dot(
                    h.astype(jnp.bfloat16), w_hh_ref[...],
                    preferred_element_type=jnp.float32)
                # PyTorch gate order i, f, g, o; each slice is Hp (multiple of
                # 128) lanes wide -> lane-tile aligned, no cross-lane relayout.
                i_g = jax.nn.sigmoid(gates[:, 0 * h_pad:1 * h_pad])
                f_g = jax.nn.sigmoid(gates[:, 1 * h_pad:2 * h_pad])
                g_g = jnp.tanh(gates[:, 2 * h_pad:3 * h_pad])
                o_g = jax.nn.sigmoid(gates[:, 3 * h_pad:4 * h_pad])
                c_new = f_g * c + i_g * g_g
                h_new = o_g * jnp.tanh(c_new)
                # Freeze the state on padded timesteps of the last chunk.
                valid = (t0 + t) < seq_len
                h_n = jnp.where(valid, h_new, h)
                c_n = jnp.where(valid, c_new, c)
                if write_seq:
                    seq_sc[t] = h_n          # feed next layer; stays in VMEM
                return h_n, c_n

            h_f, c_f = jax.lax.fori_loop(
                0, tc, step, (h_out_ref[layer], c_out_ref[layer]),
                unroll=unroll)
            h_out_ref[layer] = h_f
            c_out_ref[layer] = c_f

    return kernel


def _encoder_lstm_pallas(x_p, w_ih_list, w_hh_list, b_list, *,
                         seq_len, tc, tb, unroll, single_buffer):
    """x_p: (T_pad, B_pad, Ep) f32; weights bf16; biases f32."""
    t_pad, b_pad, e_pad = x_p.shape
    num_layers = len(w_ih_list)
    h_pad = w_hh_list[0].shape[0]
    n_chunks = t_pad // tc
    n_btiles = b_pad // tb

    kernel = _make_encoder_kernel(num_layers, seq_len, tc, tb, h_pad, unroll)

    def const_spec(shape):
        rank = len(shape)
        idx = lambda bt, ci: (0,) * rank
        if single_buffer:
            # Grid-invariant residents: no need for double buffering.
            return pl.BlockSpec(shape, idx, pipeline_mode=pl.Buffered(1))
        return pl.BlockSpec(shape, idx)

    in_specs = [pl.BlockSpec((tc, tb, e_pad), lambda bt, ci: (ci, bt, 0))]
    in_specs += [const_spec(w.shape) for w in w_ih_list]
    in_specs += [const_spec(w.shape) for w in w_hh_list]
    in_specs += [const_spec(b.shape) for b in b_list]

    out_specs = [
        pl.BlockSpec((num_layers, tb, h_pad), lambda bt, ci: (0, bt, 0)),
        pl.BlockSpec((num_layers, tb, h_pad), lambda bt, ci: (0, bt, 0)),
    ]
    out_shape = (
        jax.ShapeDtypeStruct((num_layers, b_pad, h_pad), jnp.float32),
        jax.ShapeDtypeStruct((num_layers, b_pad, h_pad), jnp.float32),
    )
    scratch_shapes = [
        pltpu.VMEM((tc, tb, h_pad), jnp.float32),      # inter-layer chunk
        pltpu.VMEM((tc, tb, 4 * h_pad), jnp.float32),  # hoisted input gates
    ]

    # Explicit VMEM budget: x (double-buffered), weights/biases (resident),
    # states, scratch; ~2x headroom, clamped to fit v7x (64 MiB physical).
    wbuf = 1 if single_buffer else 2
    vmem_bytes = 2 * tc * tb * e_pad * x_p.dtype.itemsize
    vmem_bytes += wbuf * sum(int(w.size) * w.dtype.itemsize
                             for w in (*w_ih_list, *w_hh_list, *b_list))
    vmem_bytes += 2 * 2 * num_layers * tb * h_pad * 4
    vmem_bytes += (tc * tb * h_pad + tc * tb * 4 * h_pad) * 4
    vmem_limit = int(min(64 * 2**20, max(2 * vmem_bytes, 16 * 2**20)))

    return pl.pallas_call(
        kernel,
        out_shape=out_shape,
        grid_spec=pltpu.PrefetchScalarGridSpec(
            num_scalar_prefetch=0,
            grid=(n_btiles, n_chunks),
            in_specs=in_specs,
            out_specs=out_specs,
            scratch_shapes=scratch_shapes,
        ),
        compiler_params=pltpu.CompilerParams(
            dimension_semantics=("parallel", "arbitrary"),
            vmem_limit_bytes=vmem_limit),
    )(x_p, *w_ih_list, *w_hh_list, *b_list)


# ---------------------------------------------------------------------------
# Parameter init (PyTorch-style layout) and kernel-layout preparation.
# ---------------------------------------------------------------------------
def init_encoder_params(key, input_size, embedding_size, hidden_size,
                        num_layers):
    """Deterministic params mimicking nn.Embedding + nn.LSTM shapes."""
    keys = jax.random.split(key, 1 + 4 * num_layers)
    emb = jax.random.normal(keys[0], (input_size, embedding_size), jnp.float32)

    bound = 1.0 / float(hidden_size) ** 0.5
    layers = []
    for l in range(num_layers):
        in_dim = embedding_size if l == 0 else hidden_size
        k_ih, k_hh, k_bih, k_bhh = keys[1 + 4 * l: 1 + 4 * (l + 1)]
        layers.append({
            "w_ih": jax.random.uniform(k_ih, (4 * hidden_size, in_dim),
                                       jnp.float32, -bound, bound),
            "w_hh": jax.random.uniform(k_hh, (4 * hidden_size, hidden_size),
                                       jnp.float32, -bound, bound),
            "b_ih": jax.random.uniform(k_bih, (4 * hidden_size,),
                                       jnp.float32, -bound, bound),
            "b_hh": jax.random.uniform(k_bhh, (4 * hidden_size,),
                                       jnp.float32, -bound, bound),
        })
    return {"embedding": emb, "layers": layers}


def prepare_kernel_params(params, weight_dtype=jnp.bfloat16):
    """Split/pad weights for the kernel layout.

    Per layer: W_ih^T -> (In_p, 4*Hp), W_hh^T -> (Hp, 4*Hp) in `weight_dtype`
    (bf16 on the MXU, half the resident VMEM), b_ih + b_hh -> (1, 4*Hp) f32.
    Padded rows/cols are zero, so padded hidden lanes stay exactly zero
    through the recurrence (with zero initial state) -> numerics match the
    unpadded model up to bf16 operand rounding.
    """
    emb = params["embedding"]
    vocab, e_dim = emb.shape
    h_dim = params["layers"][0]["w_hh"].shape[1]
    e_pad = _round_up(e_dim, _LANE)
    h_pad = _round_up(h_dim, _LANE)

    emb_p = jnp.zeros((vocab, e_pad), jnp.float32).at[:, :e_dim].set(emb)

    w_ih_list, w_hh_list, b_list = [], [], []
    for l, layer in enumerate(params["layers"]):
        in_dim = layer["w_ih"].shape[1]
        in_pad = e_pad if l == 0 else h_pad
        w_ih_t = layer["w_ih"].T                      # (in_dim, 4H)
        w_hh_t = layer["w_hh"].T                      # (H, 4H)
        b = layer["b_ih"] + layer["b_hh"]             # (4H,)

        w_ih_p = jnp.zeros((in_pad, 4 * h_pad), jnp.float32)
        w_hh_p = jnp.zeros((h_pad, 4 * h_pad), jnp.float32)
        b_p = jnp.zeros((1, 4 * h_pad), jnp.float32)
        for g in range(4):                            # PyTorch order i,f,g,o
            src_cols = slice(g * h_dim, (g + 1) * h_dim)
            dst_cols = slice(g * h_pad, g * h_pad + h_dim)
            w_ih_p = w_ih_p.at[:in_dim, dst_cols].set(w_ih_t[:, src_cols])
            w_hh_p = w_hh_p.at[:h_dim, dst_cols].set(w_hh_t[:, src_cols])
            b_p = b_p.at[0, dst_cols].set(b[src_cols])
        w_ih_list.append(w_ih_p.astype(weight_dtype))
        w_hh_list.append(w_hh_p.astype(weight_dtype))
        b_list.append(b_p)

    return {"embedding_p": emb_p, "w_ih": w_ih_list, "w_hh": w_hh_list,
            "b": b_list}


# ---------------------------------------------------------------------------
# Forward pass (matches Encoder.forward: returns (hidden, cell)).
# ---------------------------------------------------------------------------
def encoder_forward(kparams, src, *, hidden_size):
    """src: (T, B) int32 token ids. Returns (hidden, cell), each (L, B, H)."""
    return _encoder_forward_jit(kparams, src, hidden_size=hidden_size,
                                single_buffer=_single_buffer_supported())


@functools.partial(jax.jit, static_argnames=("hidden_size", "single_buffer"))
def _encoder_forward_jit(kparams, src, *, hidden_size, single_buffer):
    emb_p = kparams["embedding_p"]
    seq_len, batch = src.shape

    b_pad = _round_up(max(batch, _SUBLANE), _SUBLANE)
    # Batch tiling: >=2 sublane-aligned tiles feeds both v7x TensorCores via
    # the "parallel" grid axis; small batches keep a single tile.
    if b_pad >= 4 * _SUBLANE and (b_pad // 2) % _SUBLANE == 0:
        tb = b_pad // 2
    else:
        tb = b_pad
    tc = min(seq_len, _MAX_CHUNK)
    t_pad = _round_up(seq_len, tc)
    unroll = min(tc, 8)

    # Embedding lookup on padded token ids: a single (T_pad, B_pad, Ep)
    # materialization (padded batch rows are independent; padded timesteps are
    # masked inside the kernel). Dropout == identity (eval mode).
    src_p = jnp.zeros((t_pad, b_pad), src.dtype).at[:seq_len, :batch].set(src)
    x_p = jnp.take(emb_p, src_p, axis=0)              # (T_pad, B_pad, Ep) f32

    hidden_p, cell_p = _encoder_lstm_pallas(
        x_p, kparams["w_ih"], kparams["w_hh"], kparams["b"],
        seq_len=seq_len, tc=tc, tb=tb, unroll=unroll,
        single_buffer=single_buffer)

    return (hidden_p[:, :batch, :hidden_size],
            cell_p[:, :batch, :hidden_size])


# ---------------------------------------------------------------------------
# Pure-JAX reference (lax.scan, f32) for correctness checking.
# ---------------------------------------------------------------------------
def _lstm_ref(params, src):
    x = jnp.take(params["embedding"], src, axis=0)
    hiddens, cells = [], []
    layer_in = x
    for layer in params["layers"]:
        h_dim = layer["w_hh"].shape[1]
        batch = x.shape[1]
        w_ih_t = layer["w_ih"].T
        w_hh_t = layer["w_hh"].T
        b = layer["b_ih"] + layer["b_hh"]

        def step(carry, x_t, w_ih_t=w_ih_t, w_hh_t=w_hh_t, b=b, h_dim=h_dim):
            h, c = carry
            gates = x_t @ w_ih_t + h @ w_hh_t + b
            i = jax.nn.sigmoid(gates[:, 0 * h_dim:1 * h_dim])
            f = jax.nn.sigmoid(gates[:, 1 * h_dim:2 * h_dim])
            g = jnp.tanh(gates[:, 2 * h_dim:3 * h_dim])
            o = jax.nn.sigmoid(gates[:, 3 * h_dim:4 * h_dim])
            c = f * c + i * g
            h = o * jnp.tanh(c)
            return (h, c), h

        init = (jnp.zeros((batch, h_dim), jnp.float32),
                jnp.zeros((batch, h_dim), jnp.float32))
        (h_f, c_f), out_seq = jax.lax.scan(step, init, layer_in)
        hiddens.append(h_f)
        cells.append(c_f)
        layer_in = out_seq
    return jnp.stack(hiddens, 0), jnp.stack(cells, 0)


def _run_case(name, *, input_size, embedding_size, hidden_size, num_layers,
              src_len, batch):
    key = jax.random.PRNGKey(0)
    k_params, k_src = jax.random.split(key)
    params = init_encoder_params(k_params, input_size, embedding_size,
                                 hidden_size, num_layers)
    kparams = prepare_kernel_params(params)
    src = jax.random.randint(k_src, (src_len, batch), 0, input_size,
                             dtype=jnp.int32)

    hidden, cell = encoder_forward(kparams, src, hidden_size=hidden_size)
    hidden, cell = jax.block_until_ready((hidden, cell))

    assert hidden.shape == (num_layers, batch, hidden_size), name
    assert cell.shape == (num_layers, batch, hidden_size), name
    h_ref, c_ref = _lstm_ref(params, src)
    # bf16 matmul operands (f32 accumulation / state math) -> loose tolerance.
    assert jnp.allclose(hidden, h_ref, atol=3e-2, rtol=3e-2), name
    assert jnp.allclose(cell, c_ref, atol=3e-2, rtol=3e-2), name


if __name__ == "__main__":
    # Small, module-consistent shapes (vocab=50, E=16, H=32).
    _run_case("L2_short", input_size=50, embedding_size=16, hidden_size=32,
              num_layers=2, src_len=8, batch=4)
    # Exercises >=3 layers, multiple time-chunks and tail-timestep masking.
    _run_case("L3_chunked", input_size=50, embedding_size=16, hidden_size=32,
              num_layers=3, src_len=40, batch=4)
    print("KERNEL_OK")
</pallas_src>

<mosaic_0001>
module attributes {stable_mosaic.version = 11 : i64} {
  func.func @k(%arg0: i32, %arg1: memref<8x128xf32, #tpu.memory_space<vmem>>, %arg2: memref<8x128xf32, #tpu.memory_space<vmem>>) attributes {dimension_semantics = [#tpu.dimension_semantics<arbitrary>], iteration_bounds = array<i64: 1>, scalar_prefetch = 0 : i64, scratch_operands = 0 : i64, tpu.core_type = #tpu.core_type<tc>, window_params = [{pipeline_mode = #tpu.pipeline_mode<synchronous>, transform_indices = @transform_0, window_bounds = array<i64: 8, 128>}, {pipeline_mode = #tpu.pipeline_mode<synchronous>, transform_indices = @transform_1, window_bounds = array<i64: 8, 128>}]} {
    %c0 = arith.constant 0 : index
    %c0_0 = arith.constant 0 : index
    %0 = vector.load %arg1[%c0, %c0_0] : memref<8x128xf32, #tpu.memory_space<vmem>>, vector<8x128xf32>
    %cst = arith.constant 1.000000e+00 : f32
    %1 = vector.broadcast %cst : f32 to vector<8x128xf32>
    %2 = arith.addf %0, %1 : vector<8x128xf32>
    %c0_1 = arith.constant 0 : index
    %c0_2 = arith.constant 0 : index
    %3 = vector.load %arg2[%c0_1, %c0_2] : memref<8x128xf32, #tpu.memory_space<vmem>>, vector<8x128xf32>
    tpu.vector_store %arg2[%c0_1, %c0_2], %2 {strides = array<i32>} : memref<8x128xf32, #tpu.memory_space<vmem>>, vector<8x128xf32>,
    return
  }
  func.func @transform_0(%arg0: i32) -> (i32, i32) {
    %c0_i32 = arith.constant 0 : i32
    %c0_i32_0 = arith.constant 0 : i32
    %c0_i32_1 = arith.constant 0 : i32
    return %c0_i32, %c0_i32_0 : i32, i32
  }
  func.func @transform_1(%arg0: i32) -> (i32, i32) {
    %c0_i32 = arith.constant 0 : i32
    %c0_i32_0 = arith.constant 0 : i32
    %c0_i32_1 = arith.constant 0 : i32
    return %c0_i32, %c0_i32_0 : i32, i32
  }
}

module attributes {stable_mosaic.version = 11 : i64} {
  func.func @kernel(%arg0: i32, %arg1: i32, %arg2: memref<8x8x128xf32, #tpu.memory_space<vmem>>, %arg3: memref<128x512xbf16, #tpu.memory_space<vmem>>, %arg4: memref<128x512xbf16, #tpu.memory_space<vmem>>, %arg5: memref<128x512xbf16, #tpu.memory_space<vmem>>, %arg6: memref<128x512xbf16, #tpu.memory_space<vmem>>, %arg7: memref<1x512xf32, #tpu.memory_space<vmem>>, %arg8: memref<1x512xf32, #tpu.memory_space<vmem>>, %arg9: memref<2x8x128xf32, #tpu.memory_space<vmem>>, %arg10: memref<2x8x128xf32, #tpu.memory_space<vmem>>, %arg11: memref<8x8x128xf32, #tpu.memory_space<vmem>>, %arg12: memref<8x8x512xf32, #tpu.memory_space<vmem>>) attributes {dimension_semantics = [#tpu.dimension_semantics<parallel>, #tpu.dimension_semantics<arbitrary>], iteration_bounds = array<i64: 1, 1>, scalar_prefetch = 0 : i64, scratch_operands = 2 : i64, tpu.core_type = #tpu.core_type<tc>, window_params = [{transform_indices = @transform_0, window_bounds = array<i64: 8, 8, 128>}, {pipeline_mode = #tpu.pipeline_mode<synchronous>, transform_indices = @transform_1, window_bounds = array<i64: 128, 512>}, {pipeline_mode = #tpu.pipeline_mode<synchronous>, transform_indices = @transform_2, window_bounds = array<i64: 128, 512>}, {pipeline_mode = #tpu.pipeline_mode<synchronous>, transform_indices = @transform_3, window_bounds = array<i64: 128, 512>}, {pipeline_mode = #tpu.pipeline_mode<synchronous>, transform_indices = @transform_4, window_bounds = array<i64: 128, 512>}, {pipeline_mode = #tpu.pipeline_mode<synchronous>, transform_indices = @transform_5, window_bounds = array<i64: 1, 512>}, {pipeline_mode = #tpu.pipeline_mode<synchronous>, transform_indices = @transform_6, window_bounds = array<i64: 1, 512>}, {transform_indices = @transform_7, window_bounds = array<i64: 2, 8, 128>}, {transform_indices = @transform_8, window_bounds = array<i64: 2, 8, 128>}]} {
    %c8_i32 = arith.constant 8 : i32
    %0 = arith.muli %arg1, %c8_i32 : i32
    %c0_i32 = arith.constant 0 : i32
    %1 = arith.cmpi eq, %arg1, %c0_i32 : i32
    %2 = arith.extui %1 : i1 to i32
    %c0_i32_0 = arith.constant 0 : i32
    %3 = arith.cmpi ne, %2, %c0_i32_0 : i32
    scf.if %3 {
      %cst_215 = arith.constant 0.000000e+00 : f32
      %652 = vector.broadcast %cst_215 : f32 to vector<2x8x128xf32>
      %c0_216 = arith.constant 0 : index
      %c0_217 = arith.constant 0 : index
      %c0_218 = arith.constant 0 : index
      %653 = vector.load %arg9[%c0_216, %c0_217, %c0_218] : memref<2x8x128xf32, #tpu.memory_space<vmem>>, vector<2x8x128xf32>
      tpu.vector_store %arg9[%c0_216, %c0_217, %c0_218], %652 {strides = array<i32>} : memref<2x8x128xf32, #tpu.memory_space<vmem>>, vector<2x8x128xf32>,
      %cst_219 = arith.constant 0.000000e+00 : f32
      %654 = vector.broadcast %cst_219 : f32 to vector<2x8x128xf32>
      %c0_220 = arith.constant 0 : index
      %c0_221 = arith.constant 0 : index
      %c0_222 = arith.constant 0 : index
      %655 = vector.load %arg10[%c0_220, %c0_221, %c0_222] : memref<2x8x128xf32, #tpu.memory_space<vmem>>, vector<2x8x128xf32>
      tpu.vector_store %arg10[%c0_220, %c0_221, %c0_222], %654 {strides = array<i32>} : memref<2x8x128xf32, #tpu.memory_space<vmem>>, vector<2x8x128xf32>,
    } else {
    }
    %c0 = arith.constant 0 : index
    %c0_1 = arith.constant 0 : index
    %c0_2 = arith.constant 0 : index
    %4 = vector.load %arg2[%c0, %c0_1, %c0_2] : memref<8x8x128xf32, #tpu.memory_space<vmem>>, vector<8x8x128xf32>
    %5 = vector.shape_cast %4 : vector<8x8x128xf32> to vector<64x128xf32>
    %6 = arith.truncf %5 : vector<64x128xf32> to vector<64x128xbf16>
    %c0_3 = arith.constant 0 : index
    %c0_4 = arith.constant 0 : index
    %7 = vector.load %arg3[%c0_3, %c0_4] : memref<128x512xbf16, #tpu.memory_space<vmem>>, vector<128x512xbf16>
    %cst = arith.constant dense<0.000000e+00> : vector<64x512xf32>
    %8 = tpu.matmul %6, %7, %cst {dimension_numbers = #tpu.dot_dimension_numbers<[1], [0], [0], [1], [0, 0, 1, 1], [], []>} : vector<64x128xbf16>, vector<128x512xbf16>, vector<64x512xf32> -> vector<64x512xf32>
    %c0_5 = arith.constant 0 : index
    %c0_6 = arith.constant 0 : index
    %9 = vector.load %arg7[%c0_5, %c0_6] : memref<1x512xf32, #tpu.memory_space<vmem>>, vector<1x512xf32>
    %10 = vector.broadcast %9 : vector<1x512xf32> to vector<64x512xf32>
    %11 = arith.addf %8, %10 : vector<64x512xf32>
    %12 = vector.shape_cast %11 : vector<64x512xf32> to vector<8x8x512xf32>
    %c0_7 = arith.constant 0 : index
    %c0_8 = arith.constant 0 : index
    %c0_9 = arith.constant 0 : index
    %13 = vector.load %arg12[%c0_7, %c0_8, %c0_9] : memref<8x8x512xf32, #tpu.memory_space<vmem>>, vector<8x8x512xf32>
    tpu.vector_store %arg12[%c0_7, %c0_8, %c0_9], %12 {strides = array<i32>} : memref<8x8x512xf32, #tpu.memory_space<vmem>>, vector<8x8x512xf32>,
    %c0_10 = arith.constant 0 : index
    %c0_11 = arith.constant 0 : index
    %c0_12 = arith.constant 0 : index
    %14 = vector.load %arg9[%c0_10, %c0_11, %c0_12] : memref<2x8x128xf32, #tpu.memory_space<vmem>>, vector<1x8x128xf32>
    %15 = vector.shape_cast %14 : vector<1x8x128xf32> to vector<8x128xf32>
    %c0_13 = arith.constant 0 : index
    %c0_14 = arith.constant 0 : index
    %c0_15 = arith.constant 0 : index
    %16 = vector.load %arg10[%c0_13, %c0_14, %c0_15] : memref<2x8x128xf32, #tpu.memory_space<vmem>>, vector<1x8x128xf32>
    %17 = vector.shape_cast %16 : vector<1x8x128xf32> to vector<8x128xf32>
    %c0_i32_16 = arith.constant 0 : i32
    %18 = arith.index_cast %c0_i32_16 : i32 to index
    %c0_17 = arith.constant 0 : index
    %c0_18 = arith.constant 0 : index
    %19 = vector.load %arg12[%18, %c0_17, %c0_18] : memref<8x8x512xf32, #tpu.memory_space<vmem>>, vector<1x8x512xf32>
    %20 = vector.shape_cast %19 : vector<1x8x512xf32> to vector<8x512xf32>
    %21 = arith.truncf %15 : vector<8x128xf32> to vector<8x128xbf16>
    %c0_19 = arith.constant 0 : index
    %c0_20 = arith.constant 0 : index
    %22 = vector.load %arg5[%c0_19, %c0_20] : memref<128x512xbf16, #tpu.memory_space<vmem>>, vector<128x512xbf16>
    %cst_21 = arith.constant dense<0.000000e+00> : vector<8x512xf32>
    %23 = tpu.matmul %21, %22, %cst_21 {dimension_numbers = #tpu.dot_dimension_numbers<[1], [0], [0], [1], [0, 0, 1, 1], [], []>} : vector<8x128xbf16>, vector<128x512xbf16>, vector<8x512xf32> -> vector<8x512xf32>
    %24 = arith.addf %20, %23 : vector<8x512xf32>
    %25 = vector.extract_strided_slice %24 {offsets = [0, 0], sizes = [8, 128], strides = [1, 1]} : vector<8x512xf32> to vector<8x128xf32>
    %26 = arith.negf %25 : vector<8x128xf32>
    %27 = math.exp %26 : vector<8x128xf32>
    %cst_22 = arith.constant 1.000000e+00 : f32
    %28 = vector.broadcast %cst_22 : f32 to vector<8x128xf32>
    %29 = arith.addf %28, %27 : vector<8x128xf32>
    %30 = arith.divf %28, %29 : vector<8x128xf32>
    %31 = vector.extract_strided_slice %24 {offsets = [0, 128], sizes = [8, 128], strides = [1, 1]} : vector<8x512xf32> to vector<8x128xf32>
    %32 = arith.negf %31 : vector<8x128xf32>
    %33 = math.exp %32 : vector<8x128xf32>
    %cst_23 = arith.constant 1.000000e+00 : f32
    %34 = vector.broadcast %cst_23 : f32 to vector<8x128xf32>
    %35 = arith.addf %34, %33 : vector<8x128xf32>
    %36 = arith.divf %34, %35 : vector<8x128xf32>
    %37 = vector.extract_strided_slice %24 {offsets = [0, 256], sizes = [8, 128], strides = [1, 1]} : vector<8x512xf32> to vector<8x128xf32>
    %38 = math.tanh %37 : vector<8x128xf32>
    %39 = vector.extract_strided_slice %24 {offsets = [0, 384], sizes = [8, 128], strides = [1, 1]} : vector<8x512xf32> to vector<8x128xf32>
    %40 = arith.negf %39 : vector<8x128xf32>
    %41 = math.exp %40 : vector<8x128xf32>
    %cst_24 = arith.constant 1.000000e+00 : f32
    %42 = vector.broadcast %cst_24 : f32 to vector<8x128xf32>
    %43 = arith.addf %42, %41 : vector<8x128xf32>
    %44 = arith.divf %42, %43 : vector<8x128xf32>
    %45 = arith.mulf %36, %17 : vector<8x128xf32>
    %46 = arith.mulf %30, %38 : vector<8x128xf32>
    %47 = arith.addf %45, %46 : vector<8x128xf32>
    %48 = math.tanh %47 : vector<8x128xf32>
    %49 = arith.mulf %44, %48 : vector<8x128xf32>
    %50 = arith.addi %0, %c0_i32_16 : i32
    %c8_i32_25 = arith.constant 8 : i32
    %51 = arith.cmpi slt, %50, %c8_i32_25 : i32
    %52 = arith.select %51, %49, %15 : vector<8x128xf32>
    %53 = arith.select %51, %47, %17 : vector<8x128xf32>
    %54 = arith.index_cast %c0_i32_16 : i32 to index
    %c0_26 = arith.constant 0 : index
    %c0_27 = arith.constant 0 : index
    %55 = vector.load %arg11[%54, %c0_26, %c0_27] : memref<8x8x128xf32, #tpu.memory_space<vmem>>, vector<1x8x128xf32>
    %56 = vector.shape_cast %55 : vector<1x8x128xf32> to vector<8x128xf32>
    %57 = vector.shape_cast %52 : vector<8x128xf32> to vector<1x8x128xf32>
    tpu.vector_store %arg11[%54, %c0_26, %c0_27], %57 {strides = array<i32>} : memref<8x8x128xf32, #tpu.memory_space<vmem>>, vector<1x8x128xf32>,
    %c1_i32 = arith.constant 1 : i32
    %58 = arith.index_cast %c1_i32 : i32 to index
    %c0_28 = arith.constant 0 : index
    %c0_29 = arith.constant 0 : index
    %59 = vector.load %arg12[%58, %c0_28, %c0_29] : memref<8x8x512xf32, #tpu.memory_space<vmem>>, vector<1x8x512xf32>
    %60 = vector.shape_cast %59 : vector<1x8x512xf32> to vector<8x512xf32>
    %61 = arith.truncf %52 : vector<8x128xf32> to vector<8x128xbf16>
    %c0_30 = arith.constant 0 : index
    %c0_31 = arith.constant 0 : index
    %62 = vector.load %arg5[%c0_30, %c0_31] : memref<128x512xbf16, #tpu.memory_space<vmem>>, vector<128x512xbf16>
    %cst_32 = arith.constant dense<0.000000e+00> : vector<8x512xf32>
    %63 = tpu.matmul %61, %62, %cst_32 {dimension_numbers = #tpu.dot_dimension_numbers<[1], [0], [0], [1], [0, 0, 1, 1], [], []>} : vector<8x128xbf16>, vector<128x512xbf16>, vector<8x512xf32> -> vector<8x512xf32>
    %64 = arith.addf %60, %63 : vector<8x512xf32>
    %65 = vector.extract_strided_slice %64 {offsets = [0, 0], sizes = [8, 128], strides = [1, 1]} : vector<8x512xf32> to vector<8x128xf32>
    %66 = arith.negf %65 : vector<8x128xf32>
    %67 = math.exp %66 : vector<8x128xf32>
    %cst_33 = arith.constant 1.000000e+00 : f32
    %68 = vector.broadcast %cst_33 : f32 to vector<8x128xf32>
    %69 = arith.addf %68, %67 : vector<8x128xf32>
    %70 = arith.divf %68, %69 : vector<8x128xf32>
    %71 = vector.extract_strided_slice %64 {offsets = [0, 128], sizes = [8, 128], strides = [1, 1]} : vector<8x512xf32> to vector<8x128xf32>
    %72 = arith.negf %71 : vector<8x128xf32>
    %73 = math.exp %72 : vector<8x128xf32>
    %cst_34 = arith.constant 1.000000e+00 : f32
    %74 = vector.broadcast %cst_34 : f32 to vector<8x128xf32>
    %75 = arith.addf %74, %73 : vector<8x128xf32>
    %76 = arith.divf %74, %75 : vector<8x128xf32>
    %77 = vector.extract_strided_slice %64 {offsets = [0, 256], sizes = [8, 128], strides = [1, 1]} : vector<8x512xf32> to vector<8x128xf32>
    %78 = math.tanh %77 : vector<8x128xf32>
    %79 = vector.extract_strided_slice %64 {offsets = [0, 384], sizes = [8, 128], strides = [1, 1]} : vector<8x512xf32> to vector<8x128xf32>
    %80 = arith.negf %79 : vector<8x128xf32>
    %81 = math.exp %80 : vector<8x128xf32>
    %cst_35 = arith.constant 1.000000e+00 : f32
    %82 = vector.broadcast %cst_35 : f32 to vector<8x128xf32>
    %83 = arith.addf %82, %81 : vector<8x128xf32>
    %84 = arith.divf %82, %83 : vector<8x128xf32>
    %85 = arith.mulf %76, %53 : vector<8x128xf32>
    %86 = arith.mulf %70, %78 : vector<8x128xf32>
    %87 = arith.addf %85, %86 : vector<8x128xf32>
    %88 = math.tanh %87 : vector<8x128xf32>
    %89 = arith.mulf %84, %88 : vector<8x128xf32>
    %90 = arith.addi %0, %c1_i32 : i32
    %c8_i32_36 = arith.constant 8 : i32
    %91 = arith.cmpi slt, %90, %c8_i32_36 : i32
    %92 = arith.select %91, %89, %52 : vector<8x128xf32>
    %93 = arith.select %91, %87, %53 : vector<8x128xf32>
    %94 = arith.index_cast %c1_i32 : i32 to index
    %c0_37 = arith.constant 0 : index
    %c0_38 = arith.constant 0 : index
    %95 = vector.load %arg11[%94, %c0_37, %c0_38] : memref<8x8x128xf32, #tpu.memory_space<vmem>>, vector<1x8x128xf32>
    %96 = vector.shape_cast %95 : vector<1x8x128xf32> to vector<8x128xf32>
    %97 = vector.shape_cast %92 : vector<8x128xf32> to vector<1x8x128xf32>
    tpu.vector_store %arg11[%94, %c0_37, %c0_38], %97 {strides = array<i32>} : memref<8x8x128xf32, #tpu.memory_space<vmem>>, vector<1x8x128xf32>,
    %c2_i32 = arith.constant 2 : i32
    %98 = arith.index_cast %c2_i32 : i32 to index
    %c0_39 = arith.constant 0 : index
    %c0_40 = arith.constant 0 : index
    %99 = vector.load %arg12[%98, %c0_39, %c0_40] : memref<8x8x512xf32, #tpu.memory_space<vmem>>, vector<1x8x512xf32>
    %100 = vector.shape_cast %99 : vector<1x8x512xf32> to vector<8x512xf32>
    %101 = arith.truncf %92 : vector<8x128xf32> to vector<8x128xbf16>
    %c0_41 = arith.constant 0 : index
    %c0_42 = arith.constant 0 : index
    %102 = vector.load %arg5[%c0_41, %c0_42] : memref<128x512xbf16, #tpu.memory_space<vmem>>, vector<128x512xbf16>
    %cst_43 = arith.constant dense<0.000000e+00> : vector<8x512xf32>
    %103 = tpu.matmul %101, %102, %cst_43 {dimension_numbers = #tpu.dot_dimension_numbers<[1], [0], [0], [1], [0, 0, 1, 1], [], []>} : vector<8x128xbf16>, vector<128x512xbf16>, vector<8x512xf32> -> vector<8x512xf32>
    %104 = arith.addf %100, %103 : vector<8x512xf32>
    %105 = vector.extract_strided_slice %104 {offsets = [0, 0], sizes = [8, 128], strides = [1, 1]} : vector<8x512xf32> to vector<8x128xf32>
    %106 = arith.negf %105 : vector<8x128xf32>
    %107 = math.exp %106 : vector<8x128xf32>
    %cst_44 = arith.constant 1.000000e+00 : f32
    %108 = vector.broadcast %cst_44 : f32 to vector<8x128xf32>
    %109 = arith.addf %108, %107 : vector<8x128xf32>
    %110 = arith.divf %108, %109 : vector<8x128xf32>
    %111 = vector.extract_strided_slice %104 {offsets = [0, 128], sizes = [8, 128], strides = [1, 1]} : vector<8x512xf32> to vector<8x128xf32>
    %112 = arith.negf %111 : vector<8x128xf32>
    %113 = math.exp %112 : vector<8x128xf32>
    %cst_45 = arith.constant 1.000000e+00 : f32
    %114 = vector.broadcast %cst_45 : f32 to vector<8x128xf32>
    %115 = arith.addf %114, %113 : vector<8x128xf32>
    %116 = arith.divf %114, %115 : vector<8x128xf32>
    %117 = vector.extract_strided_slice %104 {offsets = [0, 256], sizes = [8, 128], strides = [1, 1]} : vector<8x512xf32> to vector<8x128xf32>
    %118 = math.tanh %117 : vector<8x128xf32>
    %119 = vector.extract_strided_slice %104 {offsets = [0, 384], sizes = [8, 128], strides = [1, 1]} : vector<8x512xf32> to vector<8x128xf32>
    %120 = arith.negf %119 : vector<8x128xf32>
    %121 = math.exp %120 : vector<8x128xf32>
    %cst_46 = arith.constant 1.000000e+00 : f32
    %122 = vector.broadcast %cst_46 : f32 to vector<8x128xf32>
    %123 = arith.addf %122, %121 : vector<8x128xf32>
    %124 = arith.divf %122, %123 : vector<8x128xf32>
    %125 = arith.mulf %116, %93 : vector<8x128xf32>
    %126 = arith.mulf %110, %118 : vector<8x128xf32>
    %127 = arith.addf %125, %126 : vector<8x128xf32>
    %128 = math.tanh %127 : vector<8x128xf32>
    %129 = arith.mulf %124, %128 : vector<8x128xf32>
    %130 = arith.addi %0, %c2_i32 : i32
    %c8_i32_47 = arith.constant 8 : i32
    %131 = arith.cmpi slt, %130, %c8_i32_47 : i32
    %132 = arith.select %131, %129, %92 : vector<8x128xf32>
    %133 = arith.select %131, %127, %93 : vector<8x128xf32>
    %134 = arith.index_cast %c2_i32 : i32 to index
    %c0_48 = arith.constant 0 : index
    %c0_49 = arith.constant 0 : index
    %135 = vector.load %arg11[%134, %c0_48, %c0_49] : memref<8x8x128xf32, #tpu.memory_space<vmem>>, vector<1x8x128xf32>
    %136 = vector.shape_cast %135 : vector<1x8x128xf32> to vector<8x128xf32>
    %137 = vector.shape_cast %132 : vector<8x128xf32> to vector<1x8x128xf32>
    tpu.vector_store %arg11[%134, %c0_48, %c0_49], %137 {strides = array<i32>} : memref<8x8x128xf32, #tpu.memory_space<vmem>>, vector<1x8x128xf32>,
    %c3_i32 = arith.constant 3 : i32
    %138 = arith.index_cast %c3_i32 : i32 to index
    %c0_50 = arith.constant 0 : index
    %c0_51 = arith.constant 0 : index
    %139 = vector.load %arg12[%138, %c0_50, %c0_51] : memref<8x8x512xf32, #tpu.memory_space<vmem>>, vector<1x8x512xf32>
    %140 = vector.shape_cast %139 : vector<1x8x512xf32> to vector<8x512xf32>
    %141 = arith.truncf %132 : vector<8x128xf32> to vector<8x128xbf16>
    %c0_52 = arith.constant 0 : index
    %c0_53 = arith.constant 0 : index
    %142 = vector.load %arg5[%c0_52, %c0_53] : memref<128x512xbf16, #tpu.memory_space<vmem>>, vector<128x512xbf16>
    %cst_54 = arith.constant dense<0.000000e+00> : vector<8x512xf32>
    %143 = tpu.matmul %141, %142, %cst_54 {dimension_numbers = #tpu.dot_dimension_numbers<[1], [0], [0], [1], [0, 0, 1, 1], [], []>} : vector<8x128xbf16>, vector<128x512xbf16>, vector<8x512xf32> -> vector<8x512xf32>
    %144 = arith.addf %140, %143 : vector<8x512xf32>
    %145 = vector.extract_strided_slice %144 {offsets = [0, 0], sizes = [8, 128], strides = [1, 1]} : vector<8x512xf32> to vector<8x128xf32>
    %146 = arith.negf %145 : vector<8x128xf32>
    %147 = math.exp %146 : vector<8x128xf32>
    %cst_55 = arith.constant 1.000000e+00 : f32
    %148 = vector.broadcast %cst_55 : f32 to vector<8x128xf32>
    %149 = arith.addf %148, %147 : vector<8x128xf32>
    %150 = arith.divf %148, %149 : vector<8x128xf32>
    %151 = vector.extract_strided_slice %144 {offsets = [0, 128], sizes = [8, 128], strides = [1, 1]} : vector<8x512xf32> to vector<8x128xf32>
    %152 = arith.negf %151 : vector<8x128xf32>
    %153 = math.exp %152 : vector<8x128xf32>
    %cst_56 = arith.constant 1.000000e+00 : f32
    %154 = vector.broadcast %cst_56 : f32 to vector<8x128xf32>
    %155 = arith.addf %154, %153 : vector<8x128xf32>
    %156 = arith.divf %154, %155 : vector<8x128xf32>
    %157 = vector.extract_strided_slice %144 {offsets = [0, 256], sizes = [8, 128], strides = [1, 1]} : vector<8x512xf32> to vector<8x128xf32>
    %158 = math.tanh %157 : vector<8x128xf32>
    %159 = vector.extract_strided_slice %144 {offsets = [0, 384], sizes = [8, 128], strides = [1, 1]} : vector<8x512xf32> to vector<8x128xf32>
    %160 = arith.negf %159 : vector<8x128xf32>
    %161 = math.exp %160 : vector<8x128xf32>
    %cst_57 = arith.constant 1.000000e+00 : f32
    %162 = vector.broadcast %cst_57 : f32 to vector<8x128xf32>
    %163 = arith.addf %162, %161 : vector<8x128xf32>
    %164 = arith.divf %162, %163 : vector<8x128xf32>
    %165 = arith.mulf %156, %133 : vector<8x128xf32>
    %166 = arith.mulf %150, %158 : vector<8x128xf32>
    %167 = arith.addf %165, %166 : vector<8x128xf32>
    %168 = math.tanh %167 : vector<8x128xf32>
    %169 = arith.mulf %164, %168 : vector<8x128xf32>
    %170 = arith.addi %0, %c3_i32 : i32
    %c8_i32_58 = arith.constant 8 : i32
    %171 = arith.cmpi slt, %170, %c8_i32_58 : i32
    %172 = arith.select %171, %169, %132 : vector<8x128xf32>
    %173 = arith.select %171, %167, %133 : vector<8x128xf32>
    %174 = arith.index_cast %c3_i32 : i32 to index
    %c0_59 = arith.constant 0 : index
    %c0_60 = arith.constant 0 : index
    %175 = vector.load %arg11[%174, %c0_59, %c0_60] : memref<8x8x128xf32, #tpu.memory_space<vmem>>, vector<1x8x128xf32>
    %176 = vector.shape_cast %175 : vector<1x8x128xf32> to vector<8x128xf32>
    %177 = vector.shape_cast %172 : vector<8x128xf32> to vector<1x8x128xf32>
    tpu.vector_store %arg11[%174, %c0_59, %c0_60], %177 {strides = array<i32>} : memref<8x8x128xf32, #tpu.memory_space<vmem>>, vector<1x8x128xf32>,
    %c4_i32 = arith.constant 4 : i32
    %178 = arith.index_cast %c4_i32 : i32 to index
    %c0_61 = arith.constant 0 : index
    %c0_62 = arith.constant 0 : index
    %179 = vector.load %arg12[%178, %c0_61, %c0_62] : memref<8x8x512xf32, #tpu.memory_space<vmem>>, vector<1x8x512xf32>
    %180 = vector.shape_cast %179 : vector<1x8x512xf32> to vector<8x512xf32>
    %181 = arith.truncf %172 : vector<8x128xf32> to vector<8x128xbf16>
    %c0_63 = arith.constant 0 : index
    %c0_64 = arith.constant 0 : index
    %182 = vector.load %arg5[%c0_63, %c0_64] : memref<128x512xbf16, #tpu.memory_space<vmem>>, vector<128x512xbf16>
    %cst_65 = arith.constant dense<0.000000e+00> : vector<8x512xf32>
    %183 = tpu.matmul %181, %182, %cst_65 {dimension_numbers = #tpu.dot_dimension_numbers<[1], [0], [0], [1], [0, 0, 1, 1], [], []>} : vector<8x128xbf16>, vector<128x512xbf16>, vector<8x512xf32> -> vector<8x512xf32>
    %184 = arith.addf %180, %183 : vector<8x512xf32>
    %185 = vector.extract_strided_slice %184 {offsets = [0, 0], sizes = [8, 128], strides = [1, 1]} : vector<8x512xf32> to vector<8x128xf32>
    %186 = arith.negf %185 : vector<8x128xf32>
    %187 = math.exp %186 : vector<8x128xf32>
    %cst_66 = arith.constant 1.000000e+00 : f32
    %188 = vector.broadcast %cst_66 : f32 to vector<8x128xf32>
    %189 = arith.addf %188, %187 : vector<8x128xf32>
    %190 = arith.divf %188, %189 : vector<8x128xf32>
    %191 = vector.extract_strided_slice %184 {offsets = [0, 128], sizes = [8, 128], strides = [1, 1]} : vector<8x512xf32> to vector<8x128xf32>
    %192 = arith.negf %191 : vector<8x128xf32>
    %193 = math.exp %192 : vector<8x128xf32>
    %cst_67 = arith.constant 1.000000e+00 : f32
    %194 = vector.broadcast %cst_67 : f32 to vector<8x128xf32>
    %195 = arith.addf %194, %193 : vector<8x128xf32>
    %196 = arith.divf %194, %195 : vector<8x128xf32>
    %197 = vector.extract_strided_slice %184 {offsets = [0, 256], sizes = [8, 128], strides = [1, 1]} : vector<8x512xf32> to vector<8x128xf32>
    %198 = math.tanh %197 : vector<8x128xf32>
    %199 = vector.extract_strided_slice %184 {offsets = [0, 384], sizes = [8, 128], strides = [1, 1]} : vector<8x512xf32> to vector<8x128xf32>
    %200 = arith.negf %199 : vector<8x128xf32>
    %201 = math.exp %200 : vector<8x128xf32>
    %cst_68 = arith.constant 1.000000e+00 : f32
    %202 = vector.broadcast %cst_68 : f32 to vector<8x128xf32>
    %203 = arith.addf %202, %201 : vector<8x128xf32>
    %204 = arith.divf %202, %203 : vector<8x128xf32>
    %205 = arith.mulf %196, %173 : vector<8x128xf32>
    %206 = arith.mulf %190, %198 : vector<8x128xf32>
    %207 = arith.addf %205, %206 : vector<8x128xf32>
    %208 = math.tanh %207 : vector<8x128xf32>
    %209 = arith.mulf %204, %208 : vector<8x128xf32>
    %210 = arith.addi %0, %c4_i32 : i32
    %c8_i32_69 = arith.constant 8 : i32
    %211 = arith.cmpi slt, %210, %c8_i32_69 : i32
    %212 = arith.select %211, %209, %172 : vector<8x128xf32>
    %213 = arith.select %211, %207, %173 : vector<8x128xf32>
    %214 = arith.index_cast %c4_i32 : i32 to index
    %c0_70 = arith.constant 0 : index
    %c0_71 = arith.constant 0 : index
    %215 = vector.load %arg11[%214, %c0_70, %c0_71] : memref<8x8x128xf32, #tpu.memory_space<vmem>>, vector<1x8x128xf32>
    %216 = vector.shape_cast %215 : vector<1x8x128xf32> to vector<8x128xf32>
    %217 = vector.shape_cast %212 : vector<8x128xf32> to vector<1x8x128xf32>
    tpu.vector_store %arg11[%214, %c0_70, %c0_71], %217 {strides = array<i32>} : memref<8x8x128xf32, #tpu.memory_space<vmem>>, vector<1x8x128xf32>,
    %c5_i32 = arith.constant 5 : i32
    %218 = arith.index_cast %c5_i32 : i32 to index
    %c0_72 = arith.constant 0 : index
    %c0_73 = arith.constant 0 : index
    %219 = vector.load %arg12[%218, %c0_72, %c0_73] : memref<8x8x512xf32, #tpu.memory_space<vmem>>, vector<1x8x512xf32>
    %220 = vector.shape_cast %219 : vector<1x8x512xf32> to vector<8x512xf32>
    %221 = arith.truncf %212 : vector<8x128xf32> to vector<8x128xbf16>
    %c0_74 = arith.constant 0 : index
    %c0_75 = arith.constant 0 : index
    %222 = vector.load %arg5[%c0_74, %c0_75] : memref<128x512xbf16, #tpu.memory_space<vmem>>, vector<128x512xbf16>
    %cst_76 = arith.constant dense<0.000000e+00> : vector<8x512xf32>
    %223 = tpu.matmul %221, %222, %cst_76 {dimension_numbers = #tpu.dot_dimension_numbers<[1], [0], [0], [1], [0, 0, 1, 1], [], []>} : vector<8x128xbf16>, vector<128x512xbf16>, vector<8x512xf32> -> vector<8x512xf32>
    %224 = arith.addf %220, %223 : vector<8x512xf32>
    %225 = vector.extract_strided_slice %224 {offsets = [0, 0], sizes = [8, 128], strides = [1, 1]} : vector<8x512xf32> to vector<8x128xf32>
    %226 = arith.negf %225 : vector<8x128xf32>
    %227 = math.exp %226 : vector<8x128xf32>
    %cst_77 = arith.constant 1.000000e+00 : f32
    %228 = vector.broadcast %cst_77 : f32 to vector<8x128xf32>
    %229 = arith.addf %228, %227 : vector<8x128xf32>
    %230 = arith.divf %228, %229 : vector<8x128xf32>
    %231 = vector.extract_strided_slice %224 {offsets = [0, 128], sizes = [8, 128], strides = [1, 1]} : vector<8x512xf32> to vector<8x128xf32>
    %232 = arith.negf %231 : vector<8x128xf32>
    %233 = math.exp %232 : vector<8x128xf32>
    %cst_78 = arith.constant 1.000000e+00 : f32
    %234 = vector.broadcast %cst_78 : f32 to vector<8x128xf32>
    %235 = arith.addf %234, %233 : vector<8x128xf32>
    %236 = arith.divf %234, %235 : vector<8x128xf32>
    %237 = vector.extract_strided_slice %224 {offsets = [0, 256], sizes = [8, 128], strides = [1, 1]} : vector<8x512xf32> to vector<8x128xf32>
    %238 = math.tanh %237 : vector<8x128xf32>
    %239 = vector.extract_strided_slice %224 {offsets = [0, 384], sizes = [8, 128], strides = [1, 1]} : vector<8x512xf32> to vector<8x128xf32>
    %240 = arith.negf %239 : vector<8x128xf32>
    %241 = math.exp %240 : vector<8x128xf32>
    %cst_79 = arith.constant 1.000000e+00 : f32
    %242 = vector.broadcast %cst_79 : f32 to vector<8x128xf32>
    %243 = arith.addf %242, %241 : vector<8x128xf32>
    %244 = arith.divf %242, %243 : vector<8x128xf32>
    %245 = arith.mulf %236, %213 : vector<8x128xf32>
    %246 = arith.mulf %230, %238 : vector<8x128xf32>
    %247 = arith.addf %245, %246 : vector<8x128xf32>
    %248 = math.tanh %247 : vector<8x128xf32>
    %249 = arith.mulf %244, %248 : vector<8x128xf32>
    %250 = arith.addi %0, %c5_i32 : i32
    %c8_i32_80 = arith.constant 8 : i32
    %251 = arith.cmpi slt, %250, %c8_i32_80 : i32
    %252 = arith.select %251, %249, %212 : vector<8x128xf32>
    %253 = arith.select %251, %247, %213 : vector<8x128xf32>
    %254 = arith.index_cast %c5_i32 : i32 to index
    %c0_81 = arith.constant 0 : index
    %c0_82 = arith.constant 0 : index
    %255 = vector.load %arg11[%254, %c0_81, %c0_82] : memref<8x8x128xf32, #tpu.memory_space<vmem>>, vector<1x8x128xf32>
    %256 = vector.shape_cast %255 : vector<1x8x128xf32> to vector<8x128xf32>
    %257 = vector.shape_cast %252 : vector<8x128xf32> to vector<1x8x128xf32>
    tpu.vector_store %arg11[%254, %c0_81, %c0_82], %257 {strides = array<i32>} : memref<8x8x128xf32, #tpu.memory_space<vmem>>, vector<1x8x128xf32>,
    %c6_i32 = arith.constant 6 : i32
    %258 = arith.index_cast %c6_i32 : i32 to index
    %c0_83 = arith.constant 0 : index
    %c0_84 = arith.constant 0 : index
    %259 = vector.load %arg12[%258, %c0_83, %c0_84] : memref<8x8x512xf32, #tpu.memory_space<vmem>>, vector<1x8x512xf32>
    %260 = vector.shape_cast %259 : vector<1x8x512xf32> to vector<8x512xf32>
    %261 = arith.truncf %252 : vector<8x128xf32> to vector<8x128xbf16>
    %c0_85 = arith.constant 0 : index
    %c0_86 = arith.constant 0 : index
    %262 = vector.load %arg5[%c0_85, %c0_86] : memref<128x512xbf16, #tpu.memory_space<vmem>>, vector<128x512xbf16>
    %cst_87 = arith.constant dense<0.000000e+00> : vector<8x512xf32>
    %263 = tpu.matmul %261, %262, %cst_87 {dimension_numbers = #tpu.dot_dimension_numbers<[1], [0], [0], [1], [0, 0, 1, 1], [], []>} : vector<8x128xbf16>, vector<128x512xbf16>, vector<8x512xf32> -> vector<8x512xf32>
    %264 = arith.addf %260, %263 : vector<8x512xf32>
    %265 = vector.extract_strided_slice %264 {offsets = [0, 0], sizes = [8, 128], strides = [1, 1]} : vector<8x512xf32> to vector<8x128xf32>
    %266 = arith.negf %265 : vector<8x128xf32>
    %267 = math.exp %266 : vector<8x128xf32>
    %cst_88 = arith.constant 1.000000e+00 : f32
    %268 = vector.broadcast %cst_88 : f32 to vector<8x128xf32>
    %269 = arith.addf %268, %267 : vector<8x128xf32>
    %270 = arith.divf %268, %269 : vector<8x128xf32>
    %271 = vector.extract_strided_slice %264 {offsets = [0, 128], sizes = [8, 128], strides = [1, 1]} : vector<8x512xf32> to vector<8x128xf32>
    %272 = arith.negf %271 : vector<8x128xf32>
    %273 = math.exp %272 : vector<8x128xf32>
    %cst_89 = arith.constant 1.000000e+00 : f32
    %274 = vector.broadcast %cst_89 : f32 to vector<8x128xf32>
    %275 = arith.addf %274, %273 : vector<8x128xf32>
    %276 = arith.divf %274, %275 : vector<8x128xf32>
    %277 = vector.extract_strided_slice %264 {offsets = [0, 256], sizes = [8, 128], strides = [1, 1]} : vector<8x512xf32> to vector<8x128xf32>
    %278 = math.tanh %277 : vector<8x128xf32>
    %279 = vector.extract_strided_slice %264 {offsets = [0, 384], sizes = [8, 128], strides = [1, 1]} : vector<8x512xf32> to vector<8x128xf32>
    %280 = arith.negf %279 : vector<8x128xf32>
    %281 = math.exp %280 : vector<8x128xf32>
    %cst_90 = arith.constant 1.000000e+00 : f32
    %282 = vector.broadcast %cst_90 : f32 to vector<8x128xf32>
    %283 = arith.addf %282, %281 : vector<8x128xf32>
    %284 = arith.divf %282, %283 : vector<8x128xf32>
    %285 = arith.mulf %276, %253 : vector<8x128xf32>
    %286 = arith.mulf %270, %278 : vector<8x128xf32>
    %287 = arith.addf %285, %286 : vector<8x128xf32>
    %288 = math.tanh %287 : vector<8x128xf32>
    %289 = arith.mulf %284, %288 : vector<8x128xf32>
    %290 = arith.addi %0, %c6_i32 : i32
    %c8_i32_91 = arith.constant 8 : i32
    %291 = arith.cmpi slt, %290, %c8_i32_91 : i32
    %292 = arith.select %291, %289, %252 : vector<8x128xf32>
    %293 = arith.select %291, %287, %253 : vector<8x128xf32>
    %294 = arith.index_cast %c6_i32 : i32 to index
    %c0_92 = arith.constant 0 : index
    %c0_93 = arith.constant 0 : index
    %295 = vector.load %arg11[%294, %c0_92, %c0_93] : memref<8x8x128xf32, #tpu.memory_space<vmem>>, vector<1x8x128xf32>
    %296 = vector.shape_cast %295 : vector<1x8x128xf32> to vector<8x128xf32>
    %297 = vector.shape_cast %292 : vector<8x128xf32> to vector<1x8x128xf32>
    tpu.vector_store %arg11[%294, %c0_92, %c0_93], %297 {strides = array<i32>} : memref<8x8x128xf32, #tpu.memory_space<vmem>>, vector<1x8x128xf32>,
    %c7_i32 = arith.constant 7 : i32
    %298 = arith.index_cast %c7_i32 : i32 to index
    %c0_94 = arith.constant 0 : index
    %c0_95 = arith.constant 0 : index
    %299 = vector.load %arg12[%298, %c0_94, %c0_95] : memref<8x8x512xf32, #tpu.memory_space<vmem>>, vector<1x8x512xf32>
    %300 = vector.shape_cast %299 : vector<1x8x512xf32> to vector<8x512xf32>
    %301 = arith.truncf %292 : vector<8x128xf32> to vector<8x128xbf16>
    %c0_96 = arith.constant 0 : index
    %c0_97 = arith.constant 0 : index
    %302 = vector.load %arg5[%c0_96, %c0_97] : memref<128x512xbf16, #tpu.memory_space<vmem>>, vector<128x512xbf16>
    %cst_98 = arith.constant dense<0.000000e+00> : vector<8x512xf32>
    %303 = tpu.matmul %301, %302, %cst_98 {dimension_numbers = #tpu.dot_dimension_numbers<[1], [0], [0], [1], [0, 0, 1, 1], [], []>} : vector<8x128xbf16>, vector<128x512xbf16>, vector<8x512xf32> -> vector<8x512xf32>
    %304 = arith.addf %300, %303 : vector<8x512xf32>
    %305 = vector.extract_strided_slice %304 {offsets = [0, 0], sizes = [8, 128], strides = [1, 1]} : vector<8x512xf32> to vector<8x128xf32>
    %306 = arith.negf %305 : vector<8x128xf32>
    %307 = math.exp %306 : vector<8x128xf32>
    %cst_99 = arith.constant 1.000000e+00 : f32
    %308 = vector.broadcast %cst_99 : f32 to vector<8x128xf32>
    %309 = arith.addf %308, %307 : vector<8x128xf32>
    %310 = arith.divf %308, %309 : vector<8x128xf32>
    %311 = vector.extract_strided_slice %304 {offsets = [0, 128], sizes = [8, 128], strides = [1, 1]} : vector<8x512xf32> to vector<8x128xf32>
    %312 = arith.negf %311 : vector<8x128xf32>
    %313 = math.exp %312 : vector<8x128xf32>
    %cst_100 = arith.constant 1.000000e+00 : f32
    %314 = vector.broadcast %cst_100 : f32 to vector<8x128xf32>
    %315 = arith.addf %314, %313 : vector<8x128xf32>
    %316 = arith.divf %314, %315 : vector<8x128xf32>
    %317 = vector.extract_strided_slice %304 {offsets = [0, 256], sizes = [8, 128], strides = [1, 1]} : vector<8x512xf32> to vector<8x128xf32>
    %318 = math.tanh %317 : vector<8x128xf32>
    %319 = vector.extract_strided_slice %304 {offsets = [0, 384], sizes = [8, 128], strides = [1, 1]} : vector<8x512xf32> to vector<8x128xf32>
    %320 = arith.negf %319 : vector<8x128xf32>
    %321 = math.exp %320 : vector<8x128xf32>
    %cst_101 = arith.constant 1.000000e+00 : f32
    %322 = vector.broadcast %cst_101 : f32 to vector<8x128xf32>
    %323 = arith.addf %322, %321 : vector<8x128xf32>
    %324 = arith.divf %322, %323 : vector<8x128xf32>
    %325 = arith.mulf %316, %293 : vector<8x128xf32>
    %326 = arith.mulf %310, %318 : vector<8x128xf32>
    %327 = arith.addf %325, %326 : vector<8x128xf32>
    %328 = math.tanh %327 : vector<8x128xf32>
    %329 = arith.mulf %324, %328 : vector<8x128xf32>
    %330 = arith.addi %0, %c7_i32 : i32
    %c8_i32_102 = arith.constant 8 : i32
    %331 = arith.cmpi slt, %330, %c8_i32_102 : i32
    %332 = arith.select %331, %329, %292 : vector<8x128xf32>
    %333 = arith.select %331, %327, %293 : vector<8x128xf32>
    %334 = arith.index_cast %c7_i32 : i32 to index
    %c0_103 = arith.constant 0 : index
    %c0_104 = arith.constant 0 : index
    %335 = vector.load %arg11[%334, %c0_103, %c0_104] : memref<8x8x128xf32, #tpu.memory_space<vmem>>, vector<1x8x128xf32>
    %336 = vector.shape_cast %335 : vector<1x8x128xf32> to vector<8x128xf32>
    %337 = vector.shape_cast %332 : vector<8x128xf32> to vector<1x8x128xf32>
    tpu.vector_store %arg11[%334, %c0_103, %c0_104], %337 {strides = array<i32>} : memref<8x8x128xf32, #tpu.memory_space<vmem>>, vector<1x8x128xf32>,
    %c8_i32_105 = arith.constant 8 : i32
    %c0_106 = arith.constant 0 : index
    %c0_107 = arith.constant 0 : index
    %c0_108 = arith.constant 0 : index
    %338 = vector.load %arg9[%c0_106, %c0_107, %c0_108] : memref<2x8x128xf32, #tpu.memory_space<vmem>>, vector<1x8x128xf32>
    %339 = vector.shape_cast %338 : vector<1x8x128xf32> to vector<8x128xf32>
    %340 = vector.shape_cast %332 : vector<8x128xf32> to vector<1x8x128xf32>
    tpu.vector_store %arg9[%c0_106, %c0_107, %c0_108], %340 {strides = array<i32>} : memref<2x8x128xf32, #tpu.memory_space<vmem>>, vector<1x8x128xf32>,
    %c0_109 = arith.constant 0 : index
    %c0_110 = arith.constant 0 : index
    %c0_111 = arith.constant 0 : index
    %341 = vector.load %arg10[%c0_109, %c0_110, %c0_111] : memref<2x8x128xf32, #tpu.memory_space<vmem>>, vector<1x8x128xf32>
    %342 = vector.shape_cast %341 : vector<1x8x128xf32> to vector<8x128xf32>
    %343 = vector.shape_cast %333 : vector<8x128xf32> to vector<1x8x128xf32>
    tpu.vector_store %arg10[%c0_109, %c0_110, %c0_111], %343 {strides = array<i32>} : memref<2x8x128xf32, #tpu.memory_space<vmem>>, vector<1x8x128xf32>,
    %c0_112 = arith.constant 0 : index
    %c0_113 = arith.constant 0 : index
    %c0_114 = arith.constant 0 : index
    %344 = vector.load %arg11[%c0_112, %c0_113, %c0_114] : memref<8x8x128xf32, #tpu.memory_space<vmem>>, vector<8x8x128xf32>
    %345 = vector.shape_cast %344 : vector<8x8x128xf32> to vector<64x128xf32>
    %346 = arith.truncf %345 : vector<64x128xf32> to vector<64x128xbf16>
    %c0_115 = arith.constant 0 : index
    %c0_116 = arith.constant 0 : index
    %347 = vector.load %arg4[%c0_115, %c0_116] : memref<128x512xbf16, #tpu.memory_space<vmem>>, vector<128x512xbf16>
    %cst_117 = arith.constant dense<0.000000e+00> : vector<64x512xf32>
    %348 = tpu.matmul %346, %347, %cst_117 {dimension_numbers = #tpu.dot_dimension_numbers<[1], [0], [0], [1], [0, 0, 1, 1], [], []>} : vector<64x128xbf16>, vector<128x512xbf16>, vector<64x512xf32> -> vector<64x512xf32>
    %c0_118 = arith.constant 0 : index
    %c0_119 = arith.constant 0 : index
    %349 = vector.load %arg8[%c0_118, %c0_119] : memref<1x512xf32, #tpu.memory_space<vmem>>, vector<1x512xf32>
    %350 = vector.broadcast %349 : vector<1x512xf32> to vector<64x512xf32>
    %351 = arith.addf %348, %350 : vector<64x512xf32>
    %352 = vector.shape_cast %351 : vector<64x512xf32> to vector<8x8x512xf32>
    %c0_120 = arith.constant 0 : index
    %c0_121 = arith.constant 0 : index
    %c0_122 = arith.constant 0 : index
    %353 = vector.load %arg12[%c0_120, %c0_121, %c0_122] : memref<8x8x512xf32, #tpu.memory_space<vmem>>, vector<8x8x512xf32>
    tpu.vector_store %arg12[%c0_120, %c0_121, %c0_122], %352 {strides = array<i32>} : memref<8x8x512xf32, #tpu.memory_space<vmem>>, vector<8x8x512xf32>,
    %c1 = arith.constant 1 : index
    %c0_123 = arith.constant 0 : index
    %c0_124 = arith.constant 0 : index
    %354 = vector.load %arg9[%c1, %c0_123, %c0_124] : memref<2x8x128xf32, #tpu.memory_space<vmem>>, vector<1x8x128xf32>
    %355 = vector.shape_cast %354 : vector<1x8x128xf32> to vector<8x128xf32>
    %c1_125 = arith.constant 1 : index
    %c0_126 = arith.constant 0 : index
    %c0_127 = arith.constant 0 : index
    %356 = vector.load %arg10[%c1_125, %c0_126, %c0_127] : memref<2x8x128xf32, #tpu.memory_space<vmem>>, vector<1x8x128xf32>
    %357 = vector.shape_cast %356 : vector<1x8x128xf32> to vector<8x128xf32>
    %c0_i32_128 = arith.constant 0 : i32
    %358 = arith.index_cast %c0_i32_128 : i32 to index
    %c0_129 = arith.constant 0 : index
    %c0_130 = arith.constant 0 : index
    %359 = vector.load %arg12[%358, %c0_129, %c0_130] : memref<8x8x512xf32, #tpu.memory_space<vmem>>, vector<1x8x512xf32>
    %360 = vector.shape_cast %359 : vector<1x8x512xf32> to vector<8x512xf32>
    %361 = arith.truncf %355 : vector<8x128xf32> to vector<8x128xbf16>
    %c0_131 = arith.constant 0 : index
    %c0_132 = arith.constant 0 : index
    %362 = vector.load %arg6[%c0_131, %c0_132] : memref<128x512xbf16, #tpu.memory_space<vmem>>, vector<128x512xbf16>
    %cst_133 = arith.constant dense<0.000000e+00> : vector<8x512xf32>
    %363 = tpu.matmul %361, %362, %cst_133 {dimension_numbers = #tpu.dot_dimension_numbers<[1], [0], [0], [1], [0, 0, 1, 1], [], []>} : vector<8x128xbf16>, vector<128x512xbf16>, vector<8x512xf32> -> vector<8x512xf32>
    %364 = arith.addf %360, %363 : vector<8x512xf32>
    %365 = vector.extract_strided_slice %364 {offsets = [0, 0], sizes = [8, 128], strides = [1, 1]} : vector<8x512xf32> to vector<8x128xf32>
    %366 = arith.negf %365 : vector<8x128xf32>
    %367 = math.exp %366 : vector<8x128xf32>
    %cst_134 = arith.constant 1.000000e+00 : f32
    %368 = vector.broadcast %cst_134 : f32 to vector<8x128xf32>
    %369 = arith.addf %368, %367 : vector<8x128xf32>
    %370 = arith.divf %368, %369 : vector<8x128xf32>
    %371 = vector.extract_strided_slice %364 {offsets = [0, 128], sizes = [8, 128], strides = [1, 1]} : vector<8x512xf32> to vector<8x128xf32>
    %372 = arith.negf %371 : vector<8x128xf32>
    %373 = math.exp %372 : vector<8x128xf32>
    %cst_135 = arith.constant 1.000000e+00 : f32
    %374 = vector.broadcast %cst_135 : f32 to vector<8x128xf32>
    %375 = arith.addf %374, %373 : vector<8x128xf32>
    %376 = arith.divf %374, %375 : vector<8x128xf32>
    %377 = vector.extract_strided_slice %364 {offsets = [0, 256], sizes = [8, 128], strides = [1, 1]} : vector<8x512xf32> to vector<8x128xf32>
    %378 = math.tanh %377 : vector<8x128xf32>
    %379 = vector.extract_strided_slice %364 {offsets = [0, 384], sizes = [8, 128], strides = [1, 1]} : vector<8x512xf32> to vector<8x128xf32>
    %380 = arith.negf %379 : vector<8x128xf32>
    %381 = math.exp %380 : vector<8x128xf32>
    %cst_136 = arith.constant 1.000000e+00 : f32
    %382 = vector.broadcast %cst_136 : f32 to vector<8x128xf32>
    %383 = arith.addf %382, %381 : vector<8x128xf32>
    %384 = arith.divf %382, %383 : vector<8x128xf32>
    %385 = arith.mulf %376, %357 : vector<8x128xf32>
    %386 = arith.mulf %370, %378 : vector<8x128xf32>
    %387 = arith.addf %385, %386 : vector<8x128xf32>
    %388 = math.tanh %387 : vector<8x128xf32>
    %389 = arith.mulf %384, %388 : vector<8x128xf32>
    %390 = arith.addi %0, %c0_i32_128 : i32
    %c8_i32_137 = arith.constant 8 : i32
    %391 = arith.cmpi slt, %390, %c8_i32_137 : i32
    %392 = arith.select %391, %389, %355 : vector<8x128xf32>
    %393 = arith.select %391, %387, %357 : vector<8x128xf32>
    %c1_i32_138 = arith.constant 1 : i32
    %394 = arith.index_cast %c1_i32_138 : i32 to index
    %c0_139 = arith.constant 0 : index
    %c0_140 = arith.constant 0 : index
    %395 = vector.load %arg12[%394, %c0_139, %c0_140] : memref<8x8x512xf32, #tpu.memory_space<vmem>>, vector<1x8x512xf32>
    %396 = vector.shape_cast %395 : vector<1x8x512xf32> to vector<8x512xf32>
    %397 = arith.truncf %392 : vector<8x128xf32> to vector<8x128xbf16>
    %c0_141 = arith.constant 0 : index
    %c0_142 = arith.constant 0 : index
    %398 = vector.load %arg6[%c0_141, %c0_142] : memref<128x512xbf16, #tpu.memory_space<vmem>>, vector<128x512xbf16>
    %cst_143 = arith.constant dense<0.000000e+00> : vector<8x512xf32>
    %399 = tpu.matmul %397, %398, %cst_143 {dimension_numbers = #tpu.dot_dimension_numbers<[1], [0], [0], [1], [0, 0, 1, 1], [], []>} : vector<8x128xbf16>, vector<128x512xbf16>, vector<8x512xf32> -> vector<8x512xf32>
    %400 = arith.addf %396, %399 : vector<8x512xf32>
    %401 = vector.extract_strided_slice %400 {offsets = [0, 0], sizes = [8, 128], strides = [1, 1]} : vector<8x512xf32> to vector<8x128xf32>
    %402 = arith.negf %401 : vector<8x128xf32>
    %403 = math.exp %402 : vector<8x128xf32>
    %cst_144 = arith.constant 1.000000e+00 : f32
    %404 = vector.broadcast %cst_144 : f32 to vector<8x128xf32>
    %405 = arith.addf %404, %403 : vector<8x128xf32>
    %406 = arith.divf %404, %405 : vector<8x128xf32>
    %407 = vector.extract_strided_slice %400 {offsets = [0, 128], sizes = [8, 128], strides = [1, 1]} : vector<8x512xf32> to vector<8x128xf32>
    %408 = arith.negf %407 : vector<8x128xf32>
    %409 = math.exp %408 : vector<8x128xf32>
    %cst_145 = arith.constant 1.000000e+00 : f32
    %410 = vector.broadcast %cst_145 : f32 to vector<8x128xf32>
    %411 = arith.addf %410, %409 : vector<8x128xf32>
    %412 = arith.divf %410, %411 : vector<8x128xf32>
    %413 = vector.extract_strided_slice %400 {offsets = [0, 256], sizes = [8, 128], strides = [1, 1]} : vector<8x512xf32> to vector<8x128xf32>
    %414 = math.tanh %413 : vector<8x128xf32>
    %415 = vector.extract_strided_slice %400 {offsets = [0, 384], sizes = [8, 128], strides = [1, 1]} : vector<8x512xf32> to vector<8x128xf32>
    %416 = arith.negf %415 : vector<8x128xf32>
    %417 = math.exp %416 : vector<8x128xf32>
    %cst_146 = arith.constant 1.000000e+00 : f32
    %418 = vector.broadcast %cst_146 : f32 to vector<8x128xf32>
    %419 = arith.addf %418, %417 : vector<8x128xf32>
    %420 = arith.divf %418, %419 : vector<8x128xf32>
    %421 = arith.mulf %412, %393 : vector<8x128xf32>
    %422 = arith.mulf %406, %414 : vector<8x128xf32>
    %423 = arith.addf %421, %422 : vector<8x128xf32>
    %424 = math.tanh %423 : vector<8x128xf32>
    %425 = arith.mulf %420, %424 : vector<8x128xf32>
    %426 = arith.addi %0, %c1_i32_138 : i32
    %c8_i32_147 = arith.constant 8 : i32
    %427 = arith.cmpi slt, %426, %c8_i32_147 : i32
    %428 = arith.select %427, %425, %392 : vector<8x128xf32>
    %429 = arith.select %427, %423, %393 : vector<8x128xf32>
    %c2_i32_148 = arith.constant 2 : i32
    %430 = arith.index_cast %c2_i32_148 : i32 to index
    %c0_149 = arith.constant 0 : index
    %c0_150 = arith.constant 0 : index
    %431 = vector.load %arg12[%430, %c0_149, %c0_150] : memref<8x8x512xf32, #tpu.memory_space<vmem>>, vector<1x8x512xf32>
    %432 = vector.shape_cast %431 : vector<1x8x512xf32> to vector<8x512xf32>
    %433 = arith.truncf %428 : vector<8x128xf32> to vector<8x128xbf16>
    %c0_151 = arith.constant 0 : index
    %c0_152 = arith.constant 0 : index
    %434 = vector.load %arg6[%c0_151, %c0_152] : memref<128x512xbf16, #tpu.memory_space<vmem>>, vector<128x512xbf16>
    %cst_153 = arith.constant dense<0.000000e+00> : vector<8x512xf32>
    %435 = tpu.matmul %433, %434, %cst_153 {dimension_numbers = #tpu.dot_dimension_numbers<[1], [0], [0], [1], [0, 0, 1, 1], [], []>} : vector<8x128xbf16>, vector<128x512xbf16>, vector<8x512xf32> -> vector<8x512xf32>
    %436 = arith.addf %432, %435 : vector<8x512xf32>
    %437 = vector.extract_strided_slice %436 {offsets = [0, 0], sizes = [8, 128], strides = [1, 1]} : vector<8x512xf32> to vector<8x128xf32>
    %438 = arith.negf %437 : vector<8x128xf32>
    %439 = math.exp %438 : vector<8x128xf32>
    %cst_154 = arith.constant 1.000000e+00 : f32
    %440 = vector.broadcast %cst_154 : f32 to vector<8x128xf32>
    %441 = arith.addf %440, %439 : vector<8x128xf32>
    %442 = arith.divf %440, %441 : vector<8x128xf32>
    %443 = vector.extract_strided_slice %436 {offsets = [0, 128], sizes = [8, 128], strides = [1, 1]} : vector<8x512xf32> to vector<8x128xf32>
    %444 = arith.negf %443 : vector<8x128xf32>
    %445 = math.exp %444 : vector<8x128xf32>
    %cst_155 = arith.constant 1.000000e+00 : f32
    %446 = vector.broadcast %cst_155 : f32 to vector<8x128xf32>
    %447 = arith.addf %446, %445 : vector<8x128xf32>
    %448 = arith.divf %446, %447 : vector<8x128xf32>
    %449 = vector.extract_strided_slice %436 {offsets = [0, 256], sizes = [8, 128], strides = [1, 1]} : vector<8x512xf32> to vector<8x128xf32>
    %450 = math.tanh %449 : vector<8x128xf32>
    %451 = vector.extract_strided_slice %436 {offsets = [0, 384], sizes = [8, 128], strides = [1, 1]} : vector<8x512xf32> to vector<8x128xf32>
    %452 = arith.negf %451 : vector<8x128xf32>
    %453 = math.exp %452 : vector<8x128xf32>
    %cst_156 = arith.constant 1.000000e+00 : f32
    %454 = vector.broadcast %cst_156 : f32 to vector<8x128xf32>
    %455 = arith.addf %454, %453 : vector<8x128xf32>
    %456 = arith.divf %454, %455 : vector<8x128xf32>
    %457 = arith.mulf %448, %429 : vector<8x128xf32>
    %458 = arith.mulf %442, %450 : vector<8x128xf32>
    %459 = arith.addf %457, %458 : vector<8x128xf32>
    %460 = math.tanh %459 : vector<8x128xf32>
    %461 = arith.mulf %456, %460 : vector<8x128xf32>
    %462 = arith.addi %0, %c2_i32_148 : i32
    %c8_i32_157 = arith.constant 8 : i32
    %463 = arith.cmpi slt, %462, %c8_i32_157 : i32
    %464 = arith.select %463, %461, %428 : vector<8x128xf32>
    %465 = arith.select %463, %459, %429 : vector<8x128xf32>
    %c3_i32_158 = arith.constant 3 : i32
    %466 = arith.index_cast %c3_i32_158 : i32 to index
    %c0_159 = arith.constant 0 : index
    %c0_160 = arith.constant 0 : index
    %467 = vector.load %arg12[%466, %c0_159, %c0_160] : memref<8x8x512xf32, #tpu.memory_space<vmem>>, vector<1x8x512xf32>
    %468 = vector.shape_cast %467 : vector<1x8x512xf32> to vector<8x512xf32>
    %469 = arith.truncf %464 : vector<8x128xf32> to vector<8x128xbf16>
    %c0_161 = arith.constant 0 : index
    %c0_162 = arith.constant 0 : index
    %470 = vector.load %arg6[%c0_161, %c0_162] : memref<128x512xbf16, #tpu.memory_space<vmem>>, vector<128x512xbf16>
    %cst_163 = arith.constant dense<0.000000e+00> : vector<8x512xf32>
    %471 = tpu.matmul %469, %470, %cst_163 {dimension_numbers = #tpu.dot_dimension_numbers<[1], [0], [0], [1], [0, 0, 1, 1], [], []>} : vector<8x128xbf16>, vector<128x512xbf16>, vector<8x512xf32> -> vector<8x512xf32>
    %472 = arith.addf %468, %471 : vector<8x512xf32>
    %473 = vector.extract_strided_slice %472 {offsets = [0, 0], sizes = [8, 128], strides = [1, 1]} : vector<8x512xf32> to vector<8x128xf32>
    %474 = arith.negf %473 : vector<8x128xf32>
    %475 = math.exp %474 : vector<8x128xf32>
    %cst_164 = arith.constant 1.000000e+00 : f32
    %476 = vector.broadcast %cst_164 : f32 to vector<8x128xf32>
    %477 = arith.addf %476, %475 : vector<8x128xf32>
    %478 = arith.divf %476, %477 : vector<8x128xf32>
    %479 = vector.extract_strided_slice %472 {offsets = [0, 128], sizes = [8, 128], strides = [1, 1]} : vector<8x512xf32> to vector<8x128xf32>
    %480 = arith.negf %479 : vector<8x128xf32>
    %481 = math.exp %480 : vector<8x128xf32>
    %cst_165 = arith.constant 1.000000e+00 : f32
    %482 = vector.broadcast %cst_165 : f32 to vector<8x128xf32>
    %483 = arith.addf %482, %481 : vector<8x128xf32>
    %484 = arith.divf %482, %483 : vector<8x128xf32>
    %485 = vector.extract_strided_slice %472 {offsets = [0, 256], sizes = [8, 128], strides = [1, 1]} : vector<8x512xf32> to vector<8x128xf32>
    %486 = math.tanh %485 : vector<8x128xf32>
    %487 = vector.extract_strided_slice %472 {offsets = [0, 384], sizes = [8, 128], strides = [1, 1]} : vector<8x512xf32> to vector<8x128xf32>
    %488 = arith.negf %487 : vector<8x128xf32>
    %489 = math.exp %488 : vector<8x128xf32>
    %cst_166 = arith.constant 1.000000e+00 : f32
    %490 = vector.broadcast %cst_166 : f32 to vector<8x128xf32>
    %491 = arith.addf %490, %489 : vector<8x128xf32>
    %492 = arith.divf %490, %491 : vector<8x128xf32>
    %493 = arith.mulf %484, %465 : vector<8x128xf32>
    %494 = arith.mulf %478, %486 : vector<8x128xf32>
    %495 = arith.addf %493, %494 : vector<8x128xf32>
    %496 = math.tanh %495 : vector<8x128xf32>
    %497 = arith.mulf %492, %496 : vector<8x128xf32>
    %498 = arith.addi %0, %c3_i32_158 : i32
    %c8_i32_167 = arith.constant 8 : i32
    %499 = arith.cmpi slt, %498, %c8_i32_167 : i32
    %500 = arith.select %499, %497, %464 : vector<8x128xf32>
    %501 = arith.select %499, %495, %465 : vector<8x128xf32>
    %c4_i32_168 = arith.constant 4 : i32
    %502 = arith.index_cast %c4_i32_168 : i32 to index
    %c0_169 = arith.constant 0 : index
    %c0_170 = arith.constant 0 : index
    %503 = vector.load %arg12[%502, %c0_169, %c0_170] : memref<8x8x512xf32, #tpu.memory_space<vmem>>, vector<1x8x512xf32>
    %504 = vector.shape_cast %503 : vector<1x8x512xf32> to vector<8x512xf32>
    %505 = arith.truncf %500 : vector<8x128xf32> to vector<8x128xbf16>
    %c0_171 = arith.constant 0 : index
    %c0_172 = arith.constant 0 : index
    %506 = vector.load %arg6[%c0_171, %c0_172] : memref<128x512xbf16, #tpu.memory_space<vmem>>, vector<128x512xbf16>
    %cst_173 = arith.constant dense<0.000000e+00> : vector<8x512xf32>
    %507 = tpu.matmul %505, %506, %cst_173 {dimension_numbers = #tpu.dot_dimension_numbers<[1], [0], [0], [1], [0, 0, 1, 1], [], []>} : vector<8x128xbf16>, vector<128x512xbf16>, vector<8x512xf32> -> vector<8x512xf32>
    %508 = arith.addf %504, %507 : vector<8x512xf32>
    %509 = vector.extract_strided_slice %508 {offsets = [0, 0], sizes = [8, 128], strides = [1, 1]} : vector<8x512xf32> to vector<8x128xf32>
    %510 = arith.negf %509 : vector<8x128xf32>
    %511 = math.exp %510 : vector<8x128xf32>
    %cst_174 = arith.constant 1.000000e+00 : f32
    %512 = vector.broadcast %cst_174 : f32 to vector<8x128xf32>
    %513 = arith.addf %512, %511 : vector<8x128xf32>
    %514 = arith.divf %512, %513 : vector<8x128xf32>
    %515 = vector.extract_strided_slice %508 {offsets = [0, 128], sizes = [8, 128], strides = [1, 1]} : vector<8x512xf32> to vector<8x128xf32>
    %516 = arith.negf %515 : vector<8x128xf32>
    %517 = math.exp %516 : vector<8x128xf32>
    %cst_175 = arith.constant 1.000000e+00 : f32
    %518 = vector.broadcast %cst_175 : f32 to vector<8x128xf32>
    %519 = arith.addf %518, %517 : vector<8x128xf32>
    %520 = arith.divf %518, %519 : vector<8x128xf32>
    %521 = vector.extract_strided_slice %508 {offsets = [0, 256], sizes = [8, 128], strides = [1, 1]} : vector<8x512xf32> to vector<8x128xf32>
    %522 = math.tanh %521 : vector<8x128xf32>
    %523 = vector.extract_strided_slice %508 {offsets = [0, 384], sizes = [8, 128], strides = [1, 1]} : vector<8x512xf32> to vector<8x128xf32>
    %524 = arith.negf %523 : vector<8x128xf32>
    %525 = math.exp %524 : vector<8x128xf32>
    %cst_176 = arith.constant 1.000000e+00 : f32
    %526 = vector.broadcast %cst_176 : f32 to vector<8x128xf32>
    %527 = arith.addf %526, %525 : vector<8x128xf32>
    %528 = arith.divf %526, %527 : vector<8x128xf32>
    %529 = arith.mulf %520, %501 : vector<8x128xf32>
    %530 = arith.mulf %514, %522 : vector<8x128xf32>
    %531 = arith.addf %529, %530 : vector<8x128xf32>
    %532 = math.tanh %531 : vector<8x128xf32>
    %533 = arith.mulf %528, %532 : vector<8x128xf32>
    %534 = arith.addi %0, %c4_i32_168 : i32
    %c8_i32_177 = arith.constant 8 : i32
    %535 = arith.cmpi slt, %534, %c8_i32_177 : i32
    %536 = arith.select %535, %533, %500 : vector<8x128xf32>
    %537 = arith.select %535, %531, %501 : vector<8x128xf32>
    %c5_i32_178 = arith.constant 5 : i32
    %538 = arith.index_cast %c5_i32_178 : i32 to index
    %c0_179 = arith.constant 0 : index
    %c0_180 = arith.constant 0 : index
    %539 = vector.load %arg12[%538, %c0_179, %c0_180] : memref<8x8x512xf32, #tpu.memory_space<vmem>>, vector<1x8x512xf32>
    %540 = vector.shape_cast %539 : vector<1x8x512xf32> to vector<8x512xf32>
    %541 = arith.truncf %536 : vector<8x128xf32> to vector<8x128xbf16>
    %c0_181 = arith.constant 0 : index
    %c0_182 = arith.constant 0 : index
    %542 = vector.load %arg6[%c0_181, %c0_182] : memref<128x512xbf16, #tpu.memory_space<vmem>>, vector<128x512xbf16>
    %cst_183 = arith.constant dense<0.000000e+00> : vector<8x512xf32>
    %543 = tpu.matmul %541, %542, %cst_183 {dimension_numbers = #tpu.dot_dimension_numbers<[1], [0], [0], [1], [0, 0, 1, 1], [], []>} : vector<8x128xbf16>, vector<128x512xbf16>, vector<8x512xf32> -> vector<8x512xf32>
    %544 = arith.addf %540, %543 : vector<8x512xf32>
    %545 = vector.extract_strided_slice %544 {offsets = [0, 0], sizes = [8, 128], strides = [1, 1]} : vector<8x512xf32> to vector<8x128xf32>
    %546 = arith.negf %545 : vector<8x128xf32>
    %547 = math.exp %546 : vector<8x128xf32>
    %cst_184 = arith.constant 1.000000e+00 : f32
    %548 = vector.broadcast %cst_184 : f32 to vector<8x128xf32>
    %549 = arith.addf %548, %547 : vector<8x128xf32>
    %550 = arith.divf %548, %549 : vector<8x128xf32>
    %551 = vector.extract_strided_slice %544 {offsets = [0, 128], sizes = [8, 128], strides = [1, 1]} : vector<8x512xf32> to vector<8x128xf32>
    %552 = arith.negf %551 : vector<8x128xf32>
    %553 = math.exp %552 : vector<8x128xf32>
    %cst_185 = arith.constant 1.000000e+00 : f32
    %554 = vector.broadcast %cst_185 : f32 to vector<8x128xf32>
    %555 = arith.addf %554, %553 : vector<8x128xf32>
    %556 = arith.divf %554, %555 : vector<8x128xf32>
    %557 = vector.extract_strided_slice %544 {offsets = [0, 256], sizes = [8, 128], strides = [1, 1]} : vector<8x512xf32> to vector<8x128xf32>
    %558 = math.tanh %557 : vector<8x128xf32>
    %559 = vector.extract_strided_slice %544 {offsets = [0, 384], sizes = [8, 128], strides = [1, 1]} : vector<8x512xf32> to vector<8x128xf32>
    %560 = arith.negf %559 : vector<8x128xf32>
    %561 = math.exp %560 : vector<8x128xf32>
    %cst_186 = arith.constant 1.000000e+00 : f32
    %562 = vector.broadcast %cst_186 : f32 to vector<8x128xf32>
    %563 = arith.addf %562, %561 : vector<8x128xf32>
    %564 = arith.divf %562, %563 : vector<8x128xf32>
    %565 = arith.mulf %556, %537 : vector<8x128xf32>
    %566 = arith.mulf %550, %558 : vector<8x128xf32>
    %567 = arith.addf %565, %566 : vector<8x128xf32>
    %568 = math.tanh %567 : vector<8x128xf32>
    %569 = arith.mulf %564, %568 : vector<8x128xf32>
    %570 = arith.addi %0, %c5_i32_178 : i32
    %c8_i32_187 = arith.constant 8 : i32
    %571 = arith.cmpi slt, %570, %c8_i32_187 : i32
    %572 = arith.select %571, %569, %536 : vector<8x128xf32>
    %573 = arith.select %571, %567, %537 : vector<8x128xf32>
    %c6_i32_188 = arith.constant 6 : i32
    %574 = arith.index_cast %c6_i32_188 : i32 to index
    %c0_189 = arith.constant 0 : index
    %c0_190 = arith.constant 0 : index
    %575 = vector.load %arg12[%574, %c0_189, %c0_190] : memref<8x8x512xf32, #tpu.memory_space<vmem>>, vector<1x8x512xf32>
    %576 = vector.shape_cast %575 : vector<1x8x512xf32> to vector<8x512xf32>
    %577 = arith.truncf %572 : vector<8x128xf32> to vector<8x128xbf16>
    %c0_191 = arith.constant 0 : index
    %c0_192 = arith.constant 0 : index
    %578 = vector.load %arg6[%c0_191, %c0_192] : memref<128x512xbf16, #tpu.memory_space<vmem>>, vector<128x512xbf16>
    %cst_193 = arith.constant dense<0.000000e+00> : vector<8x512xf32>
    %579 = tpu.matmul %577, %578, %cst_193 {dimension_numbers = #tpu.dot_dimension_numbers<[1], [0], [0], [1], [0, 0, 1, 1], [], []>} : vector<8x128xbf16>, vector<128x512xbf16>, vector<8x512xf32> -> vector<8x512xf32>
    %580 = arith.addf %576, %579 : vector<8x512xf32>
    %581 = vector.extract_strided_slice %580 {offsets = [0, 0], sizes = [8, 128], strides = [1, 1]} : vector<8x512xf32> to vector<8x128xf32>
    %582 = arith.negf %581 : vector<8x128xf32>
    %583 = math.exp %582 : vector<8x128xf32>
    %cst_194 = arith.constant 1.000000e+00 : f32
    %584 = vector.broadcast %cst_194 : f32 to vector<8x128xf32>
    %585 = arith.addf %584, %583 : vector<8x128xf32>
    %586 = arith.divf %584, %585 : vector<8x128xf32>
    %587 = vector.extract_strided_slice %580 {offsets = [0, 128], sizes = [8, 128], strides = [1, 1]} : vector<8x512xf32> to vector<8x128xf32>
    %588 = arith.negf %587 : vector<8x128xf32>
    %589 = math.exp %588 : vector<8x128xf32>
    %cst_195 = arith.constant 1.000000e+00 : f32
    %590 = vector.broadcast %cst_195 : f32 to vector<8x128xf32>
    %591 = arith.addf %590, %589 : vector<8x128xf32>
    %592 = arith.divf %590, %591 : vector<8x128xf32>
    %593 = vector.extract_strided_slice %580 {offsets = [0, 256], sizes = [8, 128], strides = [1, 1]} : vector<8x512xf32> to vector<8x128xf32>
    %594 = math.tanh %593 : vector<8x128xf32>
    %595 = vector.extract_strided_slice %580 {offsets = [0, 384], sizes = [8, 128], strides = [1, 1]} : vector<8x512xf32> to vector<8x128xf32>
    %596 = arith.negf %595 : vector<8x128xf32>
    %597 = math.exp %596 : vector<8x128xf32>
    %cst_196 = arith.constant 1.000000e+00 : f32
    %598 = vector.broadcast %cst_196 : f32 to vector<8x128xf32>
    %599 = arith.addf %598, %597 : vector<8x128xf32>
    %600 = arith.divf %598, %599 : vector<8x128xf32>
    %601 = arith.mulf %592, %573 : vector<8x128xf32>
    %602 = arith.mulf %586, %594 : vector<8x128xf32>
    %603 = arith.addf %601, %602 : vector<8x128xf32>
    %604 = math.tanh %603 : vector<8x128xf32>
    %605 = arith.mulf %600, %604 : vector<8x128xf32>
    %606 = arith.addi %0, %c6_i32_188 : i32
    %c8_i32_197 = arith.constant 8 : i32
    %607 = arith.cmpi slt, %606, %c8_i32_197 : i32
    %608 = arith.select %607, %605, %572 : vector<8x128xf32>
    %609 = arith.select %607, %603, %573 : vector<8x128xf32>
    %c7_i32_198 = arith.constant 7 : i32
    %610 = arith.index_cast %c7_i32_198 : i32 to index
    %c0_199 = arith.constant 0 : index
    %c0_200 = arith.constant 0 : index
    %611 = vector.load %arg12[%610, %c0_199, %c0_200] : memref<8x8x512xf32, #tpu.memory_space<vmem>>, vector<1x8x512xf32>
    %612 = vector.shape_cast %611 : vector<1x8x512xf32> to vector<8x512xf32>
    %613 = arith.truncf %608 : vector<8x128xf32> to vector<8x128xbf16>
    %c0_201 = arith.constant 0 : index
    %c0_202 = arith.constant 0 : index
    %614 = vector.load %arg6[%c0_201, %c0_202] : memref<128x512xbf16, #tpu.memory_space<vmem>>, vector<128x512xbf16>
    %cst_203 = arith.constant dense<0.000000e+00> : vector<8x512xf32>
    %615 = tpu.matmul %613, %614, %cst_203 {dimension_numbers = #tpu.dot_dimension_numbers<[1], [0], [0], [1], [0, 0, 1, 1], [], []>} : vector<8x128xbf16>, vector<128x512xbf16>, vector<8x512xf32> -> vector<8x512xf32>
    %616 = arith.addf %612, %615 : vector<8x512xf32>
    %617 = vector.extract_strided_slice %616 {offsets = [0, 0], sizes = [8, 128], strides = [1, 1]} : vector<8x512xf32> to vector<8x128xf32>
    %618 = arith.negf %617 : vector<8x128xf32>
    %619 = math.exp %618 : vector<8x128xf32>
    %cst_204 = arith.constant 1.000000e+00 : f32
    %620 = vector.broadcast %cst_204 : f32 to vector<8x128xf32>
    %621 = arith.addf %620, %619 : vector<8x128xf32>
    %622 = arith.divf %620, %621 : vector<8x128xf32>
    %623 = vector.extract_strided_slice %616 {offsets = [0, 128], sizes = [8, 128], strides = [1, 1]} : vector<8x512xf32> to vector<8x128xf32>
    %624 = arith.negf %623 : vector<8x128xf32>
    %625 = math.exp %624 : vector<8x128xf32>
    %cst_205 = arith.constant 1.000000e+00 : f32
    %626 = vector.broadcast %cst_205 : f32 to vector<8x128xf32>
    %627 = arith.addf %626, %625 : vector<8x128xf32>
    %628 = arith.divf %626, %627 : vector<8x128xf32>
    %629 = vector.extract_strided_slice %616 {offsets = [0, 256], sizes = [8, 128], strides = [1, 1]} : vector<8x512xf32> to vector<8x128xf32>
    %630 = math.tanh %629 : vector<8x128xf32>
    %631 = vector.extract_strided_slice %616 {offsets = [0, 384], sizes = [8, 128], strides = [1, 1]} : vector<8x512xf32> to vector<8x128xf32>
    %632 = arith.negf %631 : vector<8x128xf32>
    %633 = math.exp %632 : vector<8x128xf32>
    %cst_206 = arith.constant 1.000000e+00 : f32
    %634 = vector.broadcast %cst_206 : f32 to vector<8x128xf32>
    %635 = arith.addf %634, %633 : vector<8x128xf32>
    %636 = arith.divf %634, %635 : vector<8x128xf32>
    %637 = arith.mulf %628, %609 : vector<8x128xf32>
    %638 = arith.mulf %622, %630 : vector<8x128xf32>
    %639 = arith.addf %637, %638 : vector<8x128xf32>
    %640 = math.tanh %639 : vector<8x128xf32>
    %641 = arith.mulf %636, %640 : vector<8x128xf32>
    %642 = arith.addi %0, %c7_i32_198 : i32
    %c8_i32_207 = arith.constant 8 : i32
    %643 = arith.cmpi slt, %642, %c8_i32_207 : i32
    %644 = arith.select %643, %641, %608 : vector<8x128xf32>
    %645 = arith.select %643, %639, %609 : vector<8x128xf32>
    %c8_i32_208 = arith.constant 8 : i32
    %c1_209 = arith.constant 1 : index
    %c0_210 = arith.constant 0 : index
    %c0_211 = arith.constant 0 : index
    %646 = vector.load %arg9[%c1_209, %c0_210, %c0_211] : memref<2x8x128xf32, #tpu.memory_space<vmem>>, vector<1x8x128xf32>
    %647 = vector.shape_cast %646 : vector<1x8x128xf32> to vector<8x128xf32>
    %648 = vector.shape_cast %644 : vector<8x128xf32> to vector<1x8x128xf32>
    tpu.vector_store %arg9[%c1_209, %c0_210, %c0_211], %648 {strides = array<i32>} : memref<2x8x128xf32, #tpu.memory_space<vmem>>, vector<1x8x128xf32>,
    %c1_212 = arith.constant 1 : index
    %c0_213 = arith.constant 0 : index
    %c0_214 = arith.constant 0 : index
    %649 = vector.load %arg10[%c1_212, %c0_213, %c0_214] : memref<2x8x128xf32, #tpu.memory_space<vmem>>, vector<1x8x128xf32>
    %650 = vector.shape_cast %649 : vector<1x8x128xf32> to vector<8x128xf32>
    %651 = vector.shape_cast %645 : vector<8x128xf32> to vector<1x8x128xf32>
    tpu.vector_store %arg10[%c1_212, %c0_213, %c0_214], %651 {strides = array<i32>} : memref<2x8x128xf32, #tpu.memory_space<vmem>>, vector<1x8x128xf32>,
    return
  }
  func.func @transform_0(%arg0: i32, %arg1: i32) -> (i32, i32, i32) {
    %c0_i32 = arith.constant 0 : i32
    %c0_i32_0 = arith.constant 0 : i32
    return %arg1, %arg0, %c0_i32 : i32, i32, i32
  }
  func.func @transform_1(%arg0: i32, %arg1: i32) -> (i32, i32) {
    %c0_i32 = arith.constant 0 : i32
    %c0_i32_0 = arith.constant 0 : i32
    %c0_i32_1 = arith.constant 0 : i32
    return %c0_i32, %c0_i32_0 : i32, i32
  }
  func.func @transform_2(%arg0: i32, %arg1: i32) -> (i32, i32) {
    %c0_i32 = arith.constant 0 : i32
    %c0_i32_0 = arith.constant 0 : i32
    %c0_i32_1 = arith.constant 0 : i32
    return %c0_i32, %c0_i32_0 : i32, i32
  }
  func.func @transform_3(%arg0: i32, %arg1: i32) -> (i32, i32) {
    %c0_i32 = arith.constant 0 : i32
    %c0_i32_0 = arith.constant 0 : i32
    %c0_i32_1 = arith.constant 0 : i32
    return %c0_i32, %c0_i32_0 : i32, i32
  }
  func.func @transform_4(%arg0: i32, %arg1: i32) -> (i32, i32) {
    %c0_i32 = arith.constant 0 : i32
    %c0_i32_0 = arith.constant 0 : i32
    %c0_i32_1 = arith.constant 0 : i32
    return %c0_i32, %c0_i32_0 : i32, i32
  }
  func.func @transform_5(%arg0: i32, %arg1: i32) -> (i32, i32) {
    %c0_i32 = arith.constant 0 : i32
    %c0_i32_0 = arith.constant 0 : i32
    %c0_i32_1 = arith.constant 0 : i32
    return %c0_i32, %c0_i32_0 : i32, i32
  }
  func.func @transform_6(%arg0: i32, %arg1: i32) -> (i32, i32) {
    %c0_i32 = arith.constant 0 : i32
    %c0_i32_0 = arith.constant 0 : i32
    %c0_i32_1 = arith.constant 0 : i32
    return %c0_i32, %c0_i32_0 : i32, i32
  }
  func.func @transform_7(%arg0: i32, %arg1: i32) -> (i32, i32, i32) {
    %c0_i32 = arith.constant 0 : i32
    %c0_i32_0 = arith.constant 0 : i32
    %c0_i32_1 = arith.constant 0 : i32
    return %c0_i32, %arg0, %c0_i32_0 : i32, i32, i32
  }
  func.func @transform_8(%arg0: i32, %arg1: i32) -> (i32, i32, i32) {
    %c0_i32 = arith.constant 0 : i32
    %c0_i32_0 = arith.constant 0 : i32
    %c0_i32_1 = arith.constant 0 : i32
    return %c0_i32, %arg0, %c0_i32_0 : i32, i32, i32
  }
}

</mosaic_0001>

<llo_original>
// kernel: tpu_custom_call.1
$region0: #{tpu_custom_call.1}
  #allocation0 [shape = 'u32[]', space=smem, size = 0x4, offset = 0x4, fixed_abs, tag = 'smem constant byte address 0x4 - core index']
  #allocation1 [shape = 'u32[144,128]{1,0:T(1,128)}', space=vmem, size = 0x12000, scoped, tag = 'internal scratch']
  %s0 = inlined_call_operand.hbm [shape: f32[8,128], index: 0, kind: input, shape index: {}]
  %s1 = inlined_call_operand.hbm [shape: f32[8,128], index: 1, kind: output, shape index: {}]
  %s2 = sld [smem:[#allocation0]]
  $region18: #{tpu_custom_call.1} parent=0
    _
  %s4 = ssub.s32 1, %s2
  %s5 = scalar_select 0, %s4, %s2
  $region1: #{tpu_custom_call.1} parent=0
    #allocation2 [shape = 'u8[4096]{0}', space=vmem, size = 0x1000, scoped, tag = 'input window, operand 0, single buffered']
    #allocation3 [shape = 's32[1]{0}', space=sflag, size = 0x4, scoped, tag = 'scoped memory for tpu_custom_call.1']
    #allocation4 [shape = 's32[1]{0}', space=sflag, size = 0x4, scoped, tag = 'scoped memory for tpu_custom_call.1']
    #allocation5 [shape = 'u8[4096]{0}', space=vmem, size = 0x1000, scoped, tag = 'output window, operand 0, single buffered']
    %6 = vsyncpa [#allocation3], 0
    %7 = vsyncpa [#allocation4], 0
    // Predicated region
    $region2: #{tpu_custom_call.1} parent=1 // pred_check
      _
    $region3: #{tpu_custom_call.1} parent=1 // pred_check_branch
      %9 = sbr.rel (0) target = $region5
    $region4: #{tpu_custom_call.1} parent=1 // pred_region
      %s11 = ssub.s32 128, 128
      %12 = vsyncadd [#allocation3], %s11
      %s14 = sshll.u32 [#allocation2], 4
      %s15 = int_to_ptr.vmem [resolvable:$true] %s14
      %17 = dma.hbm_to_vmem [thread:$0]  %s0, 128, %s15, [#allocation3]
    $region5: #{tpu_custom_call.1} parent=1 // pred_fallthru
      _
    // Predicated region
    $region6: #{tpu_custom_call.1} parent=1 // pred_check
      _
    $region7: #{tpu_custom_call.1} parent=1 // pred_check_branch
      %19 = sbr.rel (0) target = $region9
    $region8: #{tpu_custom_call.1} parent=1 // pred_region
      %20 = dma.done [#allocation3], 128
    $region9: #{tpu_custom_call.1} parent=1 // pred_fallthru
      _
    %v21 = vld [vmem:[#allocation2] sm:$0xff]
    %v22 = vadd.f32 %v21, 1.0
    %23 = vst [vmem:[#allocation5] sm:$0xff] %v22
    // Predicated region
    $region10: #{tpu_custom_call.1} parent=1 // pred_check
      _
    $region11: #{tpu_custom_call.1} parent=1 // pred_check_branch
      %25 = sbr.rel (0) target = $region13
    $region12: #{tpu_custom_call.1} parent=1 // pred_region
      %s27 = ssub.s32 128, 128
      %28 = vsyncadd [#allocation4], %s27
      %s30 = sshll.u32 [#allocation5], 4
      %s31 = int_to_ptr.vmem [resolvable:$true] %s30
      %33 = dma.vmem_to_hbm [thread:$0]  %s31, 128, %s1, [#allocation4]
    $region13: #{tpu_custom_call.1} parent=1 // pred_fallthru
      _
    // Predicated region
    $region14: #{tpu_custom_call.1} parent=1 // pred_check
      _
    $region15: #{tpu_custom_call.1} parent=1 // pred_check_branch
      %35 = sbr.rel (0) target = $region17
    $region16: #{tpu_custom_call.1} parent=1 // pred_region
      %36 = dma.done [#allocation4], 128
    $region17: #{tpu_custom_call.1} parent=1 // pred_fallthru
      _
    %37 = vsyncpa [#allocation3], 1
    %38 = vsyncpa [#allocation4], 1

// kernel: _encoder_forward_jit.1
$region0: #{_encoder_forward_jit.1}
  #allocation0 [shape = 'u32[]', space=smem, size = 0x4, offset = 0x4, fixed_abs, tag = 'smem constant byte address 0x4 - core index']
  #allocation1 [shape = 'u32[144,128]{1,0:T(1,128)}', space=vmem, size = 0x12000, scoped, tag = 'internal scratch']
  #allocation2 [shape = 'f32[8,8,128]{2,1,0:T(8,128)}', space=vmem, size = 0x8000, scoped, tag = 'scratch operand']
  #allocation3 [shape = 'f32[8,8,512]{2,1,0:T(8,128)}', space=vmem, size = 0x20000, scoped, tag = 'scratch operand']
  %s0 = inlined_call_operand.vmem [shape: f32[8,8,128], index: 0, kind: input, shape index: {}]
  %s1 = inlined_call_operand.vmem [shape: bf16[128,512], index: 1, kind: input, shape index: {}]
  %s2 = inlined_call_operand.vmem [shape: bf16[128,512], index: 2, kind: input, shape index: {}]
  %s3 = inlined_call_operand.vmem [shape: bf16[128,512], index: 3, kind: input, shape index: {}]
  %s4 = inlined_call_operand.hbm [shape: bf16[128,512], index: 4, kind: input, shape index: {}]
  %s5 = inlined_call_operand.vmem [shape: f32[1,512], index: 5, kind: input, shape index: {}]
  %s6 = inlined_call_operand.vmem [shape: f32[1,512], index: 6, kind: input, shape index: {}]
  %s7 = inlined_call_operand.vmem [shape: f32[2,8,128], index: 7, kind: output, shape index: {0}]
  %s8 = inlined_call_operand.vmem [shape: f32[2,8,128], index: 8, kind: output, shape index: {1}]
  %9 = xla_tuple %s7, %s8
  %s10 = sld [smem:[#allocation0]]
  $region54: #{_encoder_forward_jit.1} parent=0
    _
  %s12 = ssub.s32 1, %s10
  %s13 = scalar_select 0, %s12, %s10
  $region1: #{_encoder_forward_jit.1} parent=0
    #allocation4 [shape = 'u8[131072]{0}', space=vmem, size = 0x20000, scoped, tag = 'input window, operand 4, single buffered']
    #allocation5 [shape = 's32[1]{0}', space=sflag, size = 0x4, scoped, tag = 'scoped memory for _encoder_forward_jit.1']
    %14 = vsyncpa [#allocation5], 0
    // Predicated region
    $region2: #{_encoder_forward_jit.1} parent=1 // pred_check
      _
    $region3: #{_encoder_forward_jit.1} parent=1 // pred_check_branch
      %16 = sbr.rel (0) target = $region5
    $region4: #{_encoder_forward_jit.1} parent=1 // pred_region
      _
    $region5: #{_encoder_forward_jit.1} parent=1 // pred_fallthru
      _
    // Predicated region
    $region6: #{_encoder_forward_jit.1} parent=1 // pred_check
      _
    $region7: #{_encoder_forward_jit.1} parent=1 // pred_check_branch
      %18 = sbr.rel (0) target = $region9
    $region8: #{_encoder_forward_jit.1} parent=1 // pred_region
      _
    $region9: #{_encoder_forward_jit.1} parent=1 // pred_fallthru
      _
    // Predicated region
    $region10: #{_encoder_forward_jit.1} parent=1 // pred_check
      _
    $region11: #{_encoder_forward_jit.1} parent=1 // pred_check_branch
      %20 = sbr.rel (0) target = $region13
    $region12: #{_encoder_forward_jit.1} parent=1 // pred_region
      _
    $region13: #{_encoder_forward_jit.1} parent=1 // pred_fallthru
      _
    // Predicated region
    $region14: #{_encoder_forward_jit.1} parent=1 // pred_check
      _
    $region15: #{_encoder_forward_jit.1} parent=1 // pred_check_branch
      %22 = sbr.rel (0) target = $region17
    $region16: #{_encoder_forward_jit.1} parent=1 // pred_region
      _
    $region17: #{_encoder_forward_jit.1} parent=1 // pred_fallthru
      _
    // Predicated region
    $region18: #{_encoder_forward_jit.1} parent=1 // pred_check
      _
    $region19: #{_encoder_forward_jit.1} parent=1 // pred_check_branch
      %24 = sbr.rel (0) target = $region21
    $region20: #{_encoder_forward_jit.1} parent=1 // pred_region
      %s26 = ssub.s32 4096, 4096
      %27 = vsyncadd [#allocation5], %s26
      %s28 = sshll.u32 [#allocation4], 4
      %s29 = int_to_ptr.vmem [resolvable:$true] %s28
      %34 = dma.hbm_to_vmem [thread:$0]  %s4, 4096, %s29, [#allocation5], 256, 256, 16
    $region21: #{_encoder_forward_jit.1} parent=1 // pred_fallthru
      _
    // Predicated region
    $region22: #{_encoder_forward_jit.1} parent=1 // pred_check
      _
    $region23: #{_encoder_forward_jit.1} parent=1 // pred_check_branch
      %36 = sbr.rel (0) target = $region25
    $region24: #{_encoder_forward_jit.1} parent=1 // pred_region
      _
    $region25: #{_encoder_forward_jit.1} parent=1 // pred_fallthru
      _
    // Predicated region
    $region26: #{_encoder_forward_jit.1} parent=1 // pred_check
      _
    $region27: #{_encoder_forward_jit.1} parent=1 // pred_check_branch
      %38 = sbr.rel (0) target = $region29
    $region28: #{_encoder_forward_jit.1} parent=1 // pred_region
      _
    $region29: #{_encoder_forward_jit.1} parent=1 // pred_fallthru
      _
    // Predicated region
    $region30: #{_encoder_forward_jit.1} parent=1 // pred_check
      _
    $region31: #{_encoder_forward_jit.1} parent=1 // pred_check_branch
      %40 = sbr.rel (0) target = $region33
    $region32: #{_encoder_forward_jit.1} parent=1 // pred_region
      %41 = dma.done [#allocation5], 4096
    $region33: #{_encoder_forward_jit.1} parent=1 // pred_fallthru
      _
    %s43 = smul.u32 0, 8
    %p44 = scmp.eq.s32.totalorder 0, 0
    // Predicated region
    $region34: #{_encoder_forward_jit.1} parent=1 // pred_check
      %p45 = pneg %p44
    $region35: #{_encoder_forward_jit.1} parent=1 // pred_check_branch
      %47 = sbr.rel (%p45) target = $region37
    $region36: #{_encoder_forward_jit.1} parent=1 // pred_region
      %48 = vst [vmem:[%s7] sm:$0xff] 0.0
      %49 = vst [vmem:[%s7 + $0x8] sm:$0xff] 0.0
      %50 = vst [vmem:[%s8] sm:$0xff] 0.0
      %51 = vst [vmem:[%s8 + $0x8] sm:$0xff] 0.0
    $region37: #{_encoder_forward_jit.1} parent=1 // pred_fallthru
      _
    %v52 = vld [vmem:[%s0] sm:$0xff]
    %v53 = vld [vmem:[%s0 + $0x8] sm:$0xff]
    %v54 = vld [vmem:[%s0 + $0x10] sm:$0xff]
    %v55 = vld [vmem:[%s0 + $0x18] sm:$0xff]
    %v56 = vld [vmem:[%s0 + $0x20] sm:$0xff]
    %v57 = vld [vmem:[%s0 + $0x28] sm:$0xff]
    %v58 = vld [vmem:[%s0 + $0x30] sm:$0xff]
    %v59 = vld [vmem:[%s0 + $0x38] sm:$0xff]
    %v60 = vpack.c.bf16 %v53, %v52
    %v61 = vpack.c.bf16 %v55, %v54
    %v62 = vpack.c.bf16 %v57, %v56
    %v63 = vpack.c.bf16 %v59, %v58
    %v64 = vld [vmem:[%s1] sm:$0xff]
    %v65 = vld [vmem:[%s1 + $0x8] sm:$0xff]
    %v66 = vld [vmem:[%s1 + $0x10] sm:$0xff]
    %v67 = vld [vmem:[%s1 + $0x18] sm:$0xff]
    %v68 = vld [vmem:[%s1 + $0x20] sm:$0xff]
    %v69 = vld [vmem:[%s1 + $0x28] sm:$0xff]
    %v70 = vld [vmem:[%s1 + $0x30] sm:$0xff]
    %v71 = vld [vmem:[%s1 + $0x38] sm:$0xff]
    %v72 = vld [vmem:[%s1 + $0x40] sm:$0xff]
    %v73 = vld [vmem:[%s1 + $0x48] sm:$0xff]
    %v74 = vld [vmem:[%s1 + $0x50] sm:$0xff]
    %v75 = vld [vmem:[%s1 + $0x58] sm:$0xff]
    %v76 = vld [vmem:[%s1 + $0x60] sm:$0xff]
    %v77 = vld [vmem:[%s1 + $0x68] sm:$0xff]
    %v78 = vld [vmem:[%s1 + $0x70] sm:$0xff]
    %v79 = vld [vmem:[%s1 + $0x78] sm:$0xff]
    %v80 = vld [vmem:[%s1 + $0x80] sm:$0xff]
    %v81 = vld [vmem:[%s1 + $0x88] sm:$0xff]
    %v82 = vld [vmem:[%s1 + $0x90] sm:$0xff]
    %v83 = vld [vmem:[%s1 + $0x98] sm:$0xff]
    %v84 = vld [vmem:[%s1 + $0xa0] sm:$0xff]
    %v85 = vld [vmem:[%s1 + $0xa8] sm:$0xff]
    %v86 = vld [vmem:[%s1 + $0xb0] sm:$0xff]
    %v87 = vld [vmem:[%s1 + $0xb8] sm:$0xff]
    %v88 = vld [vmem:[%s1 + $0xc0] sm:$0xff]
    %v89 = vld [vmem:[%s1 + $0xc8] sm:$0xff]
    %v90 = vld [vmem:[%s1 + $0xd0] sm:$0xff]
    %v91 = vld [vmem:[%s1 + $0xd8] sm:$0xff]
    %v92 = vld [vmem:[%s1 + $0xe0] sm:$0xff]
    %v93 = vld [vmem:[%s1 + $0xe8] sm:$0xff]
    %v94 = vld [vmem:[%s1 + $0xf0] sm:$0xff]
    %v95 = vld [vmem:[%s1 + $0xf8] sm:$0xff]
    %v96 = vld [vmem:[%s5] sm:$0xf]
    %v98 = vlaneseq
    %v99 = vshrl.u32 %v98, 7
    %v100 = vsub.s32 0, %v99
    %v101 = vrot.slane %v96, %v100
    %v102 = vlaneseq
    %v103 = vshrl.u32 %v102, 7
    %v104 = vsub.s32 1, %v103
    %v105 = vrot.slane %v96, %v104
    %v106 = vlaneseq
    %v107 = vshrl.u32 %v106, 7
    %v108 = vsub.s32 2, %v107
    %v109 = vrot.slane %v96, %v108
    %v110 = vlaneseq
    %v111 = vshrl.u32 %v110, 7
    %v112 = vsub.s32 3, %v111
    %v113 = vrot.slane %v96, %v112
    %v150 = vunpack.c.l.b16 %v64
    %v151 = vunpack.c.h.b16 %v64
    %v152 = vunpack.c.l.b16 %v65
    %v153 = vunpack.c.h.b16 %v65
    %v154 = vunpack.c.l.b16 %v66
    %v155 = vunpack.c.h.b16 %v66
    %v156 = vunpack.c.l.b16 %v67
    %v157 = vunpack.c.h.b16 %v67
    %v158 = vunpack.c.l.b16 %v68
    %v159 = vunpack.c.h.b16 %v68
    %v160 = vunpack.c.l.b16 %v69
    %v161 = vunpack.c.h.b16 %v69
    %v162 = vunpack.c.l.b16 %v70
    %v163 = vunpack.c.h.b16 %v70
    %v164 = vunpack.c.l.b16 %v71
    %v165 = vunpack.c.h.b16 %v71
    %v166 = vunpack.c.l.b16 %v72
    %v167 = vunpack.c.h.b16 %v72
    %v168 = vunpack.c.l.b16 %v73
    %v169 = vunpack.c.h.b16 %v73
    %v170 = vunpack.c.l.b16 %v74
    %v171 = vunpack.c.h.b16 %v74
    %v172 = vunpack.c.l.b16 %v75
    %v173 = vunpack.c.h.b16 %v75
    %v174 = vunpack.c.l.b16 %v76
    %v175 = vunpack.c.h.b16 %v76
    %v176 = vunpack.c.l.b16 %v77
    %v177 = vunpack.c.h.b16 %v77
    %v178 = vunpack.c.l.b16 %v78
    %v179 = vunpack.c.h.b16 %v78
    %v180 = vunpack.c.l.b16 %v79
    %v181 = vunpack.c.h.b16 %v79
    %v182 = vunpack.c.l.b16 %v80
    %v183 = vunpack.c.h.b16 %v80
    %v184 = vunpack.c.l.b16 %v81
    %v185 = vunpack.c.h.b16 %v81
    %v186 = vunpack.c.l.b16 %v82
    %v187 = vunpack.c.h.b16 %v82
    %v188 = vunpack.c.l.b16 %v83
    %v189 = vunpack.c.h.b16 %v83
    %v190 = vunpack.c.l.b16 %v84
    %v191 = vunpack.c.h.b16 %v84
    %v192 = vunpack.c.l.b16 %v85
    %v193 = vunpack.c.h.b16 %v85
    %v194 = vunpack.c.l.b16 %v86
    %v195 = vunpack.c.h.b16 %v86
    %v196 = vunpack.c.l.b16 %v87
    %v197 = vunpack.c.h.b16 %v87
    %v198 = vunpack.c.l.b16 %v88
    %v199 = vunpack.c.h.b16 %v88
    %v200 = vunpack.c.l.b16 %v89
    %v201 = vunpack.c.h.b16 %v89
    %v202 = vunpack.c.l.b16 %v90
    %v203 = vunpack.c.h.b16 %v90
    %v204 = vunpack.c.l.b16 %v91
    %v205 = vunpack.c.h.b16 %v91
    %v206 = vunpack.c.l.b16 %v92
    %v207 = vunpack.c.h.b16 %v92
    %v208 = vunpack.c.l.b16 %v93
    %v209 = vunpack.c.h.b16 %v93
    %v210 = vunpack.c.l.b16 %v94
    %v211 = vunpack.c.h.b16 %v94
    %v212 = vunpack.c.l.b16 %v95
    %v213 = vunpack.c.h.b16 %v95
    %v214 = vpack.c.b16 %v154, %v150
    %v215 = vpack.c.b16 %v155, %v151
    %v216 = vpack.c.b16 %v156, %v152
    %v217 = vpack.c.b16 %v157, %v153
    %v218 = vpack.c.b16 %v162, %v158
    %v219 = vpack.c.b16 %v163, %v159
    %v220 = vpack.c.b16 %v164, %v160
    %v221 = vpack.c.b16 %v165, %v161
    %v222 = vpack.c.b16 %v170, %v166
    %v223 = vpack.c.b16 %v171, %v167
    %v224 = vpack.c.b16 %v172, %v168
    %v225 = vpack.c.b16 %v173, %v169
    %v226 = vpack.c.b16 %v178, %v174
    %v227 = vpack.c.b16 %v179, %v175
    %v228 = vpack.c.b16 %v180, %v176
    %v229 = vpack.c.b16 %v181, %v177
    %v230 = vpack.c.b16 %v186, %v182
    %v231 = vpack.c.b16 %v187, %v183
    %v232 = vpack.c.b16 %v188, %v184
    %v233 = vpack.c.b16 %v189, %v185
    %v234 = vpack.c.b16 %v194, %v190
    %v235 = vpack.c.b16 %v195, %v191
    %v236 = vpack.c.b16 %v196, %v192
    %v237 = vpack.c.b16 %v197, %v193
    %v238 = vpack.c.b16 %v202, %v198
    %v239 = vpack.c.b16 %v203, %v199
    %v240 = vpack.c.b16 %v204, %v200
    %v241 = vpack.c.b16 %v205, %v201
    %v242 = vpack.c.b16 %v210, %v206
    %v243 = vpack.c.b16 %v211, %v207
    %v244 = vpack.c.b16 %v212, %v208
    %v245 = vpack.c.b16 %v213, %v209
    %278 = vmatprep.subr.bf16.mxu0 %v215
    %279 = vmatpush1.bf16.msra.mxu0 %v214
    %280 = vmatprep.subr.bf16.mxu0 %v219
    %281 = vmatpush1.bf16.msra.mxu0 %v218
    %282 = vmatprep.subr.bf16.mxu0 %v223
    %283 = vmatpush1.bf16.msra.mxu0 %v222
    %284 = vmatprep.subr.bf16.mxu0 %v227
    %285 = vmatpush1.bf16.msra.mxu0 %v226
    %286 = vmatprep.subr.bf16.mxu0 %v231
    %287 = vmatpush1.bf16.msra.mxu0 %v230
    %288 = vmatprep.subr.bf16.mxu0 %v235
    %289 = vmatpush1.bf16.msra.mxu0 %v234
    %290 = vmatprep.subr.bf16.mxu0 %v239
    %291 = vmatpush1.bf16.msra.mxu0 %v238
    %292 = vmatprep.subr.bf16.mxu0 %v243
    %293 = vmatpush1.bf16.msra.mxu0 %v242
    %294 = vmatprep.subr.bf16.mxu0 0
    %295 = vmatpush1.bf16.msra.mxu0 0
    %296 = vmatprep.subr.bf16.mxu0 0
    %297 = vmatpush1.bf16.msra.mxu0 0
    %298 = vmatprep.subr.bf16.mxu0 0
    %299 = vmatpush1.bf16.msra.mxu0 0
    %300 = vmatprep.subr.bf16.mxu0 0
    %301 = vmatpush1.bf16.msra.mxu0 0
    %302 = vmatprep.subr.bf16.mxu0 0
    %303 = vmatpush1.bf16.msra.mxu0 0
    %304 = vmatprep.subr.bf16.mxu0 0
    %305 = vmatpush1.bf16.msra.mxu0 0
    %306 = vmatprep.subr.bf16.mxu0 0
    %307 = vmatpush1.bf16.msra.mxu0 0
    %308 = vmatprep.subr.bf16.mxu0 0
    %309 = vmatpush1.bf16.msra.mxu0 0
    %310 = vmatprep.mubr.bf16.mxu0 0
    %311 = vmatmul.mubr.bf16.gmra.mrb[0].mxu0 %v60
    %v312 = vpop.f32.mrb[0].mxu0
    %v313 = vadd.f32 %v101, %v312
    %v314 = vpop.f32.mrb[0].mxu0
    %v315 = vadd.f32 %v105, %v314
    %v316 = vpop.f32.mrb[0].mxu0
    %v317 = vadd.f32 %v101, %v316
    %v318 = vpop.f32.mrb[0].mxu0
    %v319 = vadd.f32 %v105, %v318
    %320 = vmatprep.mubr.bf16.mxu0 0
    %321 = vmatmul.mubr.bf16.gmra.mrb[0].mxu0 %v61
    %v322 = vpop.f32.mrb[0].mxu0
    %v323 = vadd.f32 %v101, %v322
    %v324 = vpop.f32.mrb[0].mxu0
    %v325 = vadd.f32 %v105, %v324
    %v326 = vpop.f32.mrb[0].mxu0
    %v327 = vadd.f32 %v101, %v326
    %v328 = vpop.f32.mrb[0].mxu0
    %v329 = vadd.f32 %v105, %v328
    %330 = vmatprep.mubr.bf16.mxu0 0
    %331 = vmatmul.mubr.bf16.gmra.mrb[0].mxu0 %v62
    %v332 = vpop.f32.mrb[0].mxu0
    %v333 = vadd.f32 %v101, %v332
    %v334 = vpop.f32.mrb[0].mxu0
    %v335 = vadd.f32 %v105, %v334
    %v336 = vpop.f32.mrb[0].mxu0
    %v337 = vadd.f32 %v101, %v336
    %v338 = vpop.f32.mrb[0].mxu0
    %v339 = vadd.f32 %v105, %v338
    %340 = vmatprep.mubr.bf16.mxu0 0
    %341 = vmatmul.mubr.bf16.gmra.mrb[0].mxu0 %v63
    %v342 = vpop.f32.mrb[0].mxu0
    %v343 = vadd.f32 %v101, %v342
    %v344 = vpop.f32.mrb[0].mxu0
    %v345 = vadd.f32 %v105, %v344
    %v346 = vpop.f32.mrb[0].mxu0
    %v347 = vadd.f32 %v101, %v346
    %v348 = vpop.f32.mrb[0].mxu0
    %v349 = vadd.f32 %v105, %v348
    %350 = vdwg.mxu0
    %351 = vmatprep.subr.bf16.mxu0 %v217
    %352 = vmatpush1.bf16.msra.mxu0 %v216
    %353 = vmatprep.subr.bf16.mxu0 %v221
    %354 = vmatpush1.bf16.msra.mxu0 %v220
    %355 = vmatprep.subr.bf16.mxu0 %v225
    %356 = vmatpush1.bf16.msra.mxu0 %v224
    %357 = vmatprep.subr.bf16.mxu0 %v229
    %358 = vmatpush1.bf16.msra.mxu0 %v228
    %359 = vmatprep.subr.bf16.mxu0 %v233
    %360 = vmatpush1.bf16.msra.mxu0 %v232
    %361 = vmatprep.subr.bf16.mxu0 %v237
    %362 = vmatpush1.bf16.msra.mxu0 %v236
    %363 = vmatprep.subr.bf16.mxu0 %v241
    %364 = vmatpush1.bf16.msra.mxu0 %v240
    %365 = vmatprep.subr.bf16.mxu0 %v245
    %366 = vmatpush1.bf16.msra.mxu0 %v244
    %367 = vmatprep.subr.bf16.mxu0 0
    %368 = vmatpush1.bf16.msra.mxu0 0
    %369 = vmatprep.subr.bf16.mxu0 0
    %370 = vmatpush1.bf16.msra.mxu0 0
    %371 = vmatprep.subr.bf16.mxu0 0
    %372 = vmatpush1.bf16.msra.mxu0 0
    %373 = vmatprep.subr.bf16.mxu0 0
    %374 = vmatpush1.bf16.msra.mxu0 0
    %375 = vmatprep.subr.bf16.mxu0 0
    %376 = vmatpush1.bf16.msra.mxu0 0
    %377 = vmatprep.subr.bf16.mxu0 0
    %378 = vmatpush1.bf16.msra.mxu0 0
    %379 = vmatprep.subr.bf16.mxu0 0
    %380 = vmatpush1.bf16.msra.mxu0 0
    %381 = vmatprep.subr.bf16.mxu0 0
    %382 = vmatpush1.bf16.msra.mxu0 0
    %383 = vmatprep.mubr.bf16.mxu0 0
    %384 = vmatmul.mubr.bf16.gmra.mrb[0].mxu0 %v60
    %v385 = vpop.f32.mrb[0].mxu0
    %v386 = vadd.f32 %v109, %v385
    %v387 = vpop.f32.mrb[0].mxu0
    %v388 = vadd.f32 %v113, %v387
    %v389 = vpop.f32.mrb[0].mxu0
    %v390 = vadd.f32 %v109, %v389
    %v391 = vpop.f32.mrb[0].mxu0
    %v392 = vadd.f32 %v113, %v391
    %393 = vmatprep.mubr.bf16.mxu0 0
    %394 = vmatmul.mubr.bf16.gmra.mrb[0].mxu0 %v61
    %v395 = vpop.f32.mrb[0].mxu0
    %v396 = vadd.f32 %v109, %v395
    %v397 = vpop.f32.mrb[0].mxu0
    %v398 = vadd.f32 %v113, %v397
    %v399 = vpop.f32.mrb[0].mxu0
    %v400 = vadd.f32 %v109, %v399
    %v401 = vpop.f32.mrb[0].mxu0
    %v402 = vadd.f32 %v113, %v401
    %403 = vmatprep.mubr.bf16.mxu0 0
    %404 = vmatmul.mubr.bf16.gmra.mrb[0].mxu0 %v62
    %v405 = vpop.f32.mrb[0].mxu0
    %v406 = vadd.f32 %v109, %v405
    %v407 = vpop.f32.mrb[0].mxu0
    %v408 = vadd.f32 %v113, %v407
    %v409 = vpop.f32.mrb[0].mxu0
    %v410 = vadd.f32 %v109, %v409
    %v411 = vpop.f32.mrb[0].mxu0
    %v412 = vadd.f32 %v113, %v411
    %413 = vmatprep.mubr.bf16.mxu0 0
    %414 = vmatmul.mubr.bf16.gmra.mrb[0].mxu0 %v63
    %v415 = vpop.f32.mrb[0].mxu0
    %v416 = vadd.f32 %v109, %v415
    %v417 = vpop.f32.mrb[0].mxu0
    %v418 = vadd.f32 %v113, %v417
    %v419 = vpop.f32.mrb[0].mxu0
    %v420 = vadd.f32 %v109, %v419
    %v421 = vpop.f32.mrb[0].mxu0
    %v422 = vadd.f32 %v113, %v421
    %423 = vdwg.mxu0
    %424 = vst [vmem:[#allocation3] sm:$0xff] %v313
    %425 = vst [vmem:[#allocation3 + $0x8] sm:$0xff] %v315
    %426 = vst [vmem:[#allocation3 + $0x10] sm:$0xff] %v386
    %427 = vst [vmem:[#allocation3 + $0x18] sm:$0xff] %v388
    %428 = vst [vmem:[#allocation3 + $0x20] sm:$0xff] %v317
    %429 = vst [vmem:[#allocation3 + $0x28] sm:$0xff] %v319
    %430 = vst [vmem:[#allocation3 + $0x30] sm:$0xff] %v390
    %431 = vst [vmem:[#allocation3 + $0x38] sm:$0xff] %v392
    %432 = vst [vmem:[#allocation3 + $0x40] sm:$0xff] %v323
    %433 = vst [vmem:[#allocation3 + $0x48] sm:$0xff] %v325
    %434 = vst [vmem:[#allocation3 + $0x50] sm:$0xff] %v396
    %435 = vst [vmem:[#allocation3 + $0x58] sm:$0xff] %v398
    %436 = vst [vmem:[#allocation3 + $0x60] sm:$0xff] %v327
    %437 = vst [vmem:[#allocation3 + $0x68] sm:$0xff] %v329
    %438 = vst [vmem:[#allocation3 + $0x70] sm:$0xff] %v400
    %439 = vst [vmem:[#allocation3 + $0x78] sm:$0xff] %v402
    %440 = vst [vmem:[#allocation3 + $0x80] sm:$0xff] %v333
    %441 = vst [vmem:[#allocation3 + $0x88] sm:$0xff] %v335
    %442 = vst [vmem:[#allocation3 + $0x90] sm:$0xff] %v406
    %443 = vst [vmem:[#allocation3 + $0x98] sm:$0xff] %v408
    %444 = vst [vmem:[#allocation3 + $0xa0] sm:$0xff] %v337
    %445 = vst [vmem:[#allocation3 + $0xa8] sm:$0xff] %v339
    %446 = vst [vmem:[#allocation3 + $0xb0] sm:$0xff] %v410
    %447 = vst [vmem:[#allocation3 + $0xb8] sm:$0xff] %v412
    %448 = vst [vmem:[#allocation3 + $0xc0] sm:$0xff] %v343
    %449 = vst [vmem:[#allocation3 + $0xc8] sm:$0xff] %v345
    %450 = vst [vmem:[#allocation3 + $0xd0] sm:$0xff] %v416
    %451 = vst [vmem:[#allocation3 + $0xd8] sm:$0xff] %v418
    %452 = vst [vmem:[#allocation3 + $0xe0] sm:$0xff] %v347
    %453 = vst [vmem:[#allocation3 + $0xe8] sm:$0xff] %v349
    %454 = vst [vmem:[#allocation3 + $0xf0] sm:$0xff] %v420
    %455 = vst [vmem:[#allocation3 + $0xf8] sm:$0xff] %v422
    %v456 = vld [vmem:[%s7] sm:$0xff]
    %v457 = vld [vmem:[%s8] sm:$0xff]
    %v458 = vld [vmem:[#allocation3] sm:$0xff]
    %v459 = vld [vmem:[#allocation3 + $0x8] sm:$0xff]
    %v460 = vld [vmem:[#allocation3 + $0x10] sm:$0xff]
    %v461 = vld [vmem:[#allocation3 + $0x18] sm:$0xff]
    %v462 = vpack.c.bf16 %v456, %v456
    %v463 = vld [vmem:[%s3] sm:$0xff]
    %v464 = vld [vmem:[%s3 + $0x8] sm:$0xff]
    %v465 = vld [vmem:[%s3 + $0x10] sm:$0xff]
    %v466 = vld [vmem:[%s3 + $0x18] sm:$0xff]
    %v467 = vld [vmem:[%s3 + $0x20] sm:$0xff]
    %v468 = vld [vmem:[%s3 + $0x28] sm:$0xff]
    %v469 = vld [vmem:[%s3 + $0x30] sm:$0xff]
    %v470 = vld [vmem:[%s3 + $0x38] sm:$0xff]
    %v471 = vld [vmem:[%s3 + $0x40] sm:$0xff]
    %v472 = vld [vmem:[%s3 + $0x48] sm:$0xff]
    %v473 = vld [vmem:[%s3 + $0x50] sm:$0xff]
    %v474 = vld [vmem:[%s3 + $0x58] sm:$0xff]
    %v475 = vld [vmem:[%s3 + $0x60] sm:$0xff]
    %v476 = vld [vmem:[%s3 + $0x68] sm:$0xff]
    %v477 = vld [vmem:[%s3 + $0x70] sm:$0xff]
    %v478 = vld [vmem:[%s3 + $0x78] sm:$0xff]
    %v479 = vld [vmem:[%s3 + $0x80] sm:$0xff]
    %v480 = vld [vmem:[%s3 + $0x88] sm:$0xff]
    %v481 = vld [vmem:[%s3 + $0x90] sm:$0xff]
    %v482 = vld [vmem:[%s3 + $0x98] sm:$0xff]
    %v483 = vld [vmem:[%s3 + $0xa0] sm:$0xff]
    %v484 = vld [vmem:[%s3 + $0xa8] sm:$0xff]
    %v485 = vld [vmem:[%s3 + $0xb0] sm:$0xff]
    %v486 = vld [vmem:[%s3 + $0xb8] sm:$0xff]
    %v487 = vld [vmem:[%s3 + $0xc0] sm:$0xff]
    %v488 = vld [vmem:[%s3 + $0xc8] sm:$0xff]
    %v489 = vld [vmem:[%s3 + $0xd0] sm:$0xff]
    %v490 = vld [vmem:[%s3 + $0xd8] sm:$0xff]
    %v491 = vld [vmem:[%s3 + $0xe0] sm:$0xff]
    %v492 = vld [vmem:[%s3 + $0xe8] sm:$0xff]
    %v493 = vld [vmem:[%s3 + $0xf0] sm:$0xff]
    %v494 = vld [vmem:[%s3 + $0xf8] sm:$0xff]
    %v527 = vunpack.c.l.b16 %v463
    %v528 = vunpack.c.h.b16 %v463
    %v529 = vunpack.c.l.b16 %v464
    %v530 = vunpack.c.h.b16 %v464
    %v531 = vunpack.c.l.b16 %v465
    %v532 = vunpack.c.h.b16 %v465
    %v533 = vunpack.c.l.b16 %v466
    %v534 = vunpack.c.h.b16 %v466
    %v535 = vunpack.c.l.b16 %v467
    %v536 = vunpack.c.h.b16 %v467
    %v537 = vunpack.c.l.b16 %v468
    %v538 = vunpack.c.h.b16 %v468
    %v539 = vunpack.c.l.b16 %v469
    %v540 = vunpack.c.h.b16 %v469
    %v541 = vunpack.c.l.b16 %v470
    %v542 = vunpack.c.h.b16 %v470
    %v543 = vunpack.c.l.b16 %v471
    %v544 = vunpack.c.h.b16 %v471
    %v545 = vunpack.c.l.b16 %v472
    %v546 = vunpack.c.h.b16 %v472
    %v547 = vunpack.c.l.b16 %v473
    %v548 = vunpack.c.h.b16 %v473
    %v549 = vunpack.c.l.b16 %v474
    %v550 = vunpack.c.h.b16 %v474
    %v551 = vunpack.c.l.b16 %v475
    %v552 = vunpack.c.h.b16 %v475
    %v553 = vunpack.c.l.b16 %v476
    %v554 = vunpack.c.h.b16 %v476
    %v555 = vunpack.c.l.b16 %v477
    %v556 = vunpack.c.h.b16 %v477
    %v557 = vunpack.c.l.b16 %v478
    %v558 = vunpack.c.h.b16 %v478
    %v559 = vunpack.c.l.b16 %v479
    %v560 = vunpack.c.h.b16 %v479
    %v561 = vunpack.c.l.b16 %v480
    %v562 = vunpack.c.h.b16 %v480
    %v563 = vunpack.c.l.b16 %v481
    %v564 = vunpack.c.h.b16 %v481
    %v565 = vunpack.c.l.b16 %v482
    %v566 = vunpack.c.h.b16 %v482
    %v567 = vunpack.c.l.b16 %v483
    %v568 = vunpack.c.h.b16 %v483
    %v569 = vunpack.c.l.b16 %v484
    %v570 = vunpack.c.h.b16 %v484
    %v571 = vunpack.c.l.b16 %v485
    %v572 = vunpack.c.h.b16 %v485
    %v573 = vunpack.c.l.b16 %v486
    %v574 = vunpack.c.h.b16 %v486
    %v575 = vunpack.c.l.b16 %v487
    %v576 = vunpack.c.h.b16 %v487
    %v577 = vunpack.c.l.b16 %v488
    %v578 = vunpack.c.h.b16 %v488
    %v579 = vunpack.c.l.b16 %v489
    %v580 = vunpack.c.h.b16 %v489
    %v581 = vunpack.c.l.b16 %v490
    %v582 = vunpack.c.h.b16 %v490
    %v583 = vunpack.c.l.b16 %v491
    %v584 = vunpack.c.h.b16 %v491
    %v585 = vunpack.c.l.b16 %v492
    %v586 = vunpack.c.h.b16 %v492
    %v587 = vunpack.c.l.b16 %v493
    %v588 = vunpack.c.h.b16 %v493
    %v589 = vunpack.c.l.b16 %v494
    %v590 = vunpack.c.h.b16 %v494
    %v591 = vpack.c.b16 %v531, %v527
    %v592 = vpack.c.b16 %v532, %v528
    %v593 = vpack.c.b16 %v533, %v529
    %v594 = vpack.c.b16 %v534, %v530
    %v595 = vpack.c.b16 %v539, %v535
    %v596 = vpack.c.b16 %v540, %v536
    %v597 = vpack.c.b16 %v541, %v537
    %v598 = vpack.c.b16 %v542, %v538
    %v599 = vpack.c.b16 %v547, %v543
    %v600 = vpack.c.b16 %v548, %v544
    %v601 = vpack.c.b16 %v549, %v545
    %v602 = vpack.c.b16 %v550, %v546
    %v603 = vpack.c.b16 %v555, %v551
    %v604 = vpack.c.b16 %v556, %v552
    %v605 = vpack.c.b16 %v557, %v553
    %v606 = vpack.c.b16 %v558, %v554
    %v607 = vpack.c.b16 %v563, %v559
    %v608 = vpack.c.b16 %v564, %v560
    %v609 = vpack.c.b16 %v565, %v561
    %v610 = vpack.c.b16 %v566, %v562
    %v611 = vpack.c.b16 %v571, %v567
    %v612 = vpack.c.b16 %v572, %v568
    %v613 = vpack.c.b16 %v573, %v569
    %v614 = vpack.c.b16 %v574, %v570
    %v615 = vpack.c.b16 %v579, %v575
    %v616 = vpack.c.b16 %v580, %v576
    %v617 = vpack.c.b16 %v581, %v577
    %v618 = vpack.c.b16 %v582, %v578
    %v619 = vpack.c.b16 %v587, %v583
    %v620 = vpack.c.b16 %v588, %v584
    %v621 = vpack.c.b16 %v589, %v585
    %v622 = vpack.c.b16 %v590, %v586
    %655 = vmatprep.subr.bf16.mxu0 %v592
    %656 = vmatpush1.bf16.msra.mxu0 %v591
    %657 = vmatprep.subr.bf16.mxu0 %v596
    %658 = vmatpush1.bf16.msra.mxu0 %v595
    %659 = vmatprep.subr.bf16.mxu0 %v600
    %660 = vmatpush1.bf16.msra.mxu0 %v599
    %661 = vmatprep.subr.bf16.mxu0 %v604
    %662 = vmatpush1.bf16.msra.mxu0 %v603
    %663 = vmatprep.subr.bf16.mxu0 %v608
    %664 = vmatpush1.bf16.msra.mxu0 %v607
    %665 = vmatprep.subr.bf16.mxu0 %v612
    %666 = vmatpush1.bf16.msra.mxu0 %v611
    %667 = vmatprep.subr.bf16.mxu0 %v616
    %668 = vmatpush1.bf16.msra.mxu0 %v615
    %669 = vmatprep.subr.bf16.mxu0 %v620
    %670 = vmatpush1.bf16.msra.mxu0 %v619
    %671 = vmatprep.subr.bf16.mxu0 0
    %672 = vmatpush1.bf16.msra.mxu0 0
    %673 = vmatprep.subr.bf16.mxu0 0
    %674 = vmatpush1.bf16.msra.mxu0 0
    %675 = vmatprep.subr.bf16.mxu0 0
    %676 = vmatpush1.bf16.msra.mxu0 0
    %677 = vmatprep.subr.bf16.mxu0 0
    %678 = vmatpush1.bf16.msra.mxu0 0
    %679 = vmatprep.subr.bf16.mxu0 0
    %680 = vmatpush1.bf16.msra.mxu0 0
    %681 = vmatprep.subr.bf16.mxu0 0
    %682 = vmatpush1.bf16.msra.mxu0 0
    %683 = vmatprep.subr.bf16.mxu0 0
    %684 = vmatpush1.bf16.msra.mxu0 0
    %685 = vmatprep.subr.bf16.mxu0 0
    %686 = vmatpush1.bf16.msra.mxu0 0
    %687 = vmatprep.mubr.bf16.mxu0 0
    %688 = vmatmul.mubr.bf16.gmra.mrb[0].mxu0 %v462
    %v689 = vpop.f32.mrb[0].mxu0
    %v690 = vadd.f32 0.0, %v689
    %v691 = vpop.f32.mrb[0].mxu0
    %v692 = vadd.f32 0.0, %v691
    %v693 = vpop.f32.mrb[0].mxu0
    %v694 = vpop.f32.mrb[0].mxu0
    %695 = vdwg.mxu0
    %696 = vmatprep.subr.bf16.mxu0 %v594
    %697 = vmatpush1.bf16.msra.mxu0 %v593
    %698 = vmatprep.subr.bf16.mxu0 %v598
    %699 = vmatpush1.bf16.msra.mxu0 %v597
    %700 = vmatprep.subr.bf16.mxu0 %v602
    %701 = vmatpush1.bf16.msra.mxu0 %v601
    %702 = vmatprep.subr.bf16.mxu0 %v606
    %703 = vmatpush1.bf16.msra.mxu0 %v605
    %704 = vmatprep.subr.bf16.mxu0 %v610
    %705 = vmatpush1.bf16.msra.mxu0 %v609
    %706 = vmatprep.subr.bf16.mxu0 %v614
    %707 = vmatpush1.bf16.msra.mxu0 %v613
    %708 = vmatprep.subr.bf16.mxu0 %v618
    %709 = vmatpush1.bf16.msra.mxu0 %v617
    %710 = vmatprep.subr.bf16.mxu0 %v622
    %711 = vmatpush1.bf16.msra.mxu0 %v621
    %712 = vmatprep.subr.bf16.mxu0 0
    %713 = vmatpush1.bf16.msra.mxu0 0
    %714 = vmatprep.subr.bf16.mxu0 0
    %715 = vmatpush1.bf16.msra.mxu0 0
    %716 = vmatprep.subr.bf16.mxu0 0
    %717 = vmatpush1.bf16.msra.mxu0 0
    %718 = vmatprep.subr.bf16.mxu0 0
    %719 = vmatpush1.bf16.msra.mxu0 0
    %720 = vmatprep.subr.bf16.mxu0 0
    %721 = vmatpush1.bf16.msra.mxu0 0
    %722 = vmatprep.subr.bf16.mxu0 0
    %723 = vmatpush1.bf16.msra.mxu0 0
    %724 = vmatprep.subr.bf16.mxu0 0
    %725 = vmatpush1.bf16.msra.mxu0 0
    %726 = vmatprep.subr.bf16.mxu0 0
    %727 = vmatpush1.bf16.msra.mxu0 0
    %728 = vmatprep.mubr.bf16.mxu0 0
    %729 = vmatmul.mubr.bf16.gmra.mrb[0].mxu0 %v462
    %v730 = vpop.f32.mrb[0].mxu0
    %v731 = vadd.f32 0.0, %v730
    %v732 = vpop.f32.mrb[0].mxu0
    %v733 = vadd.f32 0.0, %v732
    %v734 = vpop.f32.mrb[0].mxu0
    %v735 = vpop.f32.mrb[0].mxu0
    %736 = vdwg.mxu0
    %v737 = vadd.f32 %v458, %v690
    %v738 = vadd.f32 %v459, %v692
    %v739 = vadd.f32 %v460, %v731
    %v740 = vadd.f32 %v461, %v733
    %v741 = vxor.u32 %v737, 2147483648
    %v742 = vmul.f32 %v741, 1.442695
    %v743 = vpow.pop %v742
    %v744 = vadd.f32 %v743, 1.0
    %v745 = vrcp.pop %v744
    %v746 = vmul.f32 1.0, %v745
    %v747 = vxor.u32 %v738, 2147483648
    %v748 = vmul.f32 %v747, 1.442695
    %v749 = vpow.pop %v748
    %v750 = vadd.f32 %v749, 1.0
    %v751 = vrcp.pop %v750
    %v752 = vmul.f32 1.0, %v751
    %v753 = vtanh.pop %v739
    %v754 = vxor.u32 %v740, 2147483648
    %v755 = vmul.f32 %v754, 1.442695
    %v756 = vpow.pop %v755
    %v757 = vadd.f32 %v756, 1.0
    %v758 = vrcp.pop %v757
    %v759 = vmul.f32 1.0, %v758
    %v760 = vmul.f32 %v752, %v457
    %v761 = vmul.f32 %v746, %v753
    %v762 = vadd.f32 %v760, %v761
    %v763 = vtanh.pop %v762
    %v764 = vmul.f32 %v759, %v763
    %p765 = scmp.lt.s32.totalorder %s43, 8
    %s766 = scalar_select %p765, 1, 0
    %v767 = vstv %s766
    %vm768 = vcmp.eq.s32.totalorder %v767, 1
    %v769 = vsel %vm768, %v764, %v456
    %v770 = vsel %vm768, %v762, %v457
    %771 = vst [vmem:[#allocation2] sm:$0xff] %v769
    %s772 = scalar_lea.vmem [#allocation3], 32
    %v773 = vld [vmem:[%s772] sm:$0xff]
    %v774 = vld [vmem:[%s772 + $0x8] sm:$0xff]
    %v775 = vld [vmem:[%s772 + $0x10] sm:$0xff]
    %v776 = vld [vmem:[%s772 + $0x18] sm:$0xff]
    %v777 = vpack.c.bf16 %v769, %v769
    %v778 = vld [vmem:[%s3] sm:$0xff]
    %v779 = vld [vmem:[%s3 + $0x8] sm:$0xff]
    %v780 = vld [vmem:[%s3 + $0x10] sm:$0xff]
    %v781 = vld [vmem:[%s3 + $0x18] sm:$0xff]
    %v782 = vld [vmem:[%s3 + $0x20] sm:$0xff]
    %v783 = vld [vmem:[%s3 + $0x28] sm:$0xff]
    %v784 = vld [vmem:[%s3 + $0x30] sm:$0xff]
    %v785 = vld [vmem:[%s3 + $0x38] sm:$0xff]
    %v786 = vld [vmem:[%s3 + $0x40] sm:$0xff]
    %v787 = vld [vmem:[%s3 + $0x48] sm:$0xff]
    %v788 = vld [vmem:[%s3 + $0x50] sm:$0xff]
    %v789 = vld [vmem:[%s3 + $0x58] sm:$0xff]
    %v790 = vld [vmem:[%s3 + $0x60] sm:$0xff]
    %v791 = vld [vmem:[%s3 + $0x68] sm:$0xff]
    %v792 = vld [vmem:[%s3 + $0x70] sm:$0xff]
    %v793 = vld [vmem:[%s3 + $0x78] sm:$0xff]
    %v794 = vld [vmem:[%s3 + $0x80] sm:$0xff]
    %v795 = vld [vmem:[%s3 + $0x88] sm:$0xff]
    %v796 = vld [vmem:[%s3 + $0x90] sm:$0xff]
    %v797 = vld [vmem:[%s3 + $0x98] sm:$0xff]
    %v798 = vld [vmem:[%s3 + $0xa0] sm:$0xff]
    %v799 = vld [vmem:[%s3 + $0xa8] sm:$0xff]
    %v800 = vld [vmem:[%s3 + $0xb0] sm:$0xff]
    %v801 = vld [vmem:[%s3 + $0xb8] sm:$0xff]
    %v802 = vld [vmem:[%s3 + $0xc0] sm:$0xff]
    %v803 = vld [vmem:[%s3 + $0xc8] sm:$0xff]
    %v804 = vld [vmem:[%s3 + $0xd0] sm:$0xff]
    %v805 = vld [vmem:[%s3 + $0xd8] sm:$0xff]
    %v806 = vld [vmem:[%s3 + $0xe0] sm:$0xff]
    %v807 = vld [vmem:[%s3 + $0xe8] sm:$0xff]
    %v808 = vld [vmem:[%s3 + $0xf0] sm:$0xff]
    %v809 = vld [vmem:[%s3 + $0xf8] sm:$0xff]
    %v842 = vunpack.c.l.b16 %v778
    %v843 = vunpack.c.h.b16 %v778
    %v844 = vunpack.c.l.b16 %v779
    %v845 = vunpack.c.h.b16 %v779
    %v846 = vunpack.c.l.b16 %v780
    %v847 = vunpack.c.h.b16 %v780
    %v848 = vunpack.c.l.b16 %v781
    %v849 = vunpack.c.h.b16 %v781
    %v850 = vunpack.c.l.b16 %v782
    %v851 = vunpack.c.h.b16 %v782
    %v852 = vunpack.c.l.b16 %v783
    %v853 = vunpack.c.h.b16 %v783
    %v854 = vunpack.c.l.b16 %v784
    %v855 = vunpack.c.h.b16 %v784
    %v856 = vunpack.c.l.b16 %v785
    %v857 = vunpack.c.h.b16 %v785
    %v858 = vunpack.c.l.b16 %v786
    %v859 = vunpack.c.h.b16 %v786
    %v860 = vunpack.c.l.b16 %v787
    %v861 = vunpack.c.h.b16 %v787
    %v862 = vunpack.c.l.b16 %v788
    %v863 = vunpack.c.h.b16 %v788
    %v864 = vunpack.c.l.b16 %v789
    %v865 = vunpack.c.h.b16 %v789
    %v866 = vunpack.c.l.b16 %v790
    %v867 = vunpack.c.h.b16 %v790
    %v868 = vunpack.c.l.b16 %v791
    %v869 = vunpack.c.h.b16 %v791
    %v870 = vunpack.c.l.b16 %v792
    %v871 = vunpack.c.h.b16 %v792
    %v872 = vunpack.c.l.b16 %v793
    %v873 = vunpack.c.h.b16 %v793
    %v874 = vunpack.c.l.b16 %v794
    %v875 = vunpack.c.h.b16 %v794
    %v876 = vunpack.c.l.b16 %v795
    %v877 = vunpack.c.h.b16 %v795
    %v878 = vunpack.c.l.b16 %v796
    %v879 = vunpack.c.h.b16 %v796
    %v880 = vunpack.c.l.b16 %v797
    %v881 = vunpack.c.h.b16 %v797
    %v882 = vunpack.c.l.b16 %v798
    %v883 = vunpack.c.h.b16 %v798
    %v884 = vunpack.c.l.b16 %v799
    %v885 = vunpack.c.h.b16 %v799
    %v886 = vunpack.c.l.b16 %v800
    %v887 = vunpack.c.h.b16 %v800
    %v888 = vunpack.c.l.b16 %v801
    %v889 = vunpack.c.h.b16 %v801
    %v890 = vunpack.c.l.b16 %v802
    %v891 = vunpack.c.h.b16 %v802
    %v892 = vunpack.c.l.b16 %v803
    %v893 = vunpack.c.h.b16 %v803
    %v894 = vunpack.c.l.b16 %v804
    %v895 = vunpack.c.h.b16 %v804
    %v896 = vunpack.c.l.b16 %v805
    %v897 = vunpack.c.h.b16 %v805
    %v898 = vunpack.c.l.b16 %v806
    %v899 = vunpack.c.h.b16 %v806
    %v900 = vunpack.c.l.b16 %v807
    %v901 = vunpack.c.h.b16 %v807
    %v902 = vunpack.c.l.b16 %v808
    %v903 = vunpack.c.h.b16 %v808
    %v904 = vunpack.c.l.b16 %v809
    %v905 = vunpack.c.h.b16 %v809
    %v906 = vpack.c.b16 %v846, %v842
    %v907 = vpack.c.b16 %v847, %v843
    %v908 = vpack.c.b16 %v848, %v844
    %v909 = vpack.c.b16 %v849, %v845
    %v910 = vpack.c.b16 %v854, %v850
    %v911 = vpack.c.b16 %v855, %v851
    %v912 = vpack.c.b16 %v856, %v852
    %v913 = vpack.c.b16 %v857, %v853
    %v914 = vpack.c.b16 %v862, %v858
    %v915 = vpack.c.b16 %v863, %v859
    %v916 = vpack.c.b16 %v864, %v860
    %v917 = vpack.c.b16 %v865, %v861
    %v918 = vpack.c.b16 %v870, %v866
    %v919 = vpack.c.b16 %v871, %v867
    %v920 = vpack.c.b16 %v872, %v868
    %v921 = vpack.c.b16 %v873, %v869
    %v922 = vpack.c.b16 %v878, %v874
    %v923 = vpack.c.b16 %v879, %v875
    %v924 = vpack.c.b16 %v880, %v876
    %v925 = vpack.c.b16 %v881, %v877
    %v926 = vpack.c.b16 %v886, %v882
    %v927 = vpack.c.b16 %v887, %v883
    %v928 = vpack.c.b16 %v888, %v884
    %v929 = vpack.c.b16 %v889, %v885
    %v930 = vpack.c.b16 %v894, %v890
    %v931 = vpack.c.b16 %v895, %v891
    %v932 = vpack.c.b16 %v896, %v892
    %v933 = vpack.c.b16 %v897, %v893
    %v934 = vpack.c.b16 %v902, %v898
    %v935 = vpack.c.b16 %v903, %v899
    %v936 = vpack.c.b16 %v904, %v900
    %v937 = vpack.c.b16 %v905, %v901
    %970 = vmatprep.subr.bf16.mxu0 %v907
    %971 = vmatpush1.bf16.msra.mxu0 %v906
    %972 = vmatprep.subr.bf16.mxu0 %v911
    %973 = vmatpush1.bf16.msra.mxu0 %v910
    %974 = vmatprep.subr.bf16.mxu0 %v915
    %975 = vmatpush1.bf16.msra.mxu0 %v914
    %976 = vmatprep.subr.bf16.mxu0 %v919
    %977 = vmatpush1.bf16.msra.mxu0 %v918
    %978 = vmatprep.subr.bf16.mxu0 %v923
    %979 = vmatpush1.bf16.msra.mxu0 %v922
    %980 = vmatprep.subr.bf16.mxu0 %v927
    %981 = vmatpush1.bf16.msra.mxu0 %v926
    %982 = vmatprep.subr.bf16.mxu0 %v931
    %983 = vmatpush1.bf16.msra.mxu0 %v930
    %984 = vmatprep.subr.bf16.mxu0 %v935
    %985 = vmatpush1.bf16.msra.mxu0 %v934
    %986 = vmatprep.subr.bf16.mxu0 0
    %987 = vmatpush1.bf16.msra.mxu0 0
    %988 = vmatprep.subr.bf16.mxu0 0
    %989 = vmatpush1.bf16.msra.mxu0 0
    %990 = vmatprep.subr.bf16.mxu0 0
    %991 = vmatpush1.bf16.msra.mxu0 0
    %992 = vmatprep.subr.bf16.mxu0 0
    %993 = vmatpush1.bf16.msra.mxu0 0
    %994 = vmatprep.subr.bf16.mxu0 0
    %995 = vmatpush1.bf16.msra.mxu0 0
    %996 = vmatprep.subr.bf16.mxu0 0
    %997 = vmatpush1.bf16.msra.mxu0 0
    %998 = vmatprep.subr.bf16.mxu0 0
    %999 = vmatpush1.bf16.msra.mxu0 0
    %1000 = vmatprep.subr.bf16.mxu0 0
    %1001 = vmatpush1.bf16.msra.mxu0 0
    %1002 = vmatprep.mubr.bf16.mxu0 0
    %1003 = vmatmul.mubr.bf16.gmra.mrb[0].mxu0 %v777
    %v1004 = vpop.f32.mrb[0].mxu0
    %v1005 = vadd.f32 0.0, %v1004
    %v1006 = vpop.f32.mrb[0].mxu0
    %v1007 = vadd.f32 0.0, %v1006
    %v1008 = vpop.f32.mrb[0].mxu0
    %v1009 = vpop.f32.mrb[0].mxu0
    %1010 = vdwg.mxu0
    %1011 = vmatprep.subr.bf16.mxu0 %v909
    %1012 = vmatpush1.bf16.msra.mxu0 %v908
    %1013 = vmatprep.subr.bf16.mxu0 %v913
    %1014 = vmatpush1.bf16.msra.mxu0 %v912
    %1015 = vmatprep.subr.bf16.mxu0 %v917
    %1016 = vmatpush1.bf16.msra.mxu0 %v916
    %1017 = vmatprep.subr.bf16.mxu0 %v921
    %1018 = vmatpush1.bf16.msra.mxu0 %v920
    %1019 = vmatprep.subr.bf16.mxu0 %v925
    %1020 = vmatpush1.bf16.msra.mxu0 %v924
    %1021 = vmatprep.subr.bf16.mxu0 %v929
    %1022 = vmatpush1.bf16.msra.mxu0 %v928
    %1023 = vmatprep.subr.bf16.mxu0 %v933
    %1024 = vmatpush1.bf16.msra.mxu0 %v932
    %1025 = vmatprep.subr.bf16.mxu0 %v937
    %1026 = vmatpush1.bf16.msra.mxu0 %v936
    %1027 = vmatprep.subr.bf16.mxu0 0
    %1028 = vmatpush1.bf16.msra.mxu0 0
    %1029 = vmatprep.subr.bf16.mxu0 0
    %1030 = vmatpush1.bf16.msra.mxu0 0
    %1031 = vmatprep.subr.bf16.mxu0 0
    %1032 = vmatpush1.bf16.msra.mxu0 0
    %1033 = vmatprep.subr.bf16.mxu0 0
    %1034 = vmatpush1.bf16.msra.mxu0 0
    %1035 = vmatprep.subr.bf16.mxu0 0
    %1036 = vmatpush1.bf16.msra.mxu0 0
    %1037 = vmatprep.subr.bf16.mxu0 0
    %1038 = vmatpush1.bf16.msra.mxu0 0
    %1039 = vmatprep.subr.bf16.mxu0 0
    %1040 = vmatpush1.bf16.msra.mxu0 0
    %1041 = vmatprep.subr.bf16.mxu0 0
    %1042 = vmatpush1.bf16.msra.mxu0 0
    %1043 = vmatprep.mubr.bf16.mxu0 0
    %1044 = vmatmul.mubr.bf16.gmra.mrb[0].mxu0 %v777
    %v1045 = vpop.f32.mrb[0].mxu0
    %v1046 = vadd.f32 0.0, %v1045
    %v1047 = vpop.f32.mrb[0].mxu0
    %v1048 = vadd.f32 0.0, %v1047
    %v1049 = vpop.f32.mrb[0].mxu0
    %v1050 = vpop.f32.mrb[0].mxu0
    %1051 = vdwg.mxu0
    %v1052 = vadd.f32 %v773, %v1005
    %v1053 = vadd.f32 %v774, %v1007
    %v1054 = vadd.f32 %v775, %v1046
    %v1055 = vadd.f32 %v776, %v1048
    %v1056 = vxor.u32 %v1052, 2147483648
    %v1057 = vmul.f32 %v1056, 1.442695
    %v1058 = vpow.pop %v1057
    %v1059 = vadd.f32 %v1058, 1.0
    %v1060 = vrcp.pop %v1059
    %v1061 = vmul.f32 1.0, %v1060
    %v1062 = vxor.u32 %v1053, 2147483648
    %v1063 = vmul.f32 %v1062, 1.442695
    %v1064 = vpow.pop %v1063
    %v1065 = vadd.f32 %v1064, 1.0
    %v1066 = vrcp.pop %v1065
    %v1067 = vmul.f32 1.0, %v1066
    %v1068 = vtanh.pop %v1054
    %v1069 = vxor.u32 %v1055, 2147483648
    %v1070 = vmul.f32 %v1069, 1.442695
    %v1071 = vpow.pop %v1070
    %v1072 = vadd.f32 %v1071, 1.0
    %v1073 = vrcp.pop %v1072
    %v1074 = vmul.f32 1.0, %v1073
    %v1075 = vmul.f32 %v1067, %v770
    %v1076 = vmul.f32 %v1061, %v1068
    %v1077 = vadd.f32 %v1075, %v1076
    %v1078 = vtanh.pop %v1077
    %v1079 = vmul.f32 %v1074, %v1078
    %s1080 = sadd.s32 %s43, 1
    %p1081 = scmp.lt.s32.totalorder %s1080, 8
    %s1082 = scalar_select %p1081, 1, 0
    %v1083 = vstv %s1082
    %vm1084 = vcmp.eq.s32.totalorder %v1083, 1
    %v1085 = vsel %vm1084, %v1079, %v769
    %v1086 = vsel %vm1084, %v1077, %v770
    %s1087 = scalar_lea.vmem [#allocation2], 8
    %1088 = vst [vmem:[%s1087] sm:$0xff] %v1085
    %s1089 = scalar_lea.vmem [#allocation3], 64
    %v1090 = vld [vmem:[%s1089] sm:$0xff]
    %v1091 = vld [vmem:[%s1089 + $0x8] sm:$0xff]
    %v1092 = vld [vmem:[%s1089 + $0x10] sm:$0xff]
    %v1093 = vld [vmem:[%s1089 + $0x18] sm:$0xff]
    %v1094 = vpack.c.bf16 %v1085, %v1085
    %v1095 = vld [vmem:[%s3] sm:$0xff]
    %v1096 = vld [vmem:[%s3 + $0x8] sm:$0xff]
    %v1097 = vld [vmem:[%s3 + $0x10] sm:$0xff]
    %v1098 = vld [vmem:[%s3 + $0x18] sm:$0xff]
    %v1099 = vld [vmem:[%s3 + $0x20] sm:$0xff]
    %v1100 = vld [vmem:[%s3 + $0x28] sm:$0xff]
    %v1101 = vld [vmem:[%s3 + $0x30] sm:$0xff]
    %v1102 = vld [vmem:[%s3 + $0x38] sm:$0xff]
    %v1103 = vld [vmem:[%s3 + $0x40] sm:$0xff]
    %v1104 = vld [vmem:[%s3 + $0x48] sm:$0xff]
    %v1105 = vld [vmem:[%s3 + $0x50] sm:$0xff]
    %v1106 = vld [vmem:[%s3 + $0x58] sm:$0xff]
    %v1107 = vld [vmem:[%s3 + $0x60] sm:$0xff]
    %v1108 = vld [vmem:[%s3 + $0x68] sm:$0xff]
    %v1109 = vld [vmem:[%s3 + $0x70] sm:$0xff]
    %v1110 = vld [vmem:[%s3 + $0x78] sm:$0xff]
    %v1111 = vld [vmem:[%s3 + $0x80] sm:$0xff]
    %v1112 = vld [vmem:[%s3 + $0x88] sm:$0xff]
    %v1113 = vld [vmem:[%s3 + $0x90] sm:$0xff]
    %v1114 = vld [vmem:[%s3 + $0x98] sm:$0xff]
    %v1115 = vld [vmem:[%s3 + $0xa0] sm:$0xff]
    %v1116 = vld [vmem:[%s3 + $0xa8] sm:$0xff]
    %v1117 = vld [vmem:[%s3 + $0xb0] sm:$0xff]
    %v1118 = vld [vmem:[%s3 + $0xb8] sm:$0xff]
    %v1119 = vld [vmem:[%s3 + $0xc0] sm:$0xff]
    %v1120 = vld [vmem:[%s3 + $0xc8] sm:$0xff]
    %v1121 = vld [vmem:[%s3 + $0xd0] sm:$0xff]
    %v1122 = vld [vmem:[%s3 + $0xd8] sm:$0xff]
    %v1123 = vld [vmem:[%s3 + $0xe0] sm:$0xff]
    %v1124 = vld [vmem:[%s3 + $0xe8] sm:$0xff]
    %v1125 = vld [vmem:[%s3 + $0xf0] sm:$0xff]
    %v1126 = vld [vmem:[%s3 + $0xf8] sm:$0xff]
    %v1159 = vunpack.c.l.b16 %v1095
    %v1160 = vunpack.c.h.b16 %v1095
    %v1161 = vunpack.c.l.b16 %v1096
    %v1162 = vunpack.c.h.b16 %v1096
    %v1163 = vunpack.c.l.b16 %v1097
    %v1164 = vunpack.c.h.b16 %v1097
    %v1165 = vunpack.c.l.b16 %v1098
    %v1166 = vunpack.c.h.b16 %v1098
    %v1167 = vunpack.c.l.b16 %v1099
    %v1168 = vunpack.c.h.b16 %v1099
    %v1169 = vunpack.c.l.b16 %v1100
    %v1170 = vunpack.c.h.b16 %v1100
    %v1171 = vunpack.c.l.b16 %v1101
    %v1172 = vunpack.c.h.b16 %v1101
    %v1173 = vunpack.c.l.b16 %v1102
    %v1174 = vunpack.c.h.b16 %v1102
    %v1175 = vunpack.c.l.b16 %v1103
    %v1176 = vunpack.c.h.b16 %v1103
    %v1177 = vunpack.c.l.b16 %v1104
    %v1178 = vunpack.c.h.b16 %v1104
    %v1179 = vunpack.c.l.b16 %v1105
    %v1180 = vunpack.c.h.b16 %v1105
    %v1181 = vunpack.c.l.b16 %v1106
    %v1182 = vunpack.c.h.b16 %v1106
    %v1183 = vunpack.c.l.b16 %v1107
    %v1184 = vunpack.c.h.b16 %v1107
    %v1185 = vunpack.c.l.b16 %v1108
    %v1186 = vunpack.c.h.b16 %v1108
    %v1187 = vunpack.c.l.b16 %v1109
    %v1188 = vunpack.c.h.b16 %v1109
    %v1189 = vunpack.c.l.b16 %v1110
    %v1190 = vunpack.c.h.b16 %v1110
    %v1191 = vunpack.c.l.b16 %v1111
    %v1192 = vunpack.c.h.b16 %v1111
    %v1193 = vunpack.c.l.b16 %v1112
    %v1194 = vunpack.c.h.b16 %v1112
    %v1195 = vunpack.c.l.b16 %v1113
    %v1196 = vunpack.c.h.b16 %v1113
    %v1197 = vunpack.c.l.b16 %v1114
    %v1198 = vunpack.c.h.b16 %v1114
    %v1199 = vunpack.c.l.b16 %v1115
    %v1200 = vunpack.c.h.b16 %v1115
    %v1201 = vunpack.c.l.b16 %v1116
    %v1202 = vunpack.c.h.b16 %v1116
    %v1203 = vunpack.c.l.b16 %v1117
    %v1204 = vunpack.c.h.b16 %v1117
    %v1205 = vunpack.c.l.b16 %v1118
    %v1206 = vunpack.c.h.b16 %v1118
    %v1207 = vunpack.c.l.b16 %v1119
    %v1208 = vunpack.c.h.b16 %v1119
    %v1209 = vunpack.c.l.b16 %v1120
    %v1210 = vunpack.c.h.b16 %v1120
    %v1211 = vunpack.c.l.b16 %v1121
    %v1212 = vunpack.c.h.b16 %v1121
    %v1213 = vunpack.c.l.b16 %v1122
    %v1214 = vunpack.c.h.b16 %v1122
    %v1215 = vunpack.c.l.b16 %v1123
    %v1216 = vunpack.c.h.b16 %v1123
    %v1217 = vunpack.c.l.b16 %v1124
    %v1218 = vunpack.c.h.b16 %v1124
    %v1219 = vunpack.c.l.b16 %v1125
    %v1220 = vunpack.c.h.b16 %v1125
    %v1221 = vunpack.c.l.b16 %v1126
    %v1222 = vunpack.c.h.b16 %v1126
    %v1223 = vpack.c.b16 %v1163, %v1159
    %v1224 = vpack.c.b16 %v1164, %v1160
    %v1225 = vpack.c.b16 %v1165, %v1161
    %v1226 = vpack.c.b16 %v1166, %v1162
    %v1227 = vpack.c.b16 %v1171, %v1167
    %v1228 = vpack.c.b16 %v1172, %v1168
    %v1229 = vpack.c.b16 %v1173, %v1169
    %v1230 = vpack.c.b16 %v1174, %v1170
    %v1231 = vpack.c.b16 %v1179, %v1175
    %v1232 = vpack.c.b16 %v1180, %v1176
    %v1233 = vpack.c.b16 %v1181, %v1177
    %v1234 = vpack.c.b16 %v1182, %v1178
    %v1235 = vpack.c.b16 %v1187, %v1183
    %v1236 = vpack.c.b16 %v1188, %v1184
    %v1237 = vpack.c.b16 %v1189, %v1185
    %v1238 = vpack.c.b16 %v1190, %v1186
    %v1239 = vpack.c.b16 %v1195, %v1191
    %v1240 = vpack.c.b16 %v1196, %v1192
    %v1241 = vpack.c.b16 %v1197, %v1193
    %v1242 = vpack.c.b16 %v1198, %v1194
    %v1243 = vpack.c.b16 %v1203, %v1199
    %v1244 = vpack.c.b16 %v1204, %v1200
    %v1245 = vpack.c.b16 %v1205, %v1201
    %v1246 = vpack.c.b16 %v1206, %v1202
    %v1247 = vpack.c.b16 %v1211, %v1207
    %v1248 = vpack.c.b16 %v1212, %v1208
    %v1249 = vpack.c.b16 %v1213, %v1209
    %v1250 = vpack.c.b16 %v1214, %v1210
    %v1251 = vpack.c.b16 %v1219, %v1215
    %v1252 = vpack.c.b16 %v1220, %v1216
    %v1253 = vpack.c.b16 %v1221, %v1217
    %v1254 = vpack.c.b16 %v1222, %v1218
    %1287 = vmatprep.subr.bf16.mxu0 %v1224
    %1288 = vmatpush1.bf16.msra.mxu0 %v1223
    %1289 = vmatprep.subr.bf16.mxu0 %v1228
    %1290 = vmatpush1.bf16.msra.mxu0 %v1227
    %1291 = vmatprep.subr.bf16.mxu0 %v1232
    %1292 = vmatpush1.bf16.msra.mxu0 %v1231
    %1293 = vmatprep.subr.bf16.mxu0 %v1236
    %1294 = vmatpush1.bf16.msra.mxu0 %v1235
    %1295 = vmatprep.subr.bf16.mxu0 %v1240
    %1296 = vmatpush1.bf16.msra.mxu0 %v1239
    %1297 = vmatprep.subr.bf16.mxu0 %v1244
    %1298 = vmatpush1.bf16.msra.mxu0 %v1243
    %1299 = vmatprep.subr.bf16.mxu0 %v1248
    %1300 = vmatpush1.bf16.msra.mxu0 %v1247
    %1301 = vmatprep.subr.bf16.mxu0 %v1252
    %1302 = vmatpush1.bf16.msra.mxu0 %v1251
    %1303 = vmatprep.subr.bf16.mxu0 0
    %1304 = vmatpush1.bf16.msra.mxu0 0
    %1305 = vmatprep.subr.bf16.mxu0 0
    %1306 = vmatpush1.bf16.msra.mxu0 0
    %1307 = vmatprep.subr.bf16.mxu0 0
    %1308 = vmatpush1.bf16.msra.mxu0 0
    %1309 = vmatprep.subr.bf16.mxu0 0
    %1310 = vmatpush1.bf16.msra.mxu0 0
    %1311 = vmatprep.subr.bf16.mxu0 0
    %1312 = vmatpush1.bf16.msra.mxu0 0
    %1313 = vmatprep.subr.bf16.mxu0 0
    %1314 = vmatpush1.bf16.msra.mxu0 0
    %1315 = vmatprep.subr.bf16.mxu0 0
    %1316 = vmatpush1.bf16.msra.mxu0 0
    %1317 = vmatprep.subr.bf16.mxu0 0
    %1318 = vmatpush1.bf16.msra.mxu0 0
    %1319 = vmatprep.mubr.bf16.mxu0 0
    %1320 = vmatmul.mubr.bf16.gmra.mrb[0].mxu0 %v1094
    %v1321 = vpop.f32.mrb[0].mxu0
    %v1322 = vadd.f32 0.0, %v1321
    %v1323 = vpop.f32.mrb[0].mxu0
    %v1324 = vadd.f32 0.0, %v1323
    %v1325 = vpop.f32.mrb[0].mxu0
    %v1326 = vpop.f32.mrb[0].mxu0
    %1327 = vdwg.mxu0
    %1328 = vmatprep.subr.bf16.mxu0 %v1226
    %1329 = vmatpush1.bf16.msra.mxu0 %v1225
    %1330 = vmatprep.subr.bf16.mxu0 %v1230
    %1331 = vmatpush1.bf16.msra.mxu0 %v1229
    %1332 = vmatprep.subr.bf16.mxu0 %v1234
    %1333 = vmatpush1.bf16.msra.mxu0 %v1233
    %1334 = vmatprep.subr.bf16.mxu0 %v1238
    %1335 = vmatpush1.bf16.msra.mxu0 %v1237
    %1336 = vmatprep.subr.bf16.mxu0 %v1242
    %1337 = vmatpush1.bf16.msra.mxu0 %v1241
    %1338 = vmatprep.subr.bf16.mxu0 %v1246
    %1339 = vmatpush1.bf16.msra.mxu0 %v1245
    %1340 = vmatprep.subr.bf16.mxu0 %v1250
    %1341 = vmatpush1.bf16.msra.mxu0 %v1249
    %1342 = vmatprep.subr.bf16.mxu0 %v1254
    %1343 = vmatpush1.bf16.msra.mxu0 %v1253
    %1344 = vmatprep.subr.bf16.mxu0 0
    %1345 = vmatpush1.bf16.msra.mxu0 0
    %1346 = vmatprep.subr.bf16.mxu0 0
    %1347 = vmatpush1.bf16.msra.mxu0 0
    %1348 = vmatprep.subr.bf16.mxu0 0
    %1349 = vmatpush1.bf16.msra.mxu0 0
    %1350 = vmatprep.subr.bf16.mxu0 0
    %1351 = vmatpush1.bf16.msra.mxu0 0
    %1352 = vmatprep.subr.bf16.mxu0 0
    %1353 = vmatpush1.bf16.msra.mxu0 0
    %1354 = vmatprep.subr.bf16.mxu0 0
    %1355 = vmatpush1.bf16.msra.mxu0 0
    %1356 = vmatprep.subr.bf16.mxu0 0
    %1357 = vmatpush1.bf16.msra.mxu0 0
    %1358 = vmatprep.subr.bf16.mxu0 0
    %1359 = vmatpush1.bf16.msra.mxu0 0
    %1360 = vmatprep.mubr.bf16.mxu0 0
    %1361 = vmatmul.mubr.bf16.gmra.mrb[0].mxu0 %v1094
    %v1362 = vpop.f32.mrb[0].mxu0
    %v1363 = vadd.f32 0.0, %v1362
    %v1364 = vpop.f32.mrb[0].mxu0
    %v1365 = vadd.f32 0.0, %v1364
    %v1366 = vpop.f32.mrb[0].mxu0
    %v1367 = vpop.f32.mrb[0].mxu0
    %1368 = vdwg.mxu0
    %v1369 = vadd.f32 %v1090, %v1322
    %v1370 = vadd.f32 %v1091, %v1324
    %v1371 = vadd.f32 %v1092, %v1363
    %v1372 = vadd.f32 %v1093, %v1365
    %v1373 = vxor.u32 %v1369, 2147483648
    %v1374 = vmul.f32 %v1373, 1.442695
    %v1375 = vpow.pop %v1374
    %v1376 = vadd.f32 %v1375, 1.0
    %v1377 = vrcp.pop %v1376
    %v1378 = vmul.f32 1.0, %v1377
    %v1379 = vxor.u32 %v1370, 2147483648
    %v1380 = vmul.f32 %v1379, 1.442695
    %v1381 = vpow.pop %v1380
    %v1382 = vadd.f32 %v1381, 1.0
    %v1383 = vrcp.pop %v1382
    %v1384 = vmul.f32 1.0, %v1383
    %v1385 = vtanh.pop %v1371
    %v1386 = vxor.u32 %v1372, 2147483648
    %v1387 = vmul.f32 %v1386, 1.442695
    %v1388 = vpow.pop %v1387
    %v1389 = vadd.f32 %v1388, 1.0
    %v1390 = vrcp.pop %v1389
    %v1391 = vmul.f32 1.0, %v1390
    %v1392 = vmul.f32 %v1384, %v1086
    %v1393 = vmul.f32 %v1378, %v1385
    %v1394 = vadd.f32 %v1392, %v1393
    %v1395 = vtanh.pop %v1394
    %v1396 = vmul.f32 %v1391, %v1395
    %s1397 = sadd.s32 %s43, 2
    %p1398 = scmp.lt.s32.totalorder %s1397, 8
    %s1399 = scalar_select %p1398, 1, 0
    %v1400 = vstv %s1399
    %vm1401 = vcmp.eq.s32.totalorder %v1400, 1
    %v1402 = vsel %vm1401, %v1396, %v1085
    %v1403 = vsel %vm1401, %v1394, %v1086
    %s1404 = scalar_lea.vmem [#allocation2], 16
    %1405 = vst [vmem:[%s1404] sm:$0xff] %v1402
    %s1406 = scalar_lea.vmem [#allocation3], 96
    %v1407 = vld [vmem:[%s1406] sm:$0xff]
    %v1408 = vld [vmem:[%s1406 + $0x8] sm:$0xff]
    %v1409 = vld [vmem:[%s1406 + $0x10] sm:$0xff]
    %v1410 = vld [vmem:[%s1406 + $0x18] sm:$0xff]
    %v1411 = vpack.c.bf16 %v1402, %v1402
    %v1412 = vld [vmem:[%s3] sm:$0xff]
    %v1413 = vld [vmem:[%s3 + $0x8] sm:$0xff]
    %v1414 = vld [vmem:[%s3 + $0x10] sm:$0xff]
    %v1415 = vld [vmem:[%s3 + $0x18] sm:$0xff]
    %v1416 = vld [vmem:[%s3 + $0x20] sm:$0xff]
    %v1417 = vld [vmem:[%s3 + $0x28] sm:$0xff]
    %v1418 = vld [vmem:[%s3 + $0x30] sm:$0xff]
    %v1419 = vld [vmem:[%s3 + $0x38] sm:$0xff]
    %v1420 = vld [vmem:[%s3 + $0x40] sm:$0xff]
    %v1421 = vld [vmem:[%s3 + $0x48] sm:$0xff]
    %v1422 = vld [vmem:[%s3 + $0x50] sm:$0xff]
    %v1423 = vld [vmem:[%s3 + $0x58] sm:$0xff]
    %v1424 = vld [vmem:[%s3 + $0x60] sm:$0xff]
    %v1425 = vld [vmem:[%s3 + $0x68] sm:$0xff]
    %v1426 = vld [vmem:[%s3 + $0x70] sm:$0xff]
    %v1427 = vld [vmem:[%s3 + $0x78] sm:$0xff]
    %v1428 = vld [vmem:[%s3 + $0x80] sm:$0xff]
    %v1429 = vld [vmem:[%s3 + $0x88] sm:$0xff]
    %v1430 = vld [vmem:[%s3 + $0x90] sm:$0xff]
    %v1431 = vld [vmem:[%s3 + $0x98] sm:$0xff]
    %v1432 = vld [vmem:[%s3 + $0xa0] sm:$0xff]
    %v1433 = vld [vmem:[%s3 + $0xa8] sm:$0xff]
    %v1434 = vld [vmem:[%s3 + $0xb0] sm:$0xff]
    %v1435 = vld [vmem:[%s3 + $0xb8] sm:$0xff]
    %v1436 = vld [vmem:[%s3 + $0xc0] sm:$0xff]
    %v1437 = vld [vmem:[%s3 + $0xc8] sm:$0xff]
    %v1438 = vld [vmem:[%s3 + $0xd0] sm:$0xff]
    %v1439 = vld [vmem:[%s3 + $0xd8] sm:$0xff]
    %v1440 = vld [vmem:[%s3 + $0xe0] sm:$0xff]
    %v1441 = vld [vmem:[%s3 + $0xe8] sm:$0xff]
    %v1442 = vld [vmem:[%s3 + $0xf0] sm:$0xff]
    %v1443 = vld [vmem:[%s3 + $0xf8] sm:$0xff]
    %v1476 = vunpack.c.l.b16 %v1412
    %v1477 = vunpack.c.h.b16 %v1412
    %v1478 = vunpack.c.l.b16 %v1413
    %v1479 = vunpack.c.h.b16 %v1413
    %v1480 = vunpack.c.l.b16 %v1414
    %v1481 = vunpack.c.h.b16 %v1414
    %v1482 = vunpack.c.l.b16 %v1415
    %v1483 = vunpack.c.h.b16 %v1415
    %v1484 = vunpack.c.l.b16 %v1416
    %v1485 = vunpack.c.h.b16 %v1416
    %v1486 = vunpack.c.l.b16 %v1417
    %v1487 = vunpack.c.h.b16 %v1417
    %v1488 = vunpack.c.l.b16 %v1418
    %v1489 = vunpack.c.h.b16 %v1418
    %v1490 = vunpack.c.l.b16 %v1419
    %v1491 = vunpack.c.h.b16 %v1419
    %v1492 = vunpack.c.l.b16 %v1420
    %v1493 = vunpack.c.h.b16 %v1420
    %v1494 = vunpack.c.l.b16 %v1421
    %v1495 = vunpack.c.h.b16 %v1421
    %v1496 = vunpack.c.l.b16 %v1422
    %v1497 = vunpack.c.h.b16 %v1422
    %v1498 = vunpack.c.l.b16 %v1423
    %v1499 = vunpack.c.h.b16 %v1423
    %v1500 = vunpack.c.l.b16 %v1424
    %v1501 = vunpack.c.h.b16 %v1424
    %v1502 = vunpack.c.l.b16 %v1425
    %v1503 = vunpack.c.h.b16 %v1425
    %v1504 = vunpack.c.l.b16 %v1426
    %v1505 = vunpack.c.h.b16 %v1426
    %v1506 = vunpack.c.l.b16 %v1427
    %v1507 = vunpack.c.h.b16 %v1427
    %v1508 = vunpack.c.l.b16 %v1428
    %v1509 = vunpack.c.h.b16 %v1428
    %v1510 = vunpack.c.l.b16 %v1429
    %v1511 = vunpack.c.h.b16 %v1429
    %v1512 = vunpack.c.l.b16 %v1430
    %v1513 = vunpack.c.h.b16 %v1430
    %v1514 = vunpack.c.l.b16 %v1431
    %v1515 = vunpack.c.h.b16 %v1431
    %v1516 = vunpack.c.l.b16 %v1432
    %v1517 = vunpack.c.h.b16 %v1432
    %v1518 = vunpack.c.l.b16 %v1433
    %v1519 = vunpack.c.h.b16 %v1433
    %v1520 = vunpack.c.l.b16 %v1434
    %v1521 = vunpack.c.h.b16 %v1434
    %v1522 = vunpack.c.l.b16 %v1435
    %v1523 = vunpack.c.h.b16 %v1435
    %v1524 = vunpack.c.l.b16 %v1436
    %v1525 = vunpack.c.h.b16 %v1436
    %v1526 = vunpack.c.l.b16 %v1437
    %v1527 = vunpack.c.h.b16 %v1437
    %v1528 = vunpack.c.l.b16 %v1438
    %v1529 = vunpack.c.h.b16 %v1438
    %v1530 = vunpack.c.l.b16 %v1439
    %v1531 = vunpack.c.h.b16 %v1439
    %v1532 = vunpack.c.l.b16 %v1440
    %v1533 = vunpack.c.h.b16 %v1440
    %v1534 = vunpack.c.l.b16 %v1441
    %v1535 = vunpack.c.h.b16 %v1441
    %v1536 = vunpack.c.l.b16 %v1442
    %v1537 = vunpack.c.h.b16 %v1442
    %v1538 = vunpack.c.l.b16 %v1443
    %v1539 = vunpack.c.h.b16 %v1443
    %v1540 = vpack.c.b16 %v1480, %v1476
    %v1541 = vpack.c.b16 %v1481, %v1477
    %v1542 = vpack.c.b16 %v1482, %v1478
    %v1543 = vpack.c.b16 %v1483, %v1479
    %v1544 = vpack.c.b16 %v1488, %v1484
    %v1545 = vpack.c.b16 %v1489, %v1485
    %v1546 = vpack.c.b16 %v1490, %v1486
    %v1547 = vpack.c.b16 %v1491, %v1487
    %v1548 = vpack.c.b16 %v1496, %v1492
    %v1549 = vpack.c.b16 %v1497, %v1493
    %v1550 = vpack.c.b16 %v1498, %v1494
    %v1551 = vpack.c.b16 %v1499, %v1495
    %v1552 = vpack.c.b16 %v1504, %v1500
    %v1553 = vpack.c.b16 %v1505, %v1501
    %v1554 = vpack.c.b16 %v1506, %v1502
    %v1555 = vpack.c.b16 %v1507, %v1503
    %v1556 = vpack.c.b16 %v1512, %v1508
    %v1557 = vpack.c.b16 %v1513, %v1509
    %v1558 = vpack.c.b16 %v1514, %v1510
    %v1559 = vpack.c.b16 %v1515, %v1511
    %v1560 = vpack.c.b16 %v1520, %v1516
    %v1561 = vpack.c.b16 %v1521, %v1517
    %v1562 = vpack.c.b16 %v1522, %v1518
    %v1563 = vpack.c.b16 %v1523, %v1519
    %v1564 = vpack.c.b16 %v1528, %v1524
    %v1565 = vpack.c.b16 %v1529, %v1525
    %v1566 = vpack.c.b16 %v1530, %v1526
    %v1567 = vpack.c.b16 %v1531, %v1527
    %v1568 = vpack.c.b16 %v1536, %v1532
    %v1569 = vpack.c.b16 %v1537, %v1533
    %v1570 = vpack.c.b16 %v1538, %v1534
    %v1571 = vpack.c.b16 %v1539, %v1535
    %1604 = vmatprep.subr.bf16.mxu0 %v1541
    %1605 = vmatpush1.bf16.msra.mxu0 %v1540
    %1606 = vmatprep.subr.bf16.mxu0 %v1545
    %1607 = vmatpush1.bf16.msra.mxu0 %v1544
    %1608 = vmatprep.subr.bf16.mxu0 %v1549
    %1609 = vmatpush1.bf16.msra.mxu0 %v1548
    %1610 = vmatprep.subr.bf16.mxu0 %v1553
    %1611 = vmatpush1.bf16.msra.mxu0 %v1552
    %1612 = vmatprep.subr.bf16.mxu0 %v1557
    %1613 = vmatpush1.bf16.msra.mxu0 %v1556
    %1614 = vmatprep.subr.bf16.mxu0 %v1561
    %1615 = vmatpush1.bf16.msra.mxu0 %v1560
    %1616 = vmatprep.subr.bf16.mxu0 %v1565
    %1617 = vmatpush1.bf16.msra.mxu0 %v1564
    %1618 = vmatprep.subr.bf16.mxu0 %v1569
    %1619 = vmatpush1.bf16.msra.mxu0 %v1568
    %1620 = vmatprep.subr.bf16.mxu0 0
    %1621 = vmatpush1.bf16.msra.mxu0 0
    %1622 = vmatprep.subr.bf16.mxu0 0
    %1623 = vmatpush1.bf16.msra.mxu0 0
    %1624 = vmatprep.subr.bf16.mxu0 0
    %1625 = vmatpush1.bf16.msra.mxu0 0
    %1626 = vmatprep.subr.bf16.mxu0 0
    %1627 = vmatpush1.bf16.msra.mxu0 0
    %1628 = vmatprep.subr.bf16.mxu0 0
    %1629 = vmatpush1.bf16.msra.mxu0 0
    %1630 = vmatprep.subr.bf16.mxu0 0
    %1631 = vmatpush1.bf16.msra.mxu0 0
    %1632 = vmatprep.subr.bf16.mxu0 0
    %1633 = vmatpush1.bf16.msra.mxu0 0
    %1634 = vmatprep.subr.bf16.mxu0 0
    %1635 = vmatpush1.bf16.msra.mxu0 0
    %1636 = vmatprep.mubr.bf16.mxu0 0
    %1637 = vmatmul.mubr.bf16.gmra.mrb[0].mxu0 %v1411
    %v1638 = vpop.f32.mrb[0].mxu0
    %v1639 = vadd.f32 0.0, %v1638
    %v1640 = vpop.f32.mrb[0].mxu0
    %v1641 = vadd.f32 0.0, %v1640
    %v1642 = vpop.f32.mrb[0].mxu0
    %v1643 = vpop.f32.mrb[0].mxu0
    %1644 = vdwg.mxu0
    %1645 = vmatprep.subr.bf16.mxu0 %v1543
    %1646 = vmatpush1.bf16.msra.mxu0 %v1542
    %1647 = vmatprep.subr.bf16.mxu0 %v1547
    %1648 = vmatpush1.bf16.msra.mxu0 %v1546
    %1649 = vmatprep.subr.bf16.mxu0 %v1551
    %1650 = vmatpush1.bf16.msra.mxu0 %v1550
    %1651 = vmatprep.subr.bf16.mxu0 %v1555
    %1652 = vmatpush1.bf16.msra.mxu0 %v1554
    %1653 = vmatprep.subr.bf16.mxu0 %v1559
    %1654 = vmatpush1.bf16.msra.mxu0 %v1558
    %1655 = vmatprep.subr.bf16.mxu0 %v1563
    %1656 = vmatpush1.bf16.msra.mxu0 %v1562
    %1657 = vmatprep.subr.bf16.mxu0 %v1567
    %1658 = vmatpush1.bf16.msra.mxu0 %v1566
    %1659 = vmatprep.subr.bf16.mxu0 %v1571
    %1660 = vmatpush1.bf16.msra.mxu0 %v1570
    %1661 = vmatprep.subr.bf16.mxu0 0
    %1662 = vmatpush1.bf16.msra.mxu0 0
    %1663 = vmatprep.subr.bf16.mxu0 0
    %1664 = vmatpush1.bf16.msra.mxu0 0
    %1665 = vmatprep.subr.bf16.mxu0 0
    %1666 = vmatpush1.bf16.msra.mxu0 0
    %1667 = vmatprep.subr.bf16.mxu0 0
    %1668 = vmatpush1.bf16.msra.mxu0 0
    %1669 = vmatprep.subr.bf16.mxu0 0
    %1670 = vmatpush1.bf16.msra.mxu0 0
    %1671 = vmatprep.subr.bf16.mxu0 0
    %1672 = vmatpush1.bf16.msra.mxu0 0
    %1673 = vmatprep.subr.bf16.mxu0 0
    %1674 = vmatpush1.bf16.msra.mxu0 0
    %1675 = vmatprep.subr.bf16.mxu0 0
    %1676 = vmatpush1.bf16.msra.mxu0 0
    %1677 = vmatprep.mubr.bf16.mxu0 0
    %1678 = vmatmul.mubr.bf16.gmra.mrb[0].mxu0 %v1411
    %v1679 = vpop.f32.mrb[0].mxu0
    %v1680 = vadd.f32 0.0, %v1679
    %v1681 = vpop.f32.mrb[0].mxu0
    %v1682 = vadd.f32 0.0, %v1681
    %v1683 = vpop.f32.mrb[0].mxu0
    %v1684 = vpop.f32.mrb[0].mxu0
    %1685 = vdwg.mxu0
    %v1686 = vadd.f32 %v1407, %v1639
    %v1687 = vadd.f32 %v1408, %v1641
    %v1688 = vadd.f32 %v1409, %v1680
    %v1689 = vadd.f32 %v1410, %v1682
    %v1690 = vxor.u32 %v1686, 2147483648
    %v1691 = vmul.f32 %v1690, 1.442695
    %v1692 = vpow.pop %v1691
    %v1693 = vadd.f32 %v1692, 1.0
    %v1694 = vrcp.pop %v1693
    %v1695 = vmul.f32 1.0, %v1694
    %v1696 = vxor.u32 %v1687, 2147483648
    %v1697 = vmul.f32 %v1696, 1.442695
    %v1698 = vpow.pop %v1697
    %v1699 = vadd.f32 %v1698, 1.0
    %v1700 = vrcp.pop %v1699
    %v1701 = vmul.f32 1.0, %v1700
    %v1702 = vtanh.pop %v1688
    %v1703 = vxor.u32 %v1689, 2147483648
    %v1704 = vmul.f32 %v1703, 1.442695
    %v1705 = vpow.pop %v1704
    %v1706 = vadd.f32 %v1705, 1.0
    %v1707 = vrcp.pop %v1706
    %v1708 = vmul.f32 1.0, %v1707
    %v1709 = vmul.f32 %v1701, %v1403
    %v1710 = vmul.f32 %v1695, %v1702
    %v1711 = vadd.f32 %v1709, %v1710
    %v1712 = vtanh.pop %v1711
    %v1713 = vmul.f32 %v1708, %v1712
    %s1714 = sadd.s32 %s43, 3
    %p1715 = scmp.lt.s32.totalorder %s1714, 8
    %s1716 = scalar_select %p1715, 1, 0
    %v1717 = vstv %s1716
    %vm1718 = vcmp.eq.s32.totalorder %v1717, 1
    %v1719 = vsel %vm1718, %v1713, %v1402
    %v1720 = vsel %vm1718, %v1711, %v1403
    %s1721 = scalar_lea.vmem [#allocation2], 24
    %1722 = vst [vmem:[%s1721] sm:$0xff] %v1719
    %s1723 = scalar_lea.vmem [#allocation3], 128
    %v1724 = vld [vmem:[%s1723] sm:$0xff]
    %v1725 = vld [vmem:[%s1723 + $0x8] sm:$0xff]
    %v1726 = vld [vmem:[%s1723 + $0x10] sm:$0xff]
    %v1727 = vld [vmem:[%s1723 + $0x18] sm:$0xff]
    %v1728 = vpack.c.bf16 %v1719, %v1719
    %v1729 = vld [vmem:[%s3] sm:$0xff]
    %v1730 = vld [vmem:[%s3 + $0x8] sm:$0xff]
    %v1731 = vld [vmem:[%s3 + $0x10] sm:$0xff]
    %v1732 = vld [vmem:[%s3 + $0x18] sm:$0xff]
    %v1733 = vld [vmem:[%s3 + $0x20] sm:$0xff]
    %v1734 = vld [vmem:[%s3 + $0x28] sm:$0xff]
    %v1735 = vld [vmem:[%s3 + $0x30] sm:$0xff]
    %v1736 = vld [vmem:[%s3 + $0x38] sm:$0xff]
    %v1737 = vld [vmem:[%s3 + $0x40] sm:$0xff]
    %v1738 = vld [vmem:[%s3 + $0x48] sm:$0xff]
    %v1739 = vld [vmem:[%s3 + $0x50] sm:$0xff]
    %v1740 = vld [vmem:[%s3 + $0x58] sm:$0xff]
    %v1741 = vld [vmem:[%s3 + $0x60] sm:$0xff]
    %v1742 = vld [vmem:[%s3 + $0x68] sm:$0xff]
    %v1743 = vld [vmem:[%s3 + $0x70] sm:$0xff]
    %v1744 = vld [vmem:[%s3 + $0x78] sm:$0xff]
    %v1745 = vld [vmem:[%s3 + $0x80] sm:$0xff]
    %v1746 = vld [vmem:[%s3 + $0x88] sm:$0xff]
    %v1747 = vld [vmem:[%s3 + $0x90] sm:$0xff]
    %v1748 = vld [vmem:[%s3 + $0x98] sm:$0xff]
    %v1749 = vld [vmem:[%s3 + $0xa0] sm:$0xff]
    %v1750 = vld [vmem:[%s3 + $0xa8] sm:$0xff]
    %v1751 = vld [vmem:[%s3 + $0xb0] sm:$0xff]
    %v1752 = vld [vmem:[%s3 + $0xb8] sm:$0xff]
    %v1753 = vld [vmem:[%s3 + $0xc0] sm:$0xff]
    %v1754 = vld [vmem:[%s3 + $0xc8] sm:$0xff]
    %v1755 = vld [vmem:[%s3 + $0xd0] sm:$0xff]
    %v1756 = vld [vmem:[%s3 + $0xd8] sm:$0xff]
    %v1757 = vld [vmem:[%s3 + $0xe0] sm:$0xff]
    %v1758 = vld [vmem:[%s3 + $0xe8] sm:$0xff]
    %v1759 = vld [vmem:[%s3 + $0xf0] sm:$0xff]
    %v1760 = vld [vmem:[%s3 + $0xf8] sm:$0xff]
    %v1793 = vunpack.c.l.b16 %v1729
    %v1794 = vunpack.c.h.b16 %v1729
    %v1795 = vunpack.c.l.b16 %v1730
    %v1796 = vunpack.c.h.b16 %v1730
    %v1797 = vunpack.c.l.b16 %v1731
    %v1798 = vunpack.c.h.b16 %v1731
    %v1799 = vunpack.c.l.b16 %v1732
    %v1800 = vunpack.c.h.b16 %v1732
    %v1801 = vunpack.c.l.b16 %v1733
    %v1802 = vunpack.c.h.b16 %v1733
    %v1803 = vunpack.c.l.b16 %v1734
    %v1804 = vunpack.c.h.b16 %v1734
    %v1805 = vunpack.c.l.b16 %v1735
    %v1806 = vunpack.c.h.b16 %v1735
    %v1807 = vunpack.c.l.b16 %v1736
    %v1808 = vunpack.c.h.b16 %v1736
    %v1809 = vunpack.c.l.b16 %v1737
    %v1810 = vunpack.c.h.b16 %v1737
    %v1811 = vunpack.c.l.b16 %v1738
    %v1812 = vunpack.c.h.b16 %v1738
    %v1813 = vunpack.c.l.b16 %v1739
    %v1814 = vunpack.c.h.b16 %v1739
    %v1815 = vunpack.c.l.b16 %v1740
    %v1816 = vunpack.c.h.b16 %v1740
    %v1817 = vunpack.c.l.b16 %v1741
    %v1818 = vunpack.c.h.b16 %v1741
    %v1819 = vunpack.c.l.b16 %v1742
    %v1820 = vunpack.c.h.b16 %v1742
    %v1821 = vunpack.c.l.b16 %v1743
    %v1822 = vunpack.c.h.b16 %v1743
    %v1823 = vunpack.c.l.b16 %v1744
    %v1824 = vunpack.c.h.b16 %v1744
    %v1825 = vunpack.c.l.b16 %v1745
    %v1826 = vunpack.c.h.b16 %v1745
    %v1827 = vunpack.c.l.b16 %v1746
    %v1828 = vunpack.c.h.b16 %v1746
    %v1829 = vunpack.c.l.b16 %v1747
    %v1830 = vunpack.c.h.b16 %v1747
    %v1831 = vunpack.c.l.b16 %v1748
    %v1832 = vunpack.c.h.b16 %v1748
    %v1833 = vunpack.c.l.b16 %v1749
    %v1834 = vunpack.c.h.b16 %v1749
    %v1835 = vunpack.c.l.b16 %v1750
    %v1836 = vunpack.c.h.b16 %v1750
    %v1837 = vunpack.c.l.b16 %v1751
    %v1838 = vunpack.c.h.b16 %v1751
    %v1839 = vunpack.c.l.b16 %v1752
    %v1840 = vunpack.c.h.b16 %v1752
    %v1841 = vunpack.c.l.b16 %v1753
    %v1842 = vunpack.c.h.b16 %v1753
    %v1843 = vunpack.c.l.b16 %v1754
    %v1844 = vunpack.c.h.b16 %v1754
    %v1845 = vunpack.c.l.b16 %v1755
    %v1846 = vunpack.c.h.b16 %v1755
    %v1847 = vunpack.c.l.b16 %v1756
    %v1848 = vunpack.c.h.b16 %v1756
    %v1849 = vunpack.c.l.b16 %v1757
    %v1850 = vunpack.c.h.b16 %v1757
    %v1851 = vunpack.c.l.b16 %v1758
    %v1852 = vunpack.c.h.b16 %v1758
    %v1853 = vunpack.c.l.b16 %v1759
    %v1854 = vunpack.c.h.b16 %v1759
    %v1855 = vunpack.c.l.b16 %v1760
    %v1856 = vunpack.c.h.b16 %v1760
    %v1857 = vpack.c.b16 %v1797, %v1793
    %v1858 = vpack.c.b16 %v1798, %v1794
    %v1859 = vpack.c.b16 %v1799, %v1795
    %v1860 = vpack.c.b16 %v1800, %v1796
    %v1861 = vpack.c.b16 %v1805, %v1801
    %v1862 = vpack.c.b16 %v1806, %v1802
    %v1863 = vpack.c.b16 %v1807, %v1803
    %v1864 = vpack.c.b16 %v1808, %v1804
    %v1865 = vpack.c.b16 %v1813, %v1809
    %v1866 = vpack.c.b16 %v1814, %v1810
    %v1867 = vpack.c.b16 %v1815, %v1811
    %v1868 = vpack.c.b16 %v1816, %v1812
    %v1869 = vpack.c.b16 %v1821, %v1817
    %v1870 = vpack.c.b16 %v1822, %v1818
    %v1871 = vpack.c.b16 %v1823, %v1819
    %v1872 = vpack.c.b16 %v1824, %v1820
    %v1873 = vpack.c.b16 %v1829, %v1825
    %v1874 = vpack.c.b16 %v1830, %v1826
    %v1875 = vpack.c.b16 %v1831, %v1827
    %v1876 = vpack.c.b16 %v1832, %v1828
    %v1877 = vpack.c.b16 %v1837, %v1833
    %v1878 = vpack.c.b16 %v1838, %v1834
    %v1879 = vpack.c.b16 %v1839, %v1835
    %v1880 = vpack.c.b16 %v1840, %v1836
    %v1881 = vpack.c.b16 %v1845, %v1841
    %v1882 = vpack.c.b16 %v1846, %v1842
    %v1883 = vpack.c.b16 %v1847, %v1843
    %v1884 = vpack.c.b16 %v1848, %v1844
    %v1885 = vpack.c.b16 %v1853, %v1849
    %v1886 = vpack.c.b16 %v1854, %v1850
    %v1887 = vpack.c.b16 %v1855, %v1851
    %v1888 = vpack.c.b16 %v1856, %v1852
    %1921 = vmatprep.subr.bf16.mxu0 %v1858
    %1922 = vmatpush1.bf16.msra.mxu0 %v1857
    %1923 = vmatprep.subr.bf16.mxu0 %v1862
    %1924 = vmatpush1.bf16.msra.mxu0 %v1861
    %1925 = vmatprep.subr.bf16.mxu0 %v1866
    %1926 = vmatpush1.bf16.msra.mxu0 %v1865
    %1927 = vmatprep.subr.bf16.mxu0 %v1870
    %1928 = vmatpush1.bf16.msra.mxu0 %v1869
    %1929 = vmatprep.subr.bf16.mxu0 %v1874
    %1930 = vmatpush1.bf16.msra.mxu0 %v1873
    %1931 = vmatprep.subr.bf16.mxu0 %v1878
    %1932 = vmatpush1.bf16.msra.mxu0 %v1877
    %1933 = vmatprep.subr.bf16.mxu0 %v1882
    %1934 = vmatpush1.bf16.msra.mxu0 %v1881
    %1935 = vmatprep.subr.bf16.mxu0 %v1886
    %1936 = vmatpush1.bf16.msra.mxu0 %v1885
    %1937 = vmatprep.subr.bf16.mxu0 0
    %1938 = vmatpush1.bf16.msra.mxu0 0
    %1939 = vmatprep.subr.bf16.mxu0 0
    %1940 = vmatpush1.bf16.msra.mxu0 0
    %1941 = vmatprep.subr.bf16.mxu0 0
    %1942 = vmatpush1.bf16.msra.mxu0 0
    %1943 = vmatprep.subr.bf16.mxu0 0
    %1944 = vmatpush1.bf16.msra.mxu0 0
    %1945 = vmatprep.subr.bf16.mxu0 0
    %1946 = vmatpush1.bf16.msra.mxu0 0
    %1947 = vmatprep.subr.bf16.mxu0 0
    %1948 = vmatpush1.bf16.msra.mxu0 0
    %1949 = vmatprep.subr.bf16.mxu0 0
    %1950 = vmatpush1.bf16.msra.mxu0 0
    %1951 = vmatprep.subr.bf16.mxu0 0
    %1952 = vmatpush1.bf16.msra.mxu0 0
    %1953 = vmatprep.mubr.bf16.mxu0 0
    %1954 = vmatmul.mubr.bf16.gmra.mrb[0].mxu0 %v1728
    %v1955 = vpop.f32.mrb[0].mxu0
    %v1956 = vadd.f32 0.0, %v1955
    %v1957 = vpop.f32.mrb[0].mxu0
    %v1958 = vadd.f32 0.0, %v1957
    %v1959 = vpop.f32.mrb[0].mxu0
    %v1960 = vpop.f32.mrb[0].mxu0
    %1961 = vdwg.mxu0
    %1962 = vmatprep.subr.bf16.mxu0 %v1860
    %1963 = vmatpush1.bf16.msra.mxu0 %v1859
    %1964 = vmatprep.subr.bf16.mxu0 %v1864
    %1965 = vmatpush1.bf16.msra.mxu0 %v1863
    %1966 = vmatprep.subr.bf16.mxu0 %v1868
    %1967 = vmatpush1.bf16.msra.mxu0 %v1867
    %1968 = vmatprep.subr.bf16.mxu0 %v1872
    %1969 = vmatpush1.bf16.msra.mxu0 %v1871
    %1970 = vmatprep.subr.bf16.mxu0 %v1876
    %1971 = vmatpush1.bf16.msra.mxu0 %v1875
    %1972 = vmatprep.subr.bf16.mxu0 %v1880
    %1973 = vmatpush1.bf16.msra.mxu0 %v1879
    %1974 = vmatprep.subr.bf16.mxu0 %v1884
    %1975 = vmatpush1.bf16.msra.mxu0 %v1883
    %1976 = vmatprep.subr.bf16.mxu0 %v1888
    %1977 = vmatpush1.bf16.msra.mxu0 %v1887
    %1978 = vmatprep.subr.bf16.mxu0 0
    %1979 = vmatpush1.bf16.msra.mxu0 0
    %1980 = vmatprep.subr.bf16.mxu0 0
    %1981 = vmatpush1.bf16.msra.mxu0 0
    %1982 = vmatprep.subr.bf16.mxu0 0
    %1983 = vmatpush1.bf16.msra.mxu0 0
    %1984 = vmatprep.subr.bf16.mxu0 0
    %1985 = vmatpush1.bf16.msra.mxu0 0
    %1986 = vmatprep.subr.bf16.mxu0 0
    %1987 = vmatpush1.bf16.msra.mxu0 0
    %1988 = vmatprep.subr.bf16.mxu0 0
    %1989 = vmatpush1.bf16.msra.mxu0 0
    %1990 = vmatprep.subr.bf16.mxu0 0
    %1991 = vmatpush1.bf16.msra.mxu0 0
    %1992 = vmatprep.subr.bf16.mxu0 0
    %1993 = vmatpush1.bf16.msra.mxu0 0
    %1994 = vmatprep.mubr.bf16.mxu0 0
    %1995 = vmatmul.mubr.bf16.gmra.mrb[0].mxu0 %v1728
    %v1996 = vpop.f32.mrb[0].mxu0
    %v1997 = vadd.f32 0.0, %v1996
    %v1998 = vpop.f32.mrb[0].mxu0
    %v1999 = vadd.f32 0.0, %v1998
    %v2000 = vpop.f32.mrb[0].mxu0
    %v2001 = vpop.f32.mrb[0].mxu0
    %2002 = vdwg.mxu0
    %v2003 = vadd.f32 %v1724, %v1956
    %v2004 = vadd.f32 %v1725, %v1958
    %v2005 = vadd.f32 %v1726, %v1997
    %v2006 = vadd.f32 %v1727, %v1999
    %v2007 = vxor.u32 %v2003, 2147483648
    %v2008 = vmul.f32 %v2007, 1.442695
    %v2009 = vpow.pop %v2008
    %v2010 = vadd.f32 %v2009, 1.0
    %v2011 = vrcp.pop %v2010
    %v2012 = vmul.f32 1.0, %v2011
    %v2013 = vxor.u32 %v2004, 2147483648
    %v2014 = vmul.f32 %v2013, 1.442695
    %v2015 = vpow.pop %v2014
    %v2016 = vadd.f32 %v2015, 1.0
    %v2017 = vrcp.pop %v2016
    %v2018 = vmul.f32 1.0, %v2017
    %v2019 = vtanh.pop %v2005
    %v2020 = vxor.u32 %v2006, 2147483648
    %v2021 = vmul.f32 %v2020, 1.442695
    %v2022 = vpow.pop %v2021
    %v2023 = vadd.f32 %v2022, 1.0
    %v2024 = vrcp.pop %v2023
    %v2025 = vmul.f32 1.0, %v2024
    %v2026 = vmul.f32 %v2018, %v1720
    %v2027 = vmul.f32 %v2012, %v2019
    %v2028 = vadd.f32 %v2026, %v2027
    %v2029 = vtanh.pop %v2028
    %v2030 = vmul.f32 %v2025, %v2029
    %s2031 = sadd.s32 %s43, 4
    %p2032 = scmp.lt.s32.totalorder %s2031, 8
    %s2033 = scalar_select %p2032, 1, 0
    %v2034 = vstv %s2033
    %vm2035 = vcmp.eq.s32.totalorder %v2034, 1
    %v2036 = vsel %vm2035, %v2030, %v1719
    %v2037 = vsel %vm2035, %v2028, %v1720
    %s2038 = scalar_lea.vmem [#allocation2], 32
    %2039 = vst [vmem:[%s2038] sm:$0xff] %v2036
    %s2040 = scalar_lea.vmem [#allocation3], 160
    %v2041 = vld [vmem:[%s2040] sm:$0xff]
    %v2042 = vld [vmem:[%s2040 + $0x8] sm:$0xff]
    %v2043 = vld [vmem:[%s2040 + $0x10] sm:$0xff]
    %v2044 = vld [vmem:[%s2040 + $0x18] sm:$0xff]
    %v2045 = vpack.c.bf16 %v2036, %v2036
    %v2046 = vld [vmem:[%s3] sm:$0xff]
    %v2047 = vld [vmem:[%s3 + $0x8] sm:$0xff]
    %v2048 = vld [vmem:[%s3 + $0x10] sm:$0xff]
    %v2049 = vld [vmem:[%s3 + $0x18] sm:$0xff]
    %v2050 = vld [vmem:[%s3 + $0x20] sm:$0xff]
    %v2051 = vld [vmem:[%s3 + $0x28] sm:$0xff]
    %v2052 = vld [vmem:[%s3 + $0x30] sm:$0xff]
    %v2053 = vld [vmem:[%s3 + $0x38] sm:$0xff]
    %v2054 = vld [vmem:[%s3 + $0x40] sm:$0xff]
    %v2055 = vld [vmem:[%s3 + $0x48] sm:$0xff]
    %v2056 = vld [vmem:[%s3 + $0x50] sm:$0xff]
    %v2057 = vld [vmem:[%s3 + $0x58] sm:$0xff]
    %v2058 = vld [vmem:[%s3 + $0x60] sm:$0xff]
    %v2059 = vld [vmem:[%s3 + $0x68] sm:$0xff]
    %v2060 = vld [vmem:[%s3 + $0x70] sm:$0xff]
    %v2061 = vld [vmem:[%s3 + $0x78] sm:$0xff]
    %v2062 = vld [vmem:[%s3 + $0x80] sm:$0xff]
    %v2063 = vld [vmem:[%s3 + $0x88] sm:$0xff]
    %v2064 = vld [vmem:[%s3 + $0x90] sm:$0xff]
    %v2065 = vld [vmem:[%s3 + $0x98] sm:$0xff]
    %v2066 = vld [vmem:[%s3 + $0xa0] sm:$0xff]
    %v2067 = vld [vmem:[%s3 + $0xa8] sm:$0xff]
    %v2068 = vld [vmem:[%s3 + $0xb0] sm:$0xff]
    %v2069 = vld [vmem:[%s3 + $0xb8] sm:$0xff]
    %v2070 = vld [vmem:[%s3 + $0xc0] sm:$0xff]
    %v2071 = vld [vmem:[%s3 + $0xc8] sm:$0xff]
    %v2072 = vld [vmem:[%s3 + $0xd0] sm:$0xff]
    %v2073 = vld [vmem:[%s3 + $0xd8] sm:$0xff]
    %v2074 = vld [vmem:[%s3 + $0xe0] sm:$0xff]
    %v2075 = vld [vmem:[%s3 + $0xe8] sm:$0xff]
    %v2076 = vld [vmem:[%s3 + $0xf0] sm:$0xff]
    %v2077 = vld [vmem:[%s3 + $0xf8] sm:$0xff]
    %v2110 = vunpack.c.l.b16 %v2046
    %v2111 = vunpack.c.h.b16 %v2046
    %v2112 = vunpack.c.l.b16 %v2047
    %v2113 = vunpack.c.h.b16 %v2047
    %v2114 = vunpack.c.l.b16 %v2048
    %v2115 = vunpack.c.h.b16 %v2048
    %v2116 = vunpack.c.l.b16 %v2049
    %v2117 = vunpack.c.h.b16 %v2049
    %v2118 = vunpack.c.l.b16 %v2050
    %v2119 = vunpack.c.h.b16 %v2050
    %v2120 = vunpack.c.l.b16 %v2051
    %v2121 = vunpack.c.h.b16 %v2051
    %v2122 = vunpack.c.l.b16 %v2052
    %v2123 = vunpack.c.h.b16 %v2052
    %v2124 = vunpack.c.l.b16 %v2053
    %v2125 = vunpack.c.h.b16 %v2053
    %v2126 = vunpack.c.l.b16 %v2054
    %v2127 = vunpack.c.h.b16 %v2054
    %v2128 = vunpack.c.l.b16 %v2055
    %v2129 = vunpack.c.h.b16 %v2055
    %v2130 = vunpack.c.l.b16 %v2056
    %v2131 = vunpack.c.h.b16 %v2056
    %v2132 = vunpack.c.l.b16 %v2057
    %v2133 = vunpack.c.h.b16 %v2057
    %v2134 = vunpack.c.l.b16 %v2058
    %v2135 = vunpack.c.h.b16 %v2058
    %v2136 = vunpack.c.l.b16 %v2059
    %v2137 = vunpack.c.h.b16 %v2059
    %v2138 = vunpack.c.l.b16 %v2060
    %v2139 = vunpack.c.h.b16 %v2060
    %v2140 = vunpack.c.l.b16 %v2061
    %v2141 = vunpack.c.h.b16 %v2061
    %v2142 = vunpack.c.l.b16 %v2062
    %v2143 = vunpack.c.h.b16 %v2062
    %v2144 = vunpack.c.l.b16 %v2063
    %v2145 = vunpack.c.h.b16 %v2063
    %v2146 = vunpack.c.l.b16 %v2064
    %v2147 = vunpack.c.h.b16 %v2064
    %v2148 = vunpack.c.l.b16 %v2065
    %v2149 = vunpack.c.h.b16 %v2065
    %v2150 = vunpack.c.l.b16 %v2066
    %v2151 = vunpack.c.h.b16 %v2066
    %v2152 = vunpack.c.l.b16 %v2067
    %v2153 = vunpack.c.h.b16 %v2067
    %v2154 = vunpack.c.l.b16 %v2068
    %v2155 = vunpack.c.h.b16 %v2068
    %v2156 = vunpack.c.l.b16 %v2069
    %v2157 = vunpack.c.h.b16 %v2069
    %v2158 = vunpack.c.l.b16 %v2070
    %v2159 = vunpack.c.h.b16 %v2070
    %v2160 = vunpack.c.l.b16 %v2071
    %v2161 = vunpack.c.h.b16 %v2071
    %v2162 = vunpack.c.l.b16 %v2072
    %v2163 = vunpack.c.h.b16 %v2072
    %v2164 = vunpack.c.l.b16 %v2073
    %v2165 = vunpack.c.h.b16 %v2073
    %v2166 = vunpack.c.l.b16 %v2074
    %v2167 = vunpack.c.h.b16 %v2074
    %v2168 = vunpack.c.l.b16 %v2075
    %v2169 = vunpack.c.h.b16 %v2075
    %v2170 = vunpack.c.l.b16 %v2076
    %v2171 = vunpack.c.h.b16 %v2076
    %v2172 = vunpack.c.l.b16 %v2077
    %v2173 = vunpack.c.h.b16 %v2077
    %v2174 = vpack.c.b16 %v2114, %v2110
    %v2175 = vpack.c.b16 %v2115, %v2111
    %v2176 = vpack.c.b16 %v2116, %v2112
    %v2177 = vpack.c.b16 %v2117, %v2113
    %v2178 = vpack.c.b16 %v2122, %v2118
    %v2179 = vpack.c.b16 %v2123, %v2119
    %v2180 = vpack.c.b16 %v2124, %v2120
    %v2181 = vpack.c.b16 %v2125, %v2121
    %v2182 = vpack.c.b16 %v2130, %v2126
    %v2183 = vpack.c.b16 %v2131, %v2127
    %v2184 = vpack.c.b16 %v2132, %v2128
    %v2185 = vpack.c.b16 %v2133, %v2129
    %v2186 = vpack.c.b16 %v2138, %v2134
    %v2187 = vpack.c.b16 %v2139, %v2135
    %v2188 = vpack.c.b16 %v2140, %v2136
    %v2189 = vpack.c.b16 %v2141, %v2137
    %v2190 = vpack.c.b16 %v2146, %v2142
    %v2191 = vpack.c.b16 %v2147, %v2143
    %v2192 = vpack.c.b16 %v2148, %v2144
    %v2193 = vpack.c.b16 %v2149, %v2145
    %v2194 = vpack.c.b16 %v2154, %v2150
    %v2195 = vpack.c.b16 %v2155, %v2151
    %v2196 = vpack.c.b16 %v2156, %v2152
    %v2197 = vpack.c.b16 %v2157, %v2153
    %v2198 = vpack.c.b16 %v2162, %v2158
    %v2199 = vpack.c.b16 %v2163, %v2159
    %v2200 = vpack.c.b16 %v2164, %v2160
    %v2201 = vpack.c.b16 %v2165, %v2161
    %v2202 = vpack.c.b16 %v2170, %v2166
    %v2203 = vpack.c.b16 %v2171, %v2167
    %v2204 = vpack.c.b16 %v2172, %v2168
    %v2205 = vpack.c.b16 %v2173, %v2169
    %2238 = vmatprep.subr.bf16.mxu0 %v2175
    %2239 = vmatpush1.bf16.msra.mxu0 %v2174
    %2240 = vmatprep.subr.bf16.mxu0 %v2179
    %2241 = vmatpush1.bf16.msra.mxu0 %v2178
    %2242 = vmatprep.subr.bf16.mxu0 %v2183
    %2243 = vmatpush1.bf16.msra.mxu0 %v2182
    %2244 = vmatprep.subr.bf16.mxu0 %v2187
    %2245 = vmatpush1.bf16.msra.mxu0 %v2186
    %2246 = vmatprep.subr.bf16.mxu0 %v2191
    %2247 = vmatpush1.bf16.msra.mxu0 %v2190
    %2248 = vmatprep.subr.bf16.mxu0 %v2195
    %2249 = vmatpush1.bf16.msra.mxu0 %v2194
    %2250 = vmatprep.subr.bf16.mxu0 %v2199
    %2251 = vmatpush1.bf16.msra.mxu0 %v2198
    %2252 = vmatprep.subr.bf16.mxu0 %v2203
    %2253 = vmatpush1.bf16.msra.mxu0 %v2202
    %2254 = vmatprep.subr.bf16.mxu0 0
    %2255 = vmatpush1.bf16.msra.mxu0 0
    %2256 = vmatprep.subr.bf16.mxu0 0
    %2257 = vmatpush1.bf16.msra.mxu0 0
    %2258 = vmatprep.subr.bf16.mxu0 0
    %2259 = vmatpush1.bf16.msra.mxu0 0
    %2260 = vmatprep.subr.bf16.mxu0 0
    %2261 = vmatpush1.bf16.msra.mxu0 0
    %2262 = vmatprep.subr.bf16.mxu0 0
    %2263 = vmatpush1.bf16.msra.mxu0 0
    %2264 = vmatprep.subr.bf16.mxu0 0
    %2265 = vmatpush1.bf16.msra.mxu0 0
    %2266 = vmatprep.subr.bf16.mxu0 0
    %2267 = vmatpush1.bf16.msra.mxu0 0
    %2268 = vmatprep.subr.bf16.mxu0 0
    %2269 = vmatpush1.bf16.msra.mxu0 0
    %2270 = vmatprep.mubr.bf16.mxu0 0
    %2271 = vmatmul.mubr.bf16.gmra.mrb[0].mxu0 %v2045
    %v2272 = vpop.f32.mrb[0].mxu0
    %v2273 = vadd.f32 0.0, %v2272
    %v2274 = vpop.f32.mrb[0].mxu0
    %v2275 = vadd.f32 0.0, %v2274
    %v2276 = vpop.f32.mrb[0].mxu0
    %v2277 = vpop.f32.mrb[0].mxu0
    %2278 = vdwg.mxu0
    %2279 = vmatprep.subr.bf16.mxu0 %v2177
    %2280 = vmatpush1.bf16.msra.mxu0 %v2176
    %2281 = vmatprep.subr.bf16.mxu0 %v2181
    %2282 = vmatpush1.bf16.msra.mxu0 %v2180
    %2283 = vmatprep.subr.bf16.mxu0 %v2185
    %2284 = vmatpush1.bf16.msra.mxu0 %v2184
    %2285 = vmatprep.subr.bf16.mxu0 %v2189
    %2286 = vmatpush1.bf16.msra.mxu0 %v2188
    %2287 = vmatprep.subr.bf16.mxu0 %v2193
    %2288 = vmatpush1.bf16.msra.mxu0 %v2192
    %2289 = vmatprep.subr.bf16.mxu0 %v2197
    %2290 = vmatpush1.bf16.msra.mxu0 %v2196
    %2291 = vmatprep.subr.bf16.mxu0 %v2201
    %2292 = vmatpush1.bf16.msra.mxu0 %v2200
    %2293 = vmatprep.subr.bf16.mxu0 %v2205
    %2294 = vmatpush1.bf16.msra.mxu0 %v2204
    %2295 = vmatprep.subr.bf16.mxu0 0
    %2296 = vmatpush1.bf16.msra.mxu0 0
    %2297 = vmatprep.subr.bf16.mxu0 0
    %2298 = vmatpush1.bf16.msra.mxu0 0
    %2299 = vmatprep.subr.bf16.mxu0 0
    %2300 = vmatpush1.bf16.msra.mxu0 0
    %2301 = vmatprep.subr.bf16.mxu0 0
    %2302 = vmatpush1.bf16.msra.mxu0 0
    %2303 = vmatprep.subr.bf16.mxu0 0
    %2304 = vmatpush1.bf16.msra.mxu0 0
    %2305 = vmatprep.subr.bf16.mxu0 0
    %2306 = vmatpush1.bf16.msra.mxu0 0
    %2307 = vmatprep.subr.bf16.mxu0 0
    %2308 = vmatpush1.bf16.msra.mxu0 0
    %2309 = vmatprep.subr.bf16.mxu0 0
    %2310 = vmatpush1.bf16.msra.mxu0 0
    %2311 = vmatprep.mubr.bf16.mxu0 0
    %2312 = vmatmul.mubr.bf16.gmra.mrb[0].mxu0 %v2045
    %v2313 = vpop.f32.mrb[0].mxu0
    %v2314 = vadd.f32 0.0, %v2313
    %v2315 = vpop.f32.mrb[0].mxu0
    %v2316 = vadd.f32 0.0, %v2315
    %v2317 = vpop.f32.mrb[0].mxu0
    %v2318 = vpop.f32.mrb[0].mxu0
    %2319 = vdwg.mxu0
    %v2320 = vadd.f32 %v2041, %v2273
    %v2321 = vadd.f32 %v2042, %v2275
    %v2322 = vadd.f32 %v2043, %v2314
    %v2323 = vadd.f32 %v2044, %v2316
    %v2324 = vxor.u32 %v2320, 2147483648
    %v2325 = vmul.f32 %v2324, 1.442695
    %v2326 = vpow.pop %v2325
    %v2327 = vadd.f32 %v2326, 1.0
    %v2328 = vrcp.pop %v2327
    %v2329 = vmul.f32 1.0, %v2328
    %v2330 = vxor.u32 %v2321, 2147483648
    %v2331 = vmul.f32 %v2330, 1.442695
    %v2332 = vpow.pop %v2331
    %v2333 = vadd.f32 %v2332, 1.0
    %v2334 = vrcp.pop %v2333
    %v2335 = vmul.f32 1.0, %v2334
    %v2336 = vtanh.pop %v2322
    %v2337 = vxor.u32 %v2323, 2147483648
    %v2338 = vmul.f32 %v2337, 1.442695
    %v2339 = vpow.pop %v2338
    %v2340 = vadd.f32 %v2339, 1.0
    %v2341 = vrcp.pop %v2340
    %v2342 = vmul.f32 1.0, %v2341
    %v2343 = vmul.f32 %v2335, %v2037
    %v2344 = vmul.f32 %v2329, %v2336
    %v2345 = vadd.f32 %v2343, %v2344
    %v2346 = vtanh.pop %v2345
    %v2347 = vmul.f32 %v2342, %v2346
    %s2348 = sadd.s32 %s43, 5
    %p2349 = scmp.lt.s32.totalorder %s2348, 8
    %s2350 = scalar_select %p2349, 1, 0
    %v2351 = vstv %s2350
    %vm2352 = vcmp.eq.s32.totalorder %v2351, 1
    %v2353 = vsel %vm2352, %v2347, %v2036
    %v2354 = vsel %vm2352, %v2345, %v2037
    %s2355 = scalar_lea.vmem [#allocation2], 40
    %2356 = vst [vmem:[%s2355] sm:$0xff] %v2353
    %s2357 = scalar_lea.vmem [#allocation3], 192
    %v2358 = vld [vmem:[%s2357] sm:$0xff]
    %v2359 = vld [vmem:[%s2357 + $0x8] sm:$0xff]
    %v2360 = vld [vmem:[%s2357 + $0x10] sm:$0xff]
    %v2361 = vld [vmem:[%s2357 + $0x18] sm:$0xff]
    %v2362 = vpack.c.bf16 %v2353, %v2353
    %v2363 = vld [vmem:[%s3] sm:$0xff]
    %v2364 = vld [vmem:[%s3 + $0x8] sm:$0xff]
    %v2365 = vld [vmem:[%s3 + $0x10] sm:$0xff]
    %v2366 = vld [vmem:[%s3 + $0x18] sm:$0xff]
    %v2367 = vld [vmem:[%s3 + $0x20] sm:$0xff]
    %v2368 = vld [vmem:[%s3 + $0x28] sm:$0xff]
    %v2369 = vld [vmem:[%s3 + $0x30] sm:$0xff]
    %v2370 = vld [vmem:[%s3 + $0x38] sm:$0xff]
    %v2371 = vld [vmem:[%s3 + $0x40] sm:$0xff]
    %v2372 = vld [vmem:[%s3 + $0x48] sm:$0xff]
    %v2373 = vld [vmem:[%s3 + $0x50] sm:$0xff]
    %v2374 = vld [vmem:[%s3 + $0x58] sm:$0xff]
    %v2375 = vld [vmem:[%s3 + $0x60] sm:$0xff]
    %v2376 = vld [vmem:[%s3 + $0x68] sm:$0xff]
    %v2377 = vld [vmem:[%s3 + $0x70] sm:$0xff]
    %v2378 = vld [vmem:[%s3 + $0x78] sm:$0xff]
    %v2379 = vld [vmem:[%s3 + $0x80] sm:$0xff]
    %v2380 = vld [vmem:[%s3 + $0x88] sm:$0xff]
    %v2381 = vld [vmem:[%s3 + $0x90] sm:$0xff]
    %v2382 = vld [vmem:[%s3 + $0x98] sm:$0xff]
    %v2383 = vld [vmem:[%s3 + $0xa0] sm:$0xff]
    %v2384 = vld [vmem:[%s3 + $0xa8] sm:$0xff]
    %v2385 = vld [vmem:[%s3 + $0xb0] sm:$0xff]
    %v2386 = vld [vmem:[%s3 + $0xb8] sm:$0xff]
    %v2387 = vld [vmem:[%s3 + $0xc0] sm:$0xff]
    %v2388 = vld [vmem:[%s3 + $0xc8] sm:$0xff]
    %v2389 = vld [vmem:[%s3 + $0xd0] sm:$0xff]
    %v2390 = vld [vmem:[%s3 + $0xd8] sm:$0xff]
    %v2391 = vld [vmem:[%s3 + $0xe0] sm:$0xff]
    %v2392 = vld [vmem:[%s3 + $0xe8] sm:$0xff]
    %v2393 = vld [vmem:[%s3 + $0xf0] sm:$0xff]
    %v2394 = vld [vmem:[%s3 + $0xf8] sm:$0xff]
    %v2427 = vunpack.c.l.b16 %v2363
    %v2428 = vunpack.c.h.b16 %v2363
    %v2429 = vunpack.c.l.b16 %v2364
    %v2430 = vunpack.c.h.b16 %v2364
    %v2431 = vunpack.c.l.b16 %v2365
    %v2432 = vunpack.c.h.b16 %v2365
    %v2433 = vunpack.c.l.b16 %v2366
    %v2434 = vunpack.c.h.b16 %v2366
    %v2435 = vunpack.c.l.b16 %v2367
    %v2436 = vunpack.c.h.b16 %v2367
    %v2437 = vunpack.c.l.b16 %v2368
    %v2438 = vunpack.c.h.b16 %v2368
    %v2439 = vunpack.c.l.b16 %v2369
    %v2440 = vunpack.c.h.b16 %v2369
    %v2441 = vunpack.c.l.b16 %v2370
    %v2442 = vunpack.c.h.b16 %v2370
    %v2443 = vunpack.c.l.b16 %v2371
    %v2444 = vunpack.c.h.b16 %v2371
    %v2445 = vunpack.c.l.b16 %v2372
    %v2446 = vunpack.c.h.b16 %v2372
    %v2447 = vunpack.c.l.b16 %v2373
    %v2448 = vunpack.c.h.b16 %v2373
    %v2449 = vunpack.c.l.b16 %v2374
    %v2450 = vunpack.c.h.b16 %v2374
    %v2451 = vunpack.c.l.b16 %v2375
    %v2452 = vunpack.c.h.b16 %v2375
    %v2453 = vunpack.c.l.b16 %v2376
    %v2454 = vunpack.c.h.b16 %v2376
    %v2455 = vunpack.c.l.b16 %v2377
    %v2456 = vunpack.c.h.b16 %v2377
    %v2457 = vunpack.c.l.b16 %v2378
    %v2458 = vunpack.c.h.b16 %v2378
    %v2459 = vunpack.c.l.b16 %v2379
    %v2460 = vunpack.c.h.b16 %v2379
    %v2461 = vunpack.c.l.b16 %v2380
    %v2462 = vunpack.c.h.b16 %v2380
    %v2463 = vunpack.c.l.b16 %v2381
    %v2464 = vunpack.c.h.b16 %v2381
    %v2465 = vunpack.c.l.b16 %v2382
    %v2466 = vunpack.c.h.b16 %v2382
    %v2467 = vunpack.c.l.b16 %v2383
    %v2468 = vunpack.c.h.b16 %v2383
    %v2469 = vunpack.c.l.b16 %v2384
    %v2470 = vunpack.c.h.b16 %v2384
    %v2471 = vunpack.c.l.b16 %v2385
    %v2472 = vunpack.c.h.b16 %v2385
    %v2473 = vunpack.c.l.b16 %v2386
    %v2474 = vunpack.c.h.b16 %v2386
    %v2475 = vunpack.c.l.b16 %v2387
    %v2476 = vunpack.c.h.b16 %v2387
    %v2477 = vunpack.c.l.b16 %v2388
    %v2478 = vunpack.c.h.b16 %v2388
    %v2479 = vunpack.c.l.b16 %v2389
    %v2480 = vunpack.c.h.b16 %v2389
    %v2481 = vunpack.c.l.b16 %v2390
    %v2482 = vunpack.c.h.b16 %v2390
    %v2483 = vunpack.c.l.b16 %v2391
    %v2484 = vunpack.c.h.b16 %v2391
    %v2485 = vunpack.c.l.b16 %v2392
    %v2486 = vunpack.c.h.b16 %v2392
    %v2487 = vunpack.c.l.b16 %v2393
    %v2488 = vunpack.c.h.b16 %v2393
    %v2489 = vunpack.c.l.b16 %v2394
    %v2490 = vunpack.c.h.b16 %v2394
    %v2491 = vpack.c.b16 %v2431, %v2427
    %v2492 = vpack.c.b16 %v2432, %v2428
    %v2493 = vpack.c.b16 %v2433, %v2429
    %v2494 = vpack.c.b16 %v2434, %v2430
    %v2495 = vpack.c.b16 %v2439, %v2435
    %v2496 = vpack.c.b16 %v2440, %v2436
    %v2497 = vpack.c.b16 %v2441, %v2437
    %v2498 = vpack.c.b16 %v2442, %v2438
    %v2499 = vpack.c.b16 %v2447, %v2443
    %v2500 = vpack.c.b16 %v2448, %v2444
    %v2501 = vpack.c.b16 %v2449, %v2445
    %v2502 = vpack.c.b16 %v2450, %v2446
    %v2503 = vpack.c.b16 %v2455, %v2451
    %v2504 = vpack.c.b16 %v2456, %v2452
    %v2505 = vpack.c.b16 %v2457, %v2453
    %v2506 = vpack.c.b16 %v2458, %v2454
    %v2507 = vpack.c.b16 %v2463, %v2459
    %v2508 = vpack.c.b16 %v2464, %v2460
    %v2509 = vpack.c.b16 %v2465, %v2461
    %v2510 = vpack.c.b16 %v2466, %v2462
    %v2511 = vpack.c.b16 %v2471, %v2467
    %v2512 = vpack.c.b16 %v2472, %v2468
    %v2513 = vpack.c.b16 %v2473, %v2469
    %v2514 = vpack.c.b16 %v2474, %v2470
    %v2515 = vpack.c.b16 %v2479, %v2475
    %v2516 = vpack.c.b16 %v2480, %v2476
    %v2517 = vpack.c.b16 %v2481, %v2477
    %v2518 = vpack.c.b16 %v2482, %v2478
    %v2519 = vpack.c.b16 %v2487, %v2483
    %v2520 = vpack.c.b16 %v2488, %v2484
    %v2521 = vpack.c.b16 %v2489, %v2485
    %v2522 = vpack.c.b16 %v2490, %v2486
    %2555 = vmatprep.subr.bf16.mxu0 %v2492
    %2556 = vmatpush1.bf16.msra.mxu0 %v2491
    %2557 = vmatprep.subr.bf16.mxu0 %v2496
    %2558 = vmatpush1.bf16.msra.mxu0 %v2495
    %2559 = vmatprep.subr.bf16.mxu0 %v2500
    %2560 = vmatpush1.bf16.msra.mxu0 %v2499
    %2561 = vmatprep.subr.bf16.mxu0 %v2504
    %2562 = vmatpush1.bf16.msra.mxu0 %v2503
    %2563 = vmatprep.subr.bf16.mxu0 %v2508
    %2564 = vmatpush1.bf16.msra.mxu0 %v2507
    %2565 = vmatprep.subr.bf16.mxu0 %v2512
    %2566 = vmatpush1.bf16.msra.mxu0 %v2511
    %2567 = vmatprep.subr.bf16.mxu0 %v2516
    %2568 = vmatpush1.bf16.msra.mxu0 %v2515
    %2569 = vmatprep.subr.bf16.mxu0 %v2520
    %2570 = vmatpush1.bf16.msra.mxu0 %v2519
    %2571 = vmatprep.subr.bf16.mxu0 0
    %2572 = vmatpush1.bf16.msra.mxu0 0
    %2573 = vmatprep.subr.bf16.mxu0 0
    %2574 = vmatpush1.bf16.msra.mxu0 0
    %2575 = vmatprep.subr.bf16.mxu0 0
    %2576 = vmatpush1.bf16.msra.mxu0 0
    %2577 = vmatprep.subr.bf16.mxu0 0
    %2578 = vmatpush1.bf16.msra.mxu0 0
    %2579 = vmatprep.subr.bf16.mxu0 0
    %2580 = vmatpush1.bf16.msra.mxu0 0
    %2581 = vmatprep.subr.bf16.mxu0 0
    %2582 = vmatpush1.bf16.msra.mxu0 0
    %2583 = vmatprep.subr.bf16.mxu0 0
    %2584 = vmatpush1.bf16.msra.mxu0 0
    %2585 = vmatprep.subr.bf16.mxu0 0
    %2586 = vmatpush1.bf16.msra.mxu0 0
    %2587 = vmatprep.mubr.bf16.mxu0 0
    %2588 = vmatmul.mubr.bf16.gmra.mrb[0].mxu0 %v2362
    %v2589 = vpop.f32.mrb[0].mxu0
    %v2590 = vadd.f32 0.0, %v2589
    %v2591 = vpop.f32.mrb[0].mxu0
    %v2592 = vadd.f32 0.0, %v2591
    %v2593 = vpop.f32.mrb[0].mxu0
    %v2594 = vpop.f32.mrb[0].mxu0
    %2595 = vdwg.mxu0
    %2596 = vmatprep.subr.bf16.mxu0 %v2494
    %2597 = vmatpush1.bf16.msra.mxu0 %v2493
    %2598 = vmatprep.subr.bf16.mxu0 %v2498
    %2599 = vmatpush1.bf16.msra.mxu0 %v2497
    %2600 = vmatprep.subr.bf16.mxu0 %v2502
    %2601 = vmatpush1.bf16.msra.mxu0 %v2501
    %2602 = vmatprep.subr.bf16.mxu0 %v2506
    %2603 = vmatpush1.bf16.msra.mxu0 %v2505
    %2604 = vmatprep.subr.bf16.mxu0 %v2510
    %2605 = vmatpush1.bf16.msra.mxu0 %v2509
    %2606 = vmatprep.subr.bf16.mxu0 %v2514
    %2607 = vmatpush1.bf16.msra.mxu0 %v2513
    %2608 = vmatprep.subr.bf16.mxu0 %v2518
    %2609 = vmatpush1.bf16.msra.mxu0 %v2517
    %2610 = vmatprep.subr.bf16.mxu0 %v2522
    %2611 = vmatpush1.bf16.msra.mxu0 %v2521
    %2612 = vmatprep.subr.bf16.mxu0 0
    %2613 = vmatpush1.bf16.msra.mxu0 0
    %2614 = vmatprep.subr.bf16.mxu0 0
    %2615 = vmatpush1.bf16.msra.mxu0 0
    %2616 = vmatprep.subr.bf16.mxu0 0
    %2617 = vmatpush1.bf16.msra.mxu0 0
    %2618 = vmatprep.subr.bf16.mxu0 0
    %2619 = vmatpush1.bf16.msra.mxu0 0
    %2620 = vmatprep.subr.bf16.mxu0 0
    %2621 = vmatpush1.bf16.msra.mxu0 0
    %2622 = vmatprep.subr.bf16.mxu0 0
    %2623 = vmatpush1.bf16.msra.mxu0 0
    %2624 = vmatprep.subr.bf16.mxu0 0
    %2625 = vmatpush1.bf16.msra.mxu0 0
    %2626 = vmatprep.subr.bf16.mxu0 0
    %2627 = vmatpush1.bf16.msra.mxu0 0
    %2628 = vmatprep.mubr.bf16.mxu0 0
    %2629 = vmatmul.mubr.bf16.gmra.mrb[0].mxu0 %v2362
    %v2630 = vpop.f32.mrb[0].mxu0
    %v2631 = vadd.f32 0.0, %v2630
    %v2632 = vpop.f32.mrb[0].mxu0
    %v2633 = vadd.f32 0.0, %v2632
    %v2634 = vpop.f32.mrb[0].mxu0
    %v2635 = vpop.f32.mrb[0].mxu0
    %2636 = vdwg.mxu0
    %v2637 = vadd.f32 %v2358, %v2590
    %v2638 = vadd.f32 %v2359, %v2592
    %v2639 = vadd.f32 %v2360, %v2631
    %v2640 = vadd.f32 %v2361, %v2633
    %v2641 = vxor.u32 %v2637, 2147483648
    %v2642 = vmul.f32 %v2641, 1.442695
    %v2643 = vpow.pop %v2642
    %v2644 = vadd.f32 %v2643, 1.0
    %v2645 = vrcp.pop %v2644
    %v2646 = vmul.f32 1.0, %v2645
    %v2647 = vxor.u32 %v2638, 2147483648
    %v2648 = vmul.f32 %v2647, 1.442695
    %v2649 = vpow.pop %v2648
    %v2650 = vadd.f32 %v2649, 1.0
    %v2651 = vrcp.pop %v2650
    %v2652 = vmul.f32 1.0, %v2651
    %v2653 = vtanh.pop %v2639
    %v2654 = vxor.u32 %v2640, 2147483648
    %v2655 = vmul.f32 %v2654, 1.442695
    %v2656 = vpow.pop %v2655
    %v2657 = vadd.f32 %v2656, 1.0
    %v2658 = vrcp.pop %v2657
    %v2659 = vmul.f32 1.0, %v2658
    %v2660 = vmul.f32 %v2652, %v2354
    %v2661 = vmul.f32 %v2646, %v2653
    %v2662 = vadd.f32 %v2660, %v2661
    %v2663 = vtanh.pop %v2662
    %v2664 = vmul.f32 %v2659, %v2663
    %s2665 = sadd.s32 %s43, 6
    %p2666 = scmp.lt.s32.totalorder %s2665, 8
    %s2667 = scalar_select %p2666, 1, 0
    %v2668 = vstv %s2667
    %vm2669 = vcmp.eq.s32.totalorder %v2668, 1
    %v2670 = vsel %vm2669, %v2664, %v2353
    %v2671 = vsel %vm2669, %v2662, %v2354
    %s2672 = scalar_lea.vmem [#allocation2], 48
    %2673 = vst [vmem:[%s2672] sm:$0xff] %v2670
    %s2674 = scalar_lea.vmem [#allocation3], 224
    %v2675 = vld [vmem:[%s2674] sm:$0xff]
    %v2676 = vld [vmem:[%s2674 + $0x8] sm:$0xff]
    %v2677 = vld [vmem:[%s2674 + $0x10] sm:$0xff]
    %v2678 = vld [vmem:[%s2674 + $0x18] sm:$0xff]
    %v2679 = vpack.c.bf16 %v2670, %v2670
    %v2680 = vld [vmem:[%s3] sm:$0xff]
    %v2681 = vld [vmem:[%s3 + $0x8] sm:$0xff]
    %v2682 = vld [vmem:[%s3 + $0x10] sm:$0xff]
    %v2683 = vld [vmem:[%s3 + $0x18] sm:$0xff]
    %v2684 = vld [vmem:[%s3 + $0x20] sm:$0xff]
    %v2685 = vld [vmem:[%s3 + $0x28] sm:$0xff]
    %v2686 = vld [vmem:[%s3 + $0x30] sm:$0xff]
    %v2687 = vld [vmem:[%s3 + $0x38] sm:$0xff]
    %v2688 = vld [vmem:[%s3 + $0x40] sm:$0xff]
    %v2689 = vld [vmem:[%s3 + $0x48] sm:$0xff]
    %v2690 = vld [vmem:[%s3 + $0x50] sm:$0xff]
    %v2691 = vld [vmem:[%s3 + $0x58] sm:$0xff]
    %v2692 = vld [vmem:[%s3 + $0x60] sm:$0xff]
    %v2693 = vld [vmem:[%s3 + $0x68] sm:$0xff]
    %v2694 = vld [vmem:[%s3 + $0x70] sm:$0xff]
    %v2695 = vld [vmem:[%s3 + $0x78] sm:$0xff]
    %v2696 = vld [vmem:[%s3 + $0x80] sm:$0xff]
    %v2697 = vld [vmem:[%s3 + $0x88] sm:$0xff]
    %v2698 = vld [vmem:[%s3 + $0x90] sm:$0xff]
    %v2699 = vld [vmem:[%s3 + $0x98] sm:$0xff]
    %v2700 = vld [vmem:[%s3 + $0xa0] sm:$0xff]
    %v2701 = vld [vmem:[%s3 + $0xa8] sm:$0xff]
    %v2702 = vld [vmem:[%s3 + $0xb0] sm:$0xff]
    %v2703 = vld [vmem:[%s3 + $0xb8] sm:$0xff]
    %v2704 = vld [vmem:[%s3 + $0xc0] sm:$0xff]
    %v2705 = vld [vmem:[%s3 + $0xc8] sm:$0xff]
    %v2706 = vld [vmem:[%s3 + $0xd0] sm:$0xff]
    %v2707 = vld [vmem:[%s3 + $0xd8] sm:$0xff]
    %v2708 = vld [vmem:[%s3 + $0xe0] sm:$0xff]
    %v2709 = vld [vmem:[%s3 + $0xe8] sm:$0xff]
    %v2710 = vld [vmem:[%s3 + $0xf0] sm:$0xff]
    %v2711 = vld [vmem:[%s3 + $0xf8] sm:$0xff]
    %v2744 = vunpack.c.l.b16 %v2680
    %v2745 = vunpack.c.h.b16 %v2680
    %v2746 = vunpack.c.l.b16 %v2681
    %v2747 = vunpack.c.h.b16 %v2681
    %v2748 = vunpack.c.l.b16 %v2682
    %v2749 = vunpack.c.h.b16 %v2682
    %v2750 = vunpack.c.l.b16 %v2683
    %v2751 = vunpack.c.h.b16 %v2683
    %v2752 = vunpack.c.l.b16 %v2684
    %v2753 = vunpack.c.h.b16 %v2684
    %v2754 = vunpack.c.l.b16 %v2685
    %v2755 = vunpack.c.h.b16 %v2685
    %v2756 = vunpack.c.l.b16 %v2686
    %v2757 = vunpack.c.h.b16 %v2686
    %v2758 = vunpack.c.l.b16 %v2687
    %v2759 = vunpack.c.h.b16 %v2687
    %v2760 = vunpack.c.l.b16 %v2688
    %v2761 = vunpack.c.h.b16 %v2688
    %v2762 = vunpack.c.l.b16 %v2689
    %v2763 = vunpack.c.h.b16 %v2689
    %v2764 = vunpack.c.l.b16 %v2690
    %v2765 = vunpack.c.h.b16 %v2690
    %v2766 = vunpack.c.l.b16 %v2691
    %v2767 = vunpack.c.h.b16 %v2691
    %v2768 = vunpack.c.l.b16 %v2692
    %v2769 = vunpack.c.h.b16 %v2692
    %v2770 = vunpack.c.l.b16 %v2693
    %v2771 = vunpack.c.h.b16 %v2693
    %v2772 = vunpack.c.l.b16 %v2694
    %v2773 = vunpack.c.h.b16 %v2694
    %v2774 = vunpack.c.l.b16 %v2695
    %v2775 = vunpack.c.h.b16 %v2695
    %v2776 = vunpack.c.l.b16 %v2696
    %v2777 = vunpack.c.h.b16 %v2696
    %v2778 = vunpack.c.l.b16 %v2697
    %v2779 = vunpack.c.h.b16 %v2697
    %v2780 = vunpack.c.l.b16 %v2698
    %v2781 = vunpack.c.h.b16 %v2698
    %v2782 = vunpack.c.l.b16 %v2699
    %v2783 = vunpack.c.h.b16 %v2699
    %v2784 = vunpack.c.l.b16 %v2700
    %v2785 = vunpack.c.h.b16 %v2700
    %v2786 = vunpack.c.l.b16 %v2701
    %v2787 = vunpack.c.h.b16 %v2701
    %v2788 = vunpack.c.l.b16 %v2702
    %v2789 = vunpack.c.h.b16 %v2702
    %v2790 = vunpack.c.l.b16 %v2703
    %v2791 = vunpack.c.h.b16 %v2703
    %v2792 = vunpack.c.l.b16 %v2704
    %v2793 = vunpack.c.h.b16 %v2704
    %v2794 = vunpack.c.l.b16 %v2705
    %v2795 = vunpack.c.h.b16 %v2705
    %v2796 = vunpack.c.l.b16 %v2706
    %v2797 = vunpack.c.h.b16 %v2706
    %v2798 = vunpack.c.l.b16 %v2707
    %v2799 = vunpack.c.h.b16 %v2707
    %v2800 = vunpack.c.l.b16 %v2708
    %v2801 = vunpack.c.h.b16 %v2708
    %v2802 = vunpack.c.l.b16 %v2709
    %v2803 = vunpack.c.h.b16 %v2709
    %v2804 = vunpack.c.l.b16 %v2710
    %v2805 = vunpack.c.h.b16 %v2710
    %v2806 = vunpack.c.l.b16 %v2711
    %v2807 = vunpack.c.h.b16 %v2711
    %v2808 = vpack.c.b16 %v2748, %v2744
    %v2809 = vpack.c.b16 %v2749, %v2745
    %v2810 = vpack.c.b16 %v2750, %v2746
    %v2811 = vpack.c.b16 %v2751, %v2747
    %v2812 = vpack.c.b16 %v2756, %v2752
    %v2813 = vpack.c.b16 %v2757, %v2753
    %v2814 = vpack.c.b16 %v2758, %v2754
    %v2815 = vpack.c.b16 %v2759, %v2755
    %v2816 = vpack.c.b16 %v2764, %v2760
    %v2817 = vpack.c.b16 %v2765, %v2761
    %v2818 = vpack.c.b16 %v2766, %v2762
    %v2819 = vpack.c.b16 %v2767, %v2763
    %v2820 = vpack.c.b16 %v2772, %v2768
    %v2821 = vpack.c.b16 %v2773, %v2769
    %v2822 = vpack.c.b16 %v2774, %v2770
    %v2823 = vpack.c.b16 %v2775, %v2771
    %v2824 = vpack.c.b16 %v2780, %v2776
    %v2825 = vpack.c.b16 %v2781, %v2777
    %v2826 = vpack.c.b16 %v2782, %v2778
    %v2827 = vpack.c.b16 %v2783, %v2779
    %v2828 = vpack.c.b16 %v2788, %v2784
    %v2829 = vpack.c.b16 %v2789, %v2785
    %v2830 = vpack.c.b16 %v2790, %v2786
    %v2831 = vpack.c.b16 %v2791, %v2787
    %v2832 = vpack.c.b16 %v2796, %v2792
    %v2833 = vpack.c.b16 %v2797, %v2793
    %v2834 = vpack.c.b16 %v2798, %v2794
    %v2835 = vpack.c.b16 %v2799, %v2795
    %v2836 = vpack.c.b16 %v2804, %v2800
    %v2837 = vpack.c.b16 %v2805, %v2801
    %v2838 = vpack.c.b16 %v2806, %v2802
    %v2839 = vpack.c.b16 %v2807, %v2803
    %2872 = vmatprep.subr.bf16.mxu0 %v2809
    %2873 = vmatpush1.bf16.msra.mxu0 %v2808
    %2874 = vmatprep.subr.bf16.mxu0 %v2813
    %2875 = vmatpush1.bf16.msra.mxu0 %v2812
    %2876 = vmatprep.subr.bf16.mxu0 %v2817
    %2877 = vmatpush1.bf16.msra.mxu0 %v2816
    %2878 = vmatprep.subr.bf16.mxu0 %v2821
    %2879 = vmatpush1.bf16.msra.mxu0 %v2820
    %2880 = vmatprep.subr.bf16.mxu0 %v2825
    %2881 = vmatpush1.bf16.msra.mxu0 %v2824
    %2882 = vmatprep.subr.bf16.mxu0 %v2829
    %2883 = vmatpush1.bf16.msra.mxu0 %v2828
    %2884 = vmatprep.subr.bf16.mxu0 %v2833
    %2885 = vmatpush1.bf16.msra.mxu0 %v2832
    %2886 = vmatprep.subr.bf16.mxu0 %v2837
    %2887 = vmatpush1.bf16.msra.mxu0 %v2836
    %2888 = vmatprep.subr.bf16.mxu0 0
    %2889 = vmatpush1.bf16.msra.mxu0 0
    %2890 = vmatprep.subr.bf16.mxu0 0
    %2891 = vmatpush1.bf16.msra.mxu0 0
    %2892 = vmatprep.subr.bf16.mxu0 0
    %2893 = vmatpush1.bf16.msra.mxu0 0
    %2894 = vmatprep.subr.bf16.mxu0 0
    %2895 = vmatpush1.bf16.msra.mxu0 0
    %2896 = vmatprep.subr.bf16.mxu0 0
    %2897 = vmatpush1.bf16.msra.mxu0 0
    %2898 = vmatprep.subr.bf16.mxu0 0
    %2899 = vmatpush1.bf16.msra.mxu0 0
    %2900 = vmatprep.subr.bf16.mxu0 0
    %2901 = vmatpush1.bf16.msra.mxu0 0
    %2902 = vmatprep.subr.bf16.mxu0 0
    %2903 = vmatpush1.bf16.msra.mxu0 0
    %2904 = vmatprep.mubr.bf16.mxu0 0
    %2905 = vmatmul.mubr.bf16.gmra.mrb[0].mxu0 %v2679
    %v2906 = vpop.f32.mrb[0].mxu0
    %v2907 = vadd.f32 0.0, %v2906
    %v2908 = vpop.f32.mrb[0].mxu0
    %v2909 = vadd.f32 0.0, %v2908
    %v2910 = vpop.f32.mrb[0].mxu0
    %v2911 = vpop.f32.mrb[0].mxu0
    %2912 = vdwg.mxu0
    %2913 = vmatprep.subr.bf16.mxu0 %v2811
    %2914 = vmatpush1.bf16.msra.mxu0 %v2810
    %2915 = vmatprep.subr.bf16.mxu0 %v2815
    %2916 = vmatpush1.bf16.msra.mxu0 %v2814
    %2917 = vmatprep.subr.bf16.mxu0 %v2819
    %2918 = vmatpush1.bf16.msra.mxu0 %v2818
    %2919 = vmatprep.subr.bf16.mxu0 %v2823
    %2920 = vmatpush1.bf16.msra.mxu0 %v2822
    %2921 = vmatprep.subr.bf16.mxu0 %v2827
    %2922 = vmatpush1.bf16.msra.mxu0 %v2826
    %2923 = vmatprep.subr.bf16.mxu0 %v2831
    %2924 = vmatpush1.bf16.msra.mxu0 %v2830
    %2925 = vmatprep.subr.bf16.mxu0 %v2835
    %2926 = vmatpush1.bf16.msra.mxu0 %v2834
    %2927 = vmatprep.subr.bf16.mxu0 %v2839
    %2928 = vmatpush1.bf16.msra.mxu0 %v2838
    %2929 = vmatprep.subr.bf16.mxu0 0
    %2930 = vmatpush1.bf16.msra.mxu0 0
    %2931 = vmatprep.subr.bf16.mxu0 0
    %2932 = vmatpush1.bf16.msra.mxu0 0
    %2933 = vmatprep.subr.bf16.mxu0 0
    %2934 = vmatpush1.bf16.msra.mxu0 0
    %2935 = vmatprep.subr.bf16.mxu0 0
    %2936 = vmatpush1.bf16.msra.mxu0 0
    %2937 = vmatprep.subr.bf16.mxu0 0
    %2938 = vmatpush1.bf16.msra.mxu0 0
    %2939 = vmatprep.subr.bf16.mxu0 0
    %2940 = vmatpush1.bf16.msra.mxu0 0
    %2941 = vmatprep.subr.bf16.mxu0 0
    %2942 = vmatpush1.bf16.msra.mxu0 0
    %2943 = vmatprep.subr.bf16.mxu0 0
    %2944 = vmatpush1.bf16.msra.mxu0 0
    %2945 = vmatprep.mubr.bf16.mxu0 0
    %2946 = vmatmul.mubr.bf16.gmra.mrb[0].mxu0 %v2679
    %v2947 = vpop.f32.mrb[0].mxu0
    %v2948 = vadd.f32 0.0, %v2947
    %v2949 = vpop.f32.mrb[0].mxu0
    %v2950 = vadd.f32 0.0, %v2949
    %v2951 = vpop.f32.mrb[0].mxu0
    %v2952 = vpop.f32.mrb[0].mxu0
    %2953 = vdwg.mxu0
    %v2954 = vadd.f32 %v2675, %v2907
    %v2955 = vadd.f32 %v2676, %v2909
    %v2956 = vadd.f32 %v2677, %v2948
    %v2957 = vadd.f32 %v2678, %v2950
    %v2958 = vxor.u32 %v2954, 2147483648
    %v2959 = vmul.f32 %v2958, 1.442695
    %v2960 = vpow.pop %v2959
    %v2961 = vadd.f32 %v2960, 1.0
    %v2962 = vrcp.pop %v2961
    %v2963 = vmul.f32 1.0, %v2962
    %v2964 = vxor.u32 %v2955, 2147483648
    %v2965 = vmul.f32 %v2964, 1.442695
    %v2966 = vpow.pop %v2965
    %v2967 = vadd.f32 %v2966, 1.0
    %v2968 = vrcp.pop %v2967
    %v2969 = vmul.f32 1.0, %v2968
    %v2970 = vtanh.pop %v2956
    %v2971 = vxor.u32 %v2957, 2147483648
    %v2972 = vmul.f32 %v2971, 1.442695
    %v2973 = vpow.pop %v2972
    %v2974 = vadd.f32 %v2973, 1.0
    %v2975 = vrcp.pop %v2974
    %v2976 = vmul.f32 1.0, %v2975
    %v2977 = vmul.f32 %v2969, %v2671
    %v2978 = vmul.f32 %v2963, %v2970
    %v2979 = vadd.f32 %v2977, %v2978
    %v2980 = vtanh.pop %v2979
    %v2981 = vmul.f32 %v2976, %v2980
    %s2982 = sadd.s32 %s43, 7
    %p2983 = scmp.lt.s32.totalorder %s2982, 8
    %s2984 = scalar_select %p2983, 1, 0
    %v2985 = vstv %s2984
    %vm2986 = vcmp.eq.s32.totalorder %v2985, 1
    %v2987 = vsel %vm2986, %v2981, %v2670
    %v2988 = vsel %vm2986, %v2979, %v2671
    %s2989 = scalar_lea.vmem [#allocation2], 56
    %2990 = vst [vmem:[%s2989] sm:$0xff] %v2987
    %2991 = vst [vmem:[%s7] sm:$0xff] %v2987
    %2992 = vst [vmem:[%s8] sm:$0xff] %v2988
    %v2993 = vld [vmem:[#allocation2] sm:$0xff]
    %v2994 = vld [vmem:[#allocation2 + $0x8] sm:$0xff]
    %v2995 = vld [vmem:[#allocation2 + $0x10] sm:$0xff]
    %v2996 = vld [vmem:[#allocation2 + $0x18] sm:$0xff]
    %v2997 = vld [vmem:[#allocation2 + $0x20] sm:$0xff]
    %v2998 = vld [vmem:[#allocation2 + $0x28] sm:$0xff]
    %v2999 = vld [vmem:[#allocation2 + $0x30] sm:$0xff]
    %v3000 = vld [vmem:[#allocation2 + $0x38] sm:$0xff]
    %v3001 = vpack.c.bf16 %v2994, %v2993
    %v3002 = vpack.c.bf16 %v2996, %v2995
    %v3003 = vpack.c.bf16 %v2998, %v2997
    %v3004 = vpack.c.bf16 %v3000, %v2999
    %v3005 = vld [vmem:[%s2] sm:$0xff]
    %v3006 = vld [vmem:[%s2 + $0x8] sm:$0xff]
    %v3007 = vld [vmem:[%s2 + $0x10] sm:$0xff]
    %v3008 = vld [vmem:[%s2 + $0x18] sm:$0xff]
    %v3009 = vld [vmem:[%s2 + $0x20] sm:$0xff]
    %v3010 = vld [vmem:[%s2 + $0x28] sm:$0xff]
    %v3011 = vld [vmem:[%s2 + $0x30] sm:$0xff]
    %v3012 = vld [vmem:[%s2 + $0x38] sm:$0xff]
    %v3013 = vld [vmem:[%s2 + $0x40] sm:$0xff]
    %v3014 = vld [vmem:[%s2 + $0x48] sm:$0xff]
    %v3015 = vld [vmem:[%s2 + $0x50] sm:$0xff]
    %v3016 = vld [vmem:[%s2 + $0x58] sm:$0xff]
    %v3017 = vld [vmem:[%s2 + $0x60] sm:$0xff]
    %v3018 = vld [vmem:[%s2 + $0x68] sm:$0xff]
    %v3019 = vld [vmem:[%s2 + $0x70] sm:$0xff]
    %v3020 = vld [vmem:[%s2 + $0x78] sm:$0xff]
    %v3021 = vld [vmem:[%s2 + $0x80] sm:$0xff]
    %v3022 = vld [vmem:[%s2 + $0x88] sm:$0xff]
    %v3023 = vld [vmem:[%s2 + $0x90] sm:$0xff]
    %v3024 = vld [vmem:[%s2 + $0x98] sm:$0xff]
    %v3025 = vld [vmem:[%s2 + $0xa0] sm:$0xff]
    %v3026 = vld [vmem:[%s2 + $0xa8] sm:$0xff]
    %v3027 = vld [vmem:[%s2 + $0xb0] sm:$0xff]
    %v3028 = vld [vmem:[%s2 + $0xb8] sm:$0xff]
    %v3029 = vld [vmem:[%s2 + $0xc0] sm:$0xff]
    %v3030 = vld [vmem:[%s2 + $0xc8] sm:$0xff]
    %v3031 = vld [vmem:[%s2 + $0xd0] sm:$0xff]
    %v3032 = vld [vmem:[%s2 + $0xd8] sm:$0xff]
    %v3033 = vld [vmem:[%s2 + $0xe0] sm:$0xff]
    %v3034 = vld [vmem:[%s2 + $0xe8] sm:$0xff]
    %v3035 = vld [vmem:[%s2 + $0xf0] sm:$0xff]
    %v3036 = vld [vmem:[%s2 + $0xf8] sm:$0xff]
    %v3037 = vld [vmem:[%s6] sm:$0xf]
    %v3039 = vlaneseq
    %v3040 = vshrl.u32 %v3039, 7
    %v3041 = vsub.s32 0, %v3040
    %v3042 = vrot.slane %v3037, %v3041
    %v3043 = vlaneseq
    %v3044 = vshrl.u32 %v3043, 7
    %v3045 = vsub.s32 1, %v3044
    %v3046 = vrot.slane %v3037, %v3045
    %v3047 = vlaneseq
    %v3048 = vshrl.u32 %v3047, 7
    %v3049 = vsub.s32 2, %v3048
    %v3050 = vrot.slane %v3037, %v3049
    %v3051 = vlaneseq
    %v3052 = vshrl.u32 %v3051, 7
    %v3053 = vsub.s32 3, %v3052
    %v3054 = vrot.slane %v3037, %v3053
    %v3091 = vunpack.c.l.b16 %v3005
    %v3092 = vunpack.c.h.b16 %v3005
    %v3093 = vunpack.c.l.b16 %v3006
    %v3094 = vunpack.c.h.b16 %v3006
    %v3095 = vunpack.c.l.b16 %v3007
    %v3096 = vunpack.c.h.b16 %v3007
    %v3097 = vunpack.c.l.b16 %v3008
    %v3098 = vunpack.c.h.b16 %v3008
    %v3099 = vunpack.c.l.b16 %v3009
    %v3100 = vunpack.c.h.b16 %v3009
    %v3101 = vunpack.c.l.b16 %v3010
    %v3102 = vunpack.c.h.b16 %v3010
    %v3103 = vunpack.c.l.b16 %v3011
    %v3104 = vunpack.c.h.b16 %v3011
    %v3105 = vunpack.c.l.b16 %v3012
    %v3106 = vunpack.c.h.b16 %v3012
    %v3107 = vunpack.c.l.b16 %v3013
    %v3108 = vunpack.c.h.b16 %v3013
    %v3109 = vunpack.c.l.b16 %v3014
    %v3110 = vunpack.c.h.b16 %v3014
    %v3111 = vunpack.c.l.b16 %v3015
    %v3112 = vunpack.c.h.b16 %v3015
    %v3113 = vunpack.c.l.b16 %v3016
    %v3114 = vunpack.c.h.b16 %v3016
    %v3115 = vunpack.c.l.b16 %v3017
    %v3116 = vunpack.c.h.b16 %v3017
    %v3117 = vunpack.c.l.b16 %v3018
    %v3118 = vunpack.c.h.b16 %v3018
    %v3119 = vunpack.c.l.b16 %v3019
    %v3120 = vunpack.c.h.b16 %v3019
    %v3121 = vunpack.c.l.b16 %v3020
    %v3122 = vunpack.c.h.b16 %v3020
    %v3123 = vunpack.c.l.b16 %v3021
    %v3124 = vunpack.c.h.b16 %v3021
    %v3125 = vunpack.c.l.b16 %v3022
    %v3126 = vunpack.c.h.b16 %v3022
    %v3127 = vunpack.c.l.b16 %v3023
    %v3128 = vunpack.c.h.b16 %v3023
    %v3129 = vunpack.c.l.b16 %v3024
    %v3130 = vunpack.c.h.b16 %v3024
    %v3131 = vunpack.c.l.b16 %v3025
    %v3132 = vunpack.c.h.b16 %v3025
    %v3133 = vunpack.c.l.b16 %v3026
    %v3134 = vunpack.c.h.b16 %v3026
    %v3135 = vunpack.c.l.b16 %v3027
    %v3136 = vunpack.c.h.b16 %v3027
    %v3137 = vunpack.c.l.b16 %v3028
    %v3138 = vunpack.c.h.b16 %v3028
    %v3139 = vunpack.c.l.b16 %v3029
    %v3140 = vunpack.c.h.b16 %v3029
    %v3141 = vunpack.c.l.b16 %v3030
    %v3142 = vunpack.c.h.b16 %v3030
    %v3143 = vunpack.c.l.b16 %v3031
    %v3144 = vunpack.c.h.b16 %v3031
    %v3145 = vunpack.c.l.b16 %v3032
    %v3146 = vunpack.c.h.b16 %v3032
    %v3147 = vunpack.c.l.b16 %v3033
    %v3148 = vunpack.c.h.b16 %v3033
    %v3149 = vunpack.c.l.b16 %v3034
    %v3150 = vunpack.c.h.b16 %v3034
    %v3151 = vunpack.c.l.b16 %v3035
    %v3152 = vunpack.c.h.b16 %v3035
    %v3153 = vunpack.c.l.b16 %v3036
    %v3154 = vunpack.c.h.b16 %v3036
    %v3155 = vpack.c.b16 %v3095, %v3091
    %v3156 = vpack.c.b16 %v3096, %v3092
    %v3157 = vpack.c.b16 %v3097, %v3093
    %v3158 = vpack.c.b16 %v3098, %v3094
    %v3159 = vpack.c.b16 %v3103, %v3099
    %v3160 = vpack.c.b16 %v3104, %v3100
    %v3161 = vpack.c.b16 %v3105, %v3101
    %v3162 = vpack.c.b16 %v3106, %v3102
    %v3163 = vpack.c.b16 %v3111, %v3107
    %v3164 = vpack.c.b16 %v3112, %v3108
    %v3165 = vpack.c.b16 %v3113, %v3109
    %v3166 = vpack.c.b16 %v3114, %v3110
    %v3167 = vpack.c.b16 %v3119, %v3115
    %v3168 = vpack.c.b16 %v3120, %v3116
    %v3169 = vpack.c.b16 %v3121, %v3117
    %v3170 = vpack.c.b16 %v3122, %v3118
    %v3171 = vpack.c.b16 %v3127, %v3123
    %v3172 = vpack.c.b16 %v3128, %v3124
    %v3173 = vpack.c.b16 %v3129, %v3125
    %v3174 = vpack.c.b16 %v3130, %v3126
    %v3175 = vpack.c.b16 %v3135, %v3131
    %v3176 = vpack.c.b16 %v3136, %v3132
    %v3177 = vpack.c.b16 %v3137, %v3133
    %v3178 = vpack.c.b16 %v3138, %v3134
    %v3179 = vpack.c.b16 %v3143, %v3139
    %v3180 = vpack.c.b16 %v3144, %v3140
    %v3181 = vpack.c.b16 %v3145, %v3141
    %v3182 = vpack.c.b16 %v3146, %v3142
    %v3183 = vpack.c.b16 %v3151, %v3147
    %v3184 = vpack.c.b16 %v3152, %v3148
    %v3185 = vpack.c.b16 %v3153, %v3149
    %v3186 = vpack.c.b16 %v3154, %v3150
    %3219 = vmatprep.subr.bf16.mxu0 %v3156
    %3220 = vmatpush1.bf16.msra.mxu0 %v3155
    %3221 = vmatprep.subr.bf16.mxu0 %v3160
    %3222 = vmatpush1.bf16.msra.mxu0 %v3159
    %3223 = vmatprep.subr.bf16.mxu0 %v3164
    %3224 = vmatpush1.bf16.msra.mxu0 %v3163
    %3225 = vmatprep.subr.bf16.mxu0 %v3168
    %3226 = vmatpush1.bf16.msra.mxu0 %v3167
    %3227 = vmatprep.subr.bf16.mxu0 %v3172
    %3228 = vmatpush1.bf16.msra.mxu0 %v3171
    %3229 = vmatprep.subr.bf16.mxu0 %v3176
    %3230 = vmatpush1.bf16.msra.mxu0 %v3175
    %3231 = vmatprep.subr.bf16.mxu0 %v3180
    %3232 = vmatpush1.bf16.msra.mxu0 %v3179
    %3233 = vmatprep.subr.bf16.mxu0 %v3184
    %3234 = vmatpush1.bf16.msra.mxu0 %v3183
    %3235 = vmatprep.subr.bf16.mxu0 0
    %3236 = vmatpush1.bf16.msra.mxu0 0
    %3237 = vmatprep.subr.bf16.mxu0 0
    %3238 = vmatpush1.bf16.msra.mxu0 0
    %3239 = vmatprep.subr.bf16.mxu0 0
    %3240 = vmatpush1.bf16.msra.mxu0 0
    %3241 = vmatprep.subr.bf16.mxu0 0
    %3242 = vmatpush1.bf16.msra.mxu0 0
    %3243 = vmatprep.subr.bf16.mxu0 0
    %3244 = vmatpush1.bf16.msra.mxu0 0
    %3245 = vmatprep.subr.bf16.mxu0 0
    %3246 = vmatpush1.bf16.msra.mxu0 0
    %3247 = vmatprep.subr.bf16.mxu0 0
    %3248 = vmatpush1.bf16.msra.mxu0 0
    %3249 = vmatprep.subr.bf16.mxu0 0
    %3250 = vmatpush1.bf16.msra.mxu0 0
    %3251 = vmatprep.mubr.bf16.mxu0 0
    %3252 = vmatmul.mubr.bf16.gmra.mrb[0].mxu0 %v3001
    %v3253 = vpop.f32.mrb[0].mxu0
    %v3254 = vadd.f32 %v3042, %v3253
    %v3255 = vpop.f32.mrb[0].mxu0
    %v3256 = vadd.f32 %v3046, %v3255
    %v3257 = vpop.f32.mrb[0].mxu0
    %v3258 = vadd.f32 %v3042, %v3257
    %v3259 = vpop.f32.mrb[0].mxu0
    %v3260 = vadd.f32 %v3046, %v3259
    %3261 = vmatprep.mubr.bf16.mxu0 0
    %3262 = vmatmul.mubr.bf16.gmra.mrb[0].mxu0 %v3002
    %v3263 = vpop.f32.mrb[0].mxu0
    %v3264 = vadd.f32 %v3042, %v3263
    %v3265 = vpop.f32.mrb[0].mxu0
    %v3266 = vadd.f32 %v3046, %v3265
    %v3267 = vpop.f32.mrb[0].mxu0
    %v3268 = vadd.f32 %v3042, %v3267
    %v3269 = vpop.f32.mrb[0].mxu0
    %v3270 = vadd.f32 %v3046, %v3269
    %3271 = vmatprep.mubr.bf16.mxu0 0
    %3272 = vmatmul.mubr.bf16.gmra.mrb[0].mxu0 %v3003
    %v3273 = vpop.f32.mrb[0].mxu0
    %v3274 = vadd.f32 %v3042, %v3273
    %v3275 = vpop.f32.mrb[0].mxu0
    %v3276 = vadd.f32 %v3046, %v3275
    %v3277 = vpop.f32.mrb[0].mxu0
    %v3278 = vadd.f32 %v3042, %v3277
    %v3279 = vpop.f32.mrb[0].mxu0
    %v3280 = vadd.f32 %v3046, %v3279
    %3281 = vmatprep.mubr.bf16.mxu0 0
    %3282 = vmatmul.mubr.bf16.gmra.mrb[0].mxu0 %v3004
    %v3283 = vpop.f32.mrb[0].mxu0
    %v3284 = vadd.f32 %v3042, %v3283
    %v3285 = vpop.f32.mrb[0].mxu0
    %v3286 = vadd.f32 %v3046, %v3285
    %v3287 = vpop.f32.mrb[0].mxu0
    %v3288 = vadd.f32 %v3042, %v3287
    %v3289 = vpop.f32.mrb[0].mxu0
    %v3290 = vadd.f32 %v3046, %v3289
    %3291 = vdwg.mxu0
    %3292 = vmatprep.subr.bf16.mxu0 %v3158
    %3293 = vmatpush1.bf16.msra.mxu0 %v3157
    %3294 = vmatprep.subr.bf16.mxu0 %v3162
    %3295 = vmatpush1.bf16.msra.mxu0 %v3161
    %3296 = vmatprep.subr.bf16.mxu0 %v3166
    %3297 = vmatpush1.bf16.msra.mxu0 %v3165
    %3298 = vmatprep.subr.bf16.mxu0 %v3170
    %3299 = vmatpush1.bf16.msra.mxu0 %v3169
    %3300 = vmatprep.subr.bf16.mxu0 %v3174
    %3301 = vmatpush1.bf16.msra.mxu0 %v3173
    %3302 = vmatprep.subr.bf16.mxu0 %v3178
    %3303 = vmatpush1.bf16.msra.mxu0 %v3177
    %3304 = vmatprep.subr.bf16.mxu0 %v3182
    %3305 = vmatpush1.bf16.msra.mxu0 %v3181
    %3306 = vmatprep.subr.bf16.mxu0 %v3186
    %3307 = vmatpush1.bf16.msra.mxu0 %v3185
    %3308 = vmatprep.subr.bf16.mxu0 0
    %3309 = vmatpush1.bf16.msra.mxu0 0
    %3310 = vmatprep.subr.bf16.mxu0 0
    %3311 = vmatpush1.bf16.msra.mxu0 0
    %3312 = vmatprep.subr.bf16.mxu0 0
    %3313 = vmatpush1.bf16.msra.mxu0 0
    %3314 = vmatprep.subr.bf16.mxu0 0
    %3315 = vmatpush1.bf16.msra.mxu0 0
    %3316 = vmatprep.subr.bf16.mxu0 0
    %3317 = vmatpush1.bf16.msra.mxu0 0
    %3318 = vmatprep.subr.bf16.mxu0 0
    %3319 = vmatpush1.bf16.msra.mxu0 0
    %3320 = vmatprep.subr.bf16.mxu0 0
    %3321 = vmatpush1.bf16.msra.mxu0 0
    %3322 = vmatprep.subr.bf16.mxu0 0
    %3323 = vmatpush1.bf16.msra.mxu0 0
    %3324 = vmatprep.mubr.bf16.mxu0 0
    %3325 = vmatmul.mubr.bf16.gmra.mrb[0].mxu0 %v3001
    %v3326 = vpop.f32.mrb[0].mxu0
    %v3327 = vadd.f32 %v3050, %v3326
    %v3328 = vpop.f32.mrb[0].mxu0
    %v3329 = vadd.f32 %v3054, %v3328
    %v3330 = vpop.f32.mrb[0].mxu0
    %v3331 = vadd.f32 %v3050, %v3330
    %v3332 = vpop.f32.mrb[0].mxu0
    %v3333 = vadd.f32 %v3054, %v3332
    %3334 = vmatprep.mubr.bf16.mxu0 0
    %3335 = vmatmul.mubr.bf16.gmra.mrb[0].mxu0 %v3002
    %v3336 = vpop.f32.mrb[0].mxu0
    %v3337 = vadd.f32 %v3050, %v3336
    %v3338 = vpop.f32.mrb[0].mxu0
    %v3339 = vadd.f32 %v3054, %v3338
    %v3340 = vpop.f32.mrb[0].mxu0
    %v3341 = vadd.f32 %v3050, %v3340
    %v3342 = vpop.f32.mrb[0].mxu0
    %v3343 = vadd.f32 %v3054, %v3342
    %3344 = vmatprep.mubr.bf16.mxu0 0
    %3345 = vmatmul.mubr.bf16.gmra.mrb[0].mxu0 %v3003
    %v3346 = vpop.f32.mrb[0].mxu0
    %v3347 = vadd.f32 %v3050, %v3346
    %v3348 = vpop.f32.mrb[0].mxu0
    %v3349 = vadd.f32 %v3054, %v3348
    %v3350 = vpop.f32.mrb[0].mxu0
    %v3351 = vadd.f32 %v3050, %v3350
    %v3352 = vpop.f32.mrb[0].mxu0
    %v3353 = vadd.f32 %v3054, %v3352
    %3354 = vmatprep.mubr.bf16.mxu0 0
    %3355 = vmatmul.mubr.bf16.gmra.mrb[0].mxu0 %v3004
    %v3356 = vpop.f32.mrb[0].mxu0
    %v3357 = vadd.f32 %v3050, %v3356
    %v3358 = vpop.f32.mrb[0].mxu0
    %v3359 = vadd.f32 %v3054, %v3358
    %v3360 = vpop.f32.mrb[0].mxu0
    %v3361 = vadd.f32 %v3050, %v3360
    %v3362 = vpop.f32.mrb[0].mxu0
    %v3363 = vadd.f32 %v3054, %v3362
    %3364 = vdwg.mxu0
    %3365 = vst [vmem:[#allocation3] sm:$0xff] %v3254
    %3366 = vst [vmem:[#allocation3 + $0x8] sm:$0xff] %v3256
    %3367 = vst [vmem:[#allocation3 + $0x10] sm:$0xff] %v3327
    %3368 = vst [vmem:[#allocation3 + $0x18] sm:$0xff] %v3329
    %3369 = vst [vmem:[#allocation3 + $0x20] sm:$0xff] %v3258
    %3370 = vst [vmem:[#allocation3 + $0x28] sm:$0xff] %v3260
    %3371 = vst [vmem:[#allocation3 + $0x30] sm:$0xff] %v3331
    %3372 = vst [vmem:[#allocation3 + $0x38] sm:$0xff] %v3333
    %3373 = vst [vmem:[#allocation3 + $0x40] sm:$0xff] %v3264
    %3374 = vst [vmem:[#allocation3 + $0x48] sm:$0xff] %v3266
    %3375 = vst [vmem:[#allocation3 + $0x50] sm:$0xff] %v3337
    %3376 = vst [vmem:[#allocation3 + $0x58] sm:$0xff] %v3339
    %3377 = vst [vmem:[#allocation3 + $0x60] sm:$0xff] %v3268
    %3378 = vst [vmem:[#allocation3 + $0x68] sm:$0xff] %v3270
    %3379 = vst [vmem:[#allocation3 + $0x70] sm:$0xff] %v3341
    %3380 = vst [vmem:[#allocation3 + $0x78] sm:$0xff] %v3343
    %3381 = vst [vmem:[#allocation3 + $0x80] sm:$0xff] %v3274
    %3382 = vst [vmem:[#allocation3 + $0x88] sm:$0xff] %v3276
    %3383 = vst [vmem:[#allocation3 + $0x90] sm:$0xff] %v3347
    %3384 = vst [vmem:[#allocation3 + $0x98] sm:$0xff] %v3349
    %3385 = vst [vmem:[#allocation3 + $0xa0] sm:$0xff] %v3278
    %3386 = vst [vmem:[#allocation3 + $0xa8] sm:$0xff] %v3280
    %3387 = vst [vmem:[#allocation3 + $0xb0] sm:$0xff] %v3351
    %3388 = vst [vmem:[#allocation3 + $0xb8] sm:$0xff] %v3353
    %3389 = vst [vmem:[#allocation3 + $0xc0] sm:$0xff] %v3284
    %3390 = vst [vmem:[#allocation3 + $0xc8] sm:$0xff] %v3286
    %3391 = vst [vmem:[#allocation3 + $0xd0] sm:$0xff] %v3357
    %3392 = vst [vmem:[#allocation3 + $0xd8] sm:$0xff] %v3359
    %3393 = vst [vmem:[#allocation3 + $0xe0] sm:$0xff] %v3288
    %3394 = vst [vmem:[#allocation3 + $0xe8] sm:$0xff] %v3290
    %3395 = vst [vmem:[#allocation3 + $0xf0] sm:$0xff] %v3361
    %3396 = vst [vmem:[#allocation3 + $0xf8] sm:$0xff] %v3363
    %s3397 = scalar_lea.vmem %s7, 8
    %v3398 = vld [vmem:[%s3397] sm:$0xff]
    %s3399 = scalar_lea.vmem %s8, 8
    %v3400 = vld [vmem:[%s3399] sm:$0xff]
    %v3401 = vld [vmem:[#allocation3] sm:$0xff]
    %v3402 = vld [vmem:[#allocation3 + $0x8] sm:$0xff]
    %v3403 = vld [vmem:[#allocation3 + $0x10] sm:$0xff]
    %v3404 = vld [vmem:[#allocation3 + $0x18] sm:$0xff]
    %v3405 = vpack.c.bf16 %v3398, %v3398
    %v3406 = vld [vmem:[#allocation4] sm:$0xff]
    %v3407 = vld [vmem:[#allocation4 + $0x8] sm:$0xff]
    %v3408 = vld [vmem:[#allocation4 + $0x10] sm:$0xff]
    %v3409 = vld [vmem:[#allocation4 + $0x18] sm:$0xff]
    %v3410 = vld [vmem:[#allocation4 + $0x20] sm:$0xff]
    %v3411 = vld [vmem:[#allocation4 + $0x28] sm:$0xff]
    %v3412 = vld [vmem:[#allocation4 + $0x30] sm:$0xff]
    %v3413 = vld [vmem:[#allocation4 + $0x38] sm:$0xff]
    %v3414 = vld [vmem:[#allocation4 + $0x40] sm:$0xff]
    %v3415 = vld [vmem:[#allocation4 + $0x48] sm:$0xff]
    %v3416 = vld [vmem:[#allocation4 + $0x50] sm:$0xff]
    %v3417 = vld [vmem:[#allocation4 + $0x58] sm:$0xff]
    %v3418 = vld [vmem:[#allocation4 + $0x60] sm:$0xff]
    %v3419 = vld [vmem:[#allocation4 + $0x68] sm:$0xff]
    %v3420 = vld [vmem:[#allocation4 + $0x70] sm:$0xff]
    %v3421 = vld [vmem:[#allocation4 + $0x78] sm:$0xff]
    %v3422 = vld [vmem:[#allocation4 + $0x80] sm:$0xff]
    %v3423 = vld [vmem:[#allocation4 + $0x88] sm:$0xff]
    %v3424 = vld [vmem:[#allocation4 + $0x90] sm:$0xff]
    %v3425 = vld [vmem:[#allocation4 + $0x98] sm:$0xff]
    %v3426 = vld [vmem:[#allocation4 + $0xa0] sm:$0xff]
    %v3427 = vld [vmem:[#allocation4 + $0xa8] sm:$0xff]
    %v3428 = vld [vmem:[#allocation4 + $0xb0] sm:$0xff]
    %v3429 = vld [vmem:[#allocation4 + $0xb8] sm:$0xff]
    %v3430 = vld [vmem:[#allocation4 + $0xc0] sm:$0xff]
    %v3431 = vld [vmem:[#allocation4 + $0xc8] sm:$0xff]
    %v3432 = vld [vmem:[#allocation4 + $0xd0] sm:$0xff]
    %v3433 = vld [vmem:[#allocation4 + $0xd8] sm:$0xff]
    %v3434 = vld [vmem:[#allocation4 + $0xe0] sm:$0xff]
    %v3435 = vld [vmem:[#allocation4 + $0xe8] sm:$0xff]
    %v3436 = vld [vmem:[#allocation4 + $0xf0] sm:$0xff]
    %v3437 = vld [vmem:[#allocation4 + $0xf8] sm:$0xff]
    %v3470 = vunpack.c.l.b16 %v3406
    %v3471 = vunpack.c.h.b16 %v3406
    %v3472 = vunpack.c.l.b16 %v3407
    %v3473 = vunpack.c.h.b16 %v3407
    %v3474 = vunpack.c.l.b16 %v3408
    %v3475 = vunpack.c.h.b16 %v3408
    %v3476 = vunpack.c.l.b16 %v3409
    %v3477 = vunpack.c.h.b16 %v3409
    %v3478 = vunpack.c.l.b16 %v3410
    %v3479 = vunpack.c.h.b16 %v3410
    %v3480 = vunpack.c.l.b16 %v3411
    %v3481 = vunpack.c.h.b16 %v3411
    %v3482 = vunpack.c.l.b16 %v3412
    %v3483 = vunpack.c.h.b16 %v3412
    %v3484 = vunpack.c.l.b16 %v3413
    %v3485 = vunpack.c.h.b16 %v3413
    %v3486 = vunpack.c.l.b16 %v3414
    %v3487 = vunpack.c.h.b16 %v3414
    %v3488 = vunpack.c.l.b16 %v3415
    %v3489 = vunpack.c.h.b16 %v3415
    %v3490 = vunpack.c.l.b16 %v3416
    %v3491 = vunpack.c.h.b16 %v3416
    %v3492 = vunpack.c.l.b16 %v3417
    %v3493 = vunpack.c.h.b16 %v3417
    %v3494 = vunpack.c.l.b16 %v3418
    %v3495 = vunpack.c.h.b16 %v3418
    %v3496 = vunpack.c.l.b16 %v3419
    %v3497 = vunpack.c.h.b16 %v3419
    %v3498 = vunpack.c.l.b16 %v3420
    %v3499 = vunpack.c.h.b16 %v3420
    %v3500 = vunpack.c.l.b16 %v3421
    %v3501 = vunpack.c.h.b16 %v3421
    %v3502 = vunpack.c.l.b16 %v3422
    %v3503 = vunpack.c.h.b16 %v3422
    %v3504 = vunpack.c.l.b16 %v3423
    %v3505 = vunpack.c.h.b16 %v3423
    %v3506 = vunpack.c.l.b16 %v3424
    %v3507 = vunpack.c.h.b16 %v3424
    %v3508 = vunpack.c.l.b16 %v3425
    %v3509 = vunpack.c.h.b16 %v3425
    %v3510 = vunpack.c.l.b16 %v3426
    %v3511 = vunpack.c.h.b16 %v3426
    %v3512 = vunpack.c.l.b16 %v3427
    %v3513 = vunpack.c.h.b16 %v3427
    %v3514 = vunpack.c.l.b16 %v3428
    %v3515 = vunpack.c.h.b16 %v3428
    %v3516 = vunpack.c.l.b16 %v3429
    %v3517 = vunpack.c.h.b16 %v3429
    %v3518 = vunpack.c.l.b16 %v3430
    %v3519 = vunpack.c.h.b16 %v3430
    %v3520 = vunpack.c.l.b16 %v3431
    %v3521 = vunpack.c.h.b16 %v3431
    %v3522 = vunpack.c.l.b16 %v3432
    %v3523 = vunpack.c.h.b16 %v3432
    %v3524 = vunpack.c.l.b16 %v3433
    %v3525 = vunpack.c.h.b16 %v3433
    %v3526 = vunpack.c.l.b16 %v3434
    %v3527 = vunpack.c.h.b16 %v3434
    %v3528 = vunpack.c.l.b16 %v3435
    %v3529 = vunpack.c.h.b16 %v3435
    %v3530 = vunpack.c.l.b16 %v3436
    %v3531 = vunpack.c.h.b16 %v3436
    %v3532 = vunpack.c.l.b16 %v3437
    %v3533 = vunpack.c.h.b16 %v3437
    %v3534 = vpack.c.b16 %v3474, %v3470
    %v3535 = vpack.c.b16 %v3475, %v3471
    %v3536 = vpack.c.b16 %v3476, %v3472
    %v3537 = vpack.c.b16 %v3477, %v3473
    %v3538 = vpack.c.b16 %v3482, %v3478
    %v3539 = vpack.c.b16 %v3483, %v3479
    %v3540 = vpack.c.b16 %v3484, %v3480
    %v3541 = vpack.c.b16 %v3485, %v3481
    %v3542 = vpack.c.b16 %v3490, %v3486
    %v3543 = vpack.c.b16 %v3491, %v3487
    %v3544 = vpack.c.b16 %v3492, %v3488
    %v3545 = vpack.c.b16 %v3493, %v3489
    %v3546 = vpack.c.b16 %v3498, %v3494
    %v3547 = vpack.c.b16 %v3499, %v3495
    %v3548 = vpack.c.b16 %v3500, %v3496
    %v3549 = vpack.c.b16 %v3501, %v3497
    %v3550 = vpack.c.b16 %v3506, %v3502
    %v3551 = vpack.c.b16 %v3507, %v3503
    %v3552 = vpack.c.b16 %v3508, %v3504
    %v3553 = vpack.c.b16 %v3509, %v3505
    %v3554 = vpack.c.b16 %v3514, %v3510
    %v3555 = vpack.c.b16 %v3515, %v3511
    %v3556 = vpack.c.b16 %v3516, %v3512
    %v3557 = vpack.c.b16 %v3517, %v3513
    %v3558 = vpack.c.b16 %v3522, %v3518
    %v3559 = vpack.c.b16 %v3523, %v3519
    %v3560 = vpack.c.b16 %v3524, %v3520
    %v3561 = vpack.c.b16 %v3525, %v3521
    %v3562 = vpack.c.b16 %v3530, %v3526
    %v3563 = vpack.c.b16 %v3531, %v3527
    %v3564 = vpack.c.b16 %v3532, %v3528
    %v3565 = vpack.c.b16 %v3533, %v3529
    %3598 = vmatprep.subr.bf16.mxu0 %v3535
    %3599 = vmatpush1.bf16.msra.mxu0 %v3534
    %3600 = vmatprep.subr.bf16.mxu0 %v3539
    %3601 = vmatpush1.bf16.msra.mxu0 %v3538
    %3602 = vmatprep.subr.bf16.mxu0 %v3543
    %3603 = vmatpush1.bf16.msra.mxu0 %v3542
    %3604 = vmatprep.subr.bf16.mxu0 %v3547
    %3605 = vmatpush1.bf16.msra.mxu0 %v3546
    %3606 = vmatprep.subr.bf16.mxu0 %v3551
    %3607 = vmatpush1.bf16.msra.mxu0 %v3550
    %3608 = vmatprep.subr.bf16.mxu0 %v3555
    %3609 = vmatpush1.bf16.msra.mxu0 %v3554
    %3610 = vmatprep.subr.bf16.mxu0 %v3559
    %3611 = vmatpush1.bf16.msra.mxu0 %v3558
    %3612 = vmatprep.subr.bf16.mxu0 %v3563
    %3613 = vmatpush1.bf16.msra.mxu0 %v3562
    %3614 = vmatprep.subr.bf16.mxu0 0
    %3615 = vmatpush1.bf16.msra.mxu0 0
    %3616 = vmatprep.subr.bf16.mxu0 0
    %3617 = vmatpush1.bf16.msra.mxu0 0
    %3618 = vmatprep.subr.bf16.mxu0 0
    %3619 = vmatpush1.bf16.msra.mxu0 0
    %3620 = vmatprep.subr.bf16.mxu0 0
    %3621 = vmatpush1.bf16.msra.mxu0 0
    %3622 = vmatprep.subr.bf16.mxu0 0
    %3623 = vmatpush1.bf16.msra.mxu0 0
    %3624 = vmatprep.subr.bf16.mxu0 0
    %3625 = vmatpush1.bf16.msra.mxu0 0
    %3626 = vmatprep.subr.bf16.mxu0 0
    %3627 = vmatpush1.bf16.msra.mxu0 0
    %3628 = vmatprep.subr.bf16.mxu0 0
    %3629 = vmatpush1.bf16.msra.mxu0 0
    %3630 = vmatprep.mubr.bf16.mxu0 0
    %3631 = vmatmul.mubr.bf16.gmra.mrb[0].mxu0 %v3405
    %v3632 = vpop.f32.mrb[0].mxu0
    %v3633 = vadd.f32 0.0, %v3632
    %v3634 = vpop.f32.mrb[0].mxu0
    %v3635 = vadd.f32 0.0, %v3634
    %v3636 = vpop.f32.mrb[0].mxu0
    %v3637 = vpop.f32.mrb[0].mxu0
    %3638 = vdwg.mxu0
    %3639 = vmatprep.subr.bf16.mxu0 %v3537
    %3640 = vmatpush1.bf16.msra.mxu0 %v3536
    %3641 = vmatprep.subr.bf16.mxu0 %v3541
    %3642 = vmatpush1.bf16.msra.mxu0 %v3540
    %3643 = vmatprep.subr.bf16.mxu0 %v3545
    %3644 = vmatpush1.bf16.msra.mxu0 %v3544
    %3645 = vmatprep.subr.bf16.mxu0 %v3549
    %3646 = vmatpush1.bf16.msra.mxu0 %v3548
    %3647 = vmatprep.subr.bf16.mxu0 %v3553
    %3648 = vmatpush1.bf16.msra.mxu0 %v3552
    %3649 = vmatprep.subr.bf16.mxu0 %v3557
    %3650 = vmatpush1.bf16.msra.mxu0 %v3556
    %3651 = vmatprep.subr.bf16.mxu0 %v3561
    %3652 = vmatpush1.bf16.msra.mxu0 %v3560
    %3653 = vmatprep.subr.bf16.mxu0 %v3565
    %3654 = vmatpush1.bf16.msra.mxu0 %v3564
    %3655 = vmatprep.subr.bf16.mxu0 0
    %3656 = vmatpush1.bf16.msra.mxu0 0
    %3657 = vmatprep.subr.bf16.mxu0 0
    %3658 = vmatpush1.bf16.msra.mxu0 0
    %3659 = vmatprep.subr.bf16.mxu0 0
    %3660 = vmatpush1.bf16.msra.mxu0 0
    %3661 = vmatprep.subr.bf16.mxu0 0
    %3662 = vmatpush1.bf16.msra.mxu0 0
    %3663 = vmatprep.subr.bf16.mxu0 0
    %3664 = vmatpush1.bf16.msra.mxu0 0
    %3665 = vmatprep.subr.bf16.mxu0 0
    %3666 = vmatpush1.bf16.msra.mxu0 0
    %3667 = vmatprep.subr.bf16.mxu0 0
    %3668 = vmatpush1.bf16.msra.mxu0 0
    %3669 = vmatprep.subr.bf16.mxu0 0
    %3670 = vmatpush1.bf16.msra.mxu0 0
    %3671 = vmatprep.mubr.bf16.mxu0 0
    %3672 = vmatmul.mubr.bf16.gmra.mrb[0].mxu0 %v3405
    %v3673 = vpop.f32.mrb[0].mxu0
    %v3674 = vadd.f32 0.0, %v3673
    %v3675 = vpop.f32.mrb[0].mxu0
    %v3676 = vadd.f32 0.0, %v3675
    %v3677 = vpop.f32.mrb[0].mxu0
    %v3678 = vpop.f32.mrb[0].mxu0
    %3679 = vdwg.mxu0
    %v3680 = vadd.f32 %v3401, %v3633
    %v3681 = vadd.f32 %v3402, %v3635
    %v3682 = vadd.f32 %v3403, %v3674
    %v3683 = vadd.f32 %v3404, %v3676
    %v3684 = vxor.u32 %v3680, 2147483648
    %v3685 = vmul.f32 %v3684, 1.442695
    %v3686 = vpow.pop %v3685
    %v3687 = vadd.f32 %v3686, 1.0
    %v3688 = vrcp.pop %v3687
    %v3689 = vmul.f32 1.0, %v3688
    %v3690 = vxor.u32 %v3681, 2147483648
    %v3691 = vmul.f32 %v3690, 1.442695
    %v3692 = vpow.pop %v3691
    %v3693 = vadd.f32 %v3692, 1.0
    %v3694 = vrcp.pop %v3693
    %v3695 = vmul.f32 1.0, %v3694
    %v3696 = vtanh.pop %v3682
    %v3697 = vxor.u32 %v3683, 2147483648
    %v3698 = vmul.f32 %v3697, 1.442695
    %v3699 = vpow.pop %v3698
    %v3700 = vadd.f32 %v3699, 1.0
    %v3701 = vrcp.pop %v3700
    %v3702 = vmul.f32 1.0, %v3701
    %v3703 = vmul.f32 %v3695, %v3400
    %v3704 = vmul.f32 %v3689, %v3696
    %v3705 = vadd.f32 %v3703, %v3704
    %v3706 = vtanh.pop %v3705
    %v3707 = vmul.f32 %v3702, %v3706
    %v3708 = vsel %vm768, %v3707, %v3398
    %v3709 = vsel %vm768, %v3705, %v3400
    %v3710 = vld [vmem:[%s772] sm:$0xff]
    %v3711 = vld [vmem:[%s772 + $0x8] sm:$0xff]
    %v3712 = vld [vmem:[%s772 + $0x10] sm:$0xff]
    %v3713 = vld [vmem:[%s772 + $0x18] sm:$0xff]
    %v3714 = vpack.c.bf16 %v3708, %v3708
    %3715 = vmatprep.subr.bf16.mxu0 %v3535
    %3716 = vmatpush1.bf16.msra.mxu0 %v3534
    %3717 = vmatprep.subr.bf16.mxu0 %v3539
    %3718 = vmatpush1.bf16.msra.mxu0 %v3538
    %3719 = vmatprep.subr.bf16.mxu0 %v3543
    %3720 = vmatpush1.bf16.msra.mxu0 %v3542
    %3721 = vmatprep.subr.bf16.mxu0 %v3547
    %3722 = vmatpush1.bf16.msra.mxu0 %v3546
    %3723 = vmatprep.subr.bf16.mxu0 %v3551
    %3724 = vmatpush1.bf16.msra.mxu0 %v3550
    %3725 = vmatprep.subr.bf16.mxu0 %v3555
    %3726 = vmatpush1.bf16.msra.mxu0 %v3554
    %3727 = vmatprep.subr.bf16.mxu0 %v3559
    %3728 = vmatpush1.bf16.msra.mxu0 %v3558
    %3729 = vmatprep.subr.bf16.mxu0 %v3563
    %3730 = vmatpush1.bf16.msra.mxu0 %v3562
    %3731 = vmatprep.subr.bf16.mxu0 0
    %3732 = vmatpush1.bf16.msra.mxu0 0
    %3733 = vmatprep.subr.bf16.mxu0 0
    %3734 = vmatpush1.bf16.msra.mxu0 0
    %3735 = vmatprep.subr.bf16.mxu0 0
    %3736 = vmatpush1.bf16.msra.mxu0 0
    %3737 = vmatprep.subr.bf16.mxu0 0
    %3738 = vmatpush1.bf16.msra.mxu0 0
    %3739 = vmatprep.subr.bf16.mxu0 0
    %3740 = vmatpush1.bf16.msra.mxu0 0
    %3741 = vmatprep.subr.bf16.mxu0 0
    %3742 = vmatpush1.bf16.msra.mxu0 0
    %3743 = vmatprep.subr.bf16.mxu0 0
    %3744 = vmatpush1.bf16.msra.mxu0 0
    %3745 = vmatprep.subr.bf16.mxu0 0
    %3746 = vmatpush1.bf16.msra.mxu0 0
    %3747 = vmatprep.mubr.bf16.mxu0 0
    %3748 = vmatmul.mubr.bf16.gmra.mrb[0].mxu0 %v3714
    %v3749 = vpop.f32.mrb[0].mxu0
    %v3750 = vadd.f32 0.0, %v3749
    %v3751 = vpop.f32.mrb[0].mxu0
    %v3752 = vadd.f32 0.0, %v3751
    %v3753 = vpop.f32.mrb[0].mxu0
    %v3754 = vpop.f32.mrb[0].mxu0
    %3755 = vdwg.mxu0
    %3756 = vmatprep.subr.bf16.mxu0 %v3537
    %3757 = vmatpush1.bf16.msra.mxu0 %v3536
    %3758 = vmatprep.subr.bf16.mxu0 %v3541
    %3759 = vmatpush1.bf16.msra.mxu0 %v3540
    %3760 = vmatprep.subr.bf16.mxu0 %v3545
    %3761 = vmatpush1.bf16.msra.mxu0 %v3544
    %3762 = vmatprep.subr.bf16.mxu0 %v3549
    %3763 = vmatpush1.bf16.msra.mxu0 %v3548
    %3764 = vmatprep.subr.bf16.mxu0 %v3553
    %3765 = vmatpush1.bf16.msra.mxu0 %v3552
    %3766 = vmatprep.subr.bf16.mxu0 %v3557
    %3767 = vmatpush1.bf16.msra.mxu0 %v3556
    %3768 = vmatprep.subr.bf16.mxu0 %v3561
    %3769 = vmatpush1.bf16.msra.mxu0 %v3560
    %3770 = vmatprep.subr.bf16.mxu0 %v3565
    %3771 = vmatpush1.bf16.msra.mxu0 %v3564
    %3772 = vmatprep.subr.bf16.mxu0 0
    %3773 = vmatpush1.bf16.msra.mxu0 0
    %3774 = vmatprep.subr.bf16.mxu0 0
    %3775 = vmatpush1.bf16.msra.mxu0 0
    %3776 = vmatprep.subr.bf16.mxu0 0
    %3777 = vmatpush1.bf16.msra.mxu0 0
    %3778 = vmatprep.subr.bf16.mxu0 0
    %3779 = vmatpush1.bf16.msra.mxu0 0
    %3780 = vmatprep.subr.bf16.mxu0 0
    %3781 = vmatpush1.bf16.msra.mxu0 0
    %3782 = vmatprep.subr.bf16.mxu0 0
    %3783 = vmatpush1.bf16.msra.mxu0 0
    %3784 = vmatprep.subr.bf16.mxu0 0
    %3785 = vmatpush1.bf16.msra.mxu0 0
    %3786 = vmatprep.subr.bf16.mxu0 0
    %3787 = vmatpush1.bf16.msra.mxu0 0
    %3788 = vmatprep.mubr.bf16.mxu0 0
    %3789 = vmatmul.mubr.bf16.gmra.mrb[0].mxu0 %v3714
    %v3790 = vpop.f32.mrb[0].mxu0
    %v3791 = vadd.f32 0.0, %v3790
    %v3792 = vpop.f32.mrb[0].mxu0
    %v3793 = vadd.f32 0.0, %v3792
    %v3794 = vpop.f32.mrb[0].mxu0
    %v3795 = vpop.f32.mrb[0].mxu0
    %3796 = vdwg.mxu0
    %v3797 = vadd.f32 %v3710, %v3750
    %v3798 = vadd.f32 %v3711, %v3752
    %v3799 = vadd.f32 %v3712, %v3791
    %v3800 = vadd.f32 %v3713, %v3793
    %v3801 = vxor.u32 %v3797, 2147483648
    %v3802 = vmul.f32 %v3801, 1.442695
    %v3803 = vpow.pop %v3802
    %v3804 = vadd.f32 %v3803, 1.0
    %v3805 = vrcp.pop %v3804
    %v3806 = vmul.f32 1.0, %v3805
    %v3807 = vxor.u32 %v3798, 2147483648
    %v3808 = vmul.f32 %v3807, 1.442695
    %v3809 = vpow.pop %v3808
    %v3810 = vadd.f32 %v3809, 1.0
    %v3811 = vrcp.pop %v3810
    %v3812 = vmul.f32 1.0, %v3811
    %v3813 = vtanh.pop %v3799
    %v3814 = vxor.u32 %v3800, 2147483648
    %v3815 = vmul.f32 %v3814, 1.442695
    %v3816 = vpow.pop %v3815
    %v3817 = vadd.f32 %v3816, 1.0
    %v3818 = vrcp.pop %v3817
    %v3819 = vmul.f32 1.0, %v3818
    %v3820 = vmul.f32 %v3812, %v3709
    %v3821 = vmul.f32 %v3806, %v3813
    %v3822 = vadd.f32 %v3820, %v3821
    %v3823 = vtanh.pop %v3822
    %v3824 = vmul.f32 %v3819, %v3823
    %v3825 = vsel %vm1084, %v3824, %v3708
    %v3826 = vsel %vm1084, %v3822, %v3709
    %v3827 = vld [vmem:[%s1089] sm:$0xff]
    %v3828 = vld [vmem:[%s1089 + $0x8] sm:$0xff]
    %v3829 = vld [vmem:[%s1089 + $0x10] sm:$0xff]
    %v3830 = vld [vmem:[%s1089 + $0x18] sm:$0xff]
    %v3831 = vpack.c.bf16 %v3825, %v3825
    %3832 = vmatprep.subr.bf16.mxu0 %v3535
    %3833 = vmatpush1.bf16.msra.mxu0 %v3534
    %3834 = vmatprep.subr.bf16.mxu0 %v3539
    %3835 = vmatpush1.bf16.msra.mxu0 %v3538
    %3836 = vmatprep.subr.bf16.mxu0 %v3543
    %3837 = vmatpush1.bf16.msra.mxu0 %v3542
    %3838 = vmatprep.subr.bf16.mxu0 %v3547
    %3839 = vmatpush1.bf16.msra.mxu0 %v3546
    %3840 = vmatprep.subr.bf16.mxu0 %v3551
    %3841 = vmatpush1.bf16.msra.mxu0 %v3550
    %3842 = vmatprep.subr.bf16.mxu0 %v3555
    %3843 = vmatpush1.bf16.msra.mxu0 %v3554
    %3844 = vmatprep.subr.bf16.mxu0 %v3559
    %3845 = vmatpush1.bf16.msra.mxu0 %v3558
    %3846 = vmatprep.subr.bf16.mxu0 %v3563
    %3847 = vmatpush1.bf16.msra.mxu0 %v3562
    %3848 = vmatprep.subr.bf16.mxu0 0
    %3849 = vmatpush1.bf16.msra.mxu0 0
    %3850 = vmatprep.subr.bf16.mxu0 0
    %3851 = vmatpush1.bf16.msra.mxu0 0
    %3852 = vmatprep.subr.bf16.mxu0 0
    %3853 = vmatpush1.bf16.msra.mxu0 0
    %3854 = vmatprep.subr.bf16.mxu0 0
    %3855 = vmatpush1.bf16.msra.mxu0 0
    %3856 = vmatprep.subr.bf16.mxu0 0
    %3857 = vmatpush1.bf16.msra.mxu0 0
    %3858 = vmatprep.subr.bf16.mxu0 0
    %3859 = vmatpush1.bf16.msra.mxu0 0
    %3860 = vmatprep.subr.bf16.mxu0 0
    %3861 = vmatpush1.bf16.msra.mxu0 0
    %3862 = vmatprep.subr.bf16.mxu0 0
    %3863 = vmatpush1.bf16.msra.mxu0 0
    %3864 = vmatprep.mubr.bf16.mxu0 0
    %3865 = vmatmul.mubr.bf16.gmra.mrb[0].mxu0 %v3831
    %v3866 = vpop.f32.mrb[0].mxu0
    %v3867 = vadd.f32 0.0, %v3866
    %v3868 = vpop.f32.mrb[0].mxu0
    %v3869 = vadd.f32 0.0, %v3868
    %v3870 = vpop.f32.mrb[0].mxu0
    %v3871 = vpop.f32.mrb[0].mxu0
    %3872 = vdwg.mxu0
    %3873 = vmatprep.subr.bf16.mxu0 %v3537
    %3874 = vmatpush1.bf16.msra.mxu0 %v3536
    %3875 = vmatprep.subr.bf16.mxu0 %v3541
    %3876 = vmatpush1.bf16.msra.mxu0 %v3540
    %3877 = vmatprep.subr.bf16.mxu0 %v3545
    %3878 = vmatpush1.bf16.msra.mxu0 %v3544
    %3879 = vmatprep.subr.bf16.mxu0 %v3549
    %3880 = vmatpush1.bf16.msra.mxu0 %v3548
    %3881 = vmatprep.subr.bf16.mxu0 %v3553
    %3882 = vmatpush1.bf16.msra.mxu0 %v3552
    %3883 = vmatprep.subr.bf16.mxu0 %v3557
    %3884 = vmatpush1.bf16.msra.mxu0 %v3556
    %3885 = vmatprep.subr.bf16.mxu0 %v3561
    %3886 = vmatpush1.bf16.msra.mxu0 %v3560
    %3887 = vmatprep.subr.bf16.mxu0 %v3565
    %3888 = vmatpush1.bf16.msra.mxu0 %v3564
    %3889 = vmatprep.subr.bf16.mxu0 0
    %3890 = vmatpush1.bf16.msra.mxu0 0
    %3891 = vmatprep.subr.bf16.mxu0 0
    %3892 = vmatpush1.bf16.msra.mxu0 0
    %3893 = vmatprep.subr.bf16.mxu0 0
    %3894 = vmatpush1.bf16.msra.mxu0 0
    %3895 = vmatprep.subr.bf16.mxu0 0
    %3896 = vmatpush1.bf16.msra.mxu0 0
    %3897 = vmatprep.subr.bf16.mxu0 0
    %3898 = vmatpush1.bf16.msra.mxu0 0
    %3899 = vmatprep.subr.bf16.mxu0 0
    %3900 = vmatpush1.bf16.msra.mxu0 0
    %3901 = vmatprep.subr.bf16.mxu0 0
    %3902 = vmatpush1.bf16.msra.mxu0 0
    %3903 = vmatprep.subr.bf16.mxu0 0
    %3904 = vmatpush1.bf16.msra.mxu0 0
    %3905 = vmatprep.mubr.bf16.mxu0 0
    %3906 = vmatmul.mubr.bf16.gmra.mrb[0].mxu0 %v3831
    %v3907 = vpop.f32.mrb[0].mxu0
    %v3908 = vadd.f32 0.0, %v3907
    %v3909 = vpop.f32.mrb[0].mxu0
    %v3910 = vadd.f32 0.0, %v3909
    %v3911 = vpop.f32.mrb[0].mxu0
    %v3912 = vpop.f32.mrb[0].mxu0
    %3913 = vdwg.mxu0
    %v3914 = vadd.f32 %v3827, %v3867
    %v3915 = vadd.f32 %v3828, %v3869
    %v3916 = vadd.f32 %v3829, %v3908
    %v3917 = vadd.f32 %v3830, %v3910
    %v3918 = vxor.u32 %v3914, 2147483648
    %v3919 = vmul.f32 %v3918, 1.442695
    %v3920 = vpow.pop %v3919
    %v3921 = vadd.f32 %v3920, 1.0
    %v3922 = vrcp.pop %v3921
    %v3923 = vmul.f32 1.0, %v3922
    %v3924 = vxor.u32 %v3915, 2147483648
    %v3925 = vmul.f32 %v3924, 1.442695
    %v3926 = vpow.pop %v3925
    %v3927 = vadd.f32 %v3926, 1.0
    %v3928 = vrcp.pop %v3927
    %v3929 = vmul.f32 1.0, %v3928
    %v3930 = vtanh.pop %v3916
    %v3931 = vxor.u32 %v3917, 2147483648
    %v3932 = vmul.f32 %v3931, 1.442695
    %v3933 = vpow.pop %v3932
    %v3934 = vadd.f32 %v3933, 1.0
    %v3935 = vrcp.pop %v3934
    %v3936 = vmul.f32 1.0, %v3935
    %v3937 = vmul.f32 %v3929, %v3826
    %v3938 = vmul.f32 %v3923, %v3930
    %v3939 = vadd.f32 %v3937, %v3938
    %v3940 = vtanh.pop %v3939
    %v3941 = vmul.f32 %v3936, %v3940
    %v3942 = vsel %vm1401, %v3941, %v3825
    %v3943 = vsel %vm1401, %v3939, %v3826
    %v3944 = vld [vmem:[%s1406] sm:$0xff]
    %v3945 = vld [vmem:[%s1406 + $0x8] sm:$0xff]
    %v3946 = vld [vmem:[%s1406 + $0x10] sm:$0xff]
    %v3947 = vld [vmem:[%s1406 + $0x18] sm:$0xff]
    %v3948 = vpack.c.bf16 %v3942, %v3942
    %3949 = vmatprep.subr.bf16.mxu0 %v3535
    %3950 = vmatpush1.bf16.msra.mxu0 %v3534
    %3951 = vmatprep.subr.bf16.mxu0 %v3539
    %3952 = vmatpush1.bf16.msra.mxu0 %v3538
    %3953 = vmatprep.subr.bf16.mxu0 %v3543
    %3954 = vmatpush1.bf16.msra.mxu0 %v3542
    %3955 = vmatprep.subr.bf16.mxu0 %v3547
    %3956 = vmatpush1.bf16.msra.mxu0 %v3546
    %3957 = vmatprep.subr.bf16.mxu0 %v3551
    %3958 = vmatpush1.bf16.msra.mxu0 %v3550
    %3959 = vmatprep.subr.bf16.mxu0 %v3555
    %3960 = vmatpush1.bf16.msra.mxu0 %v3554
    %3961 = vmatprep.subr.bf16.mxu0 %v3559
    %3962 = vmatpush1.bf16.msra.mxu0 %v3558
    %3963 = vmatprep.subr.bf16.mxu0 %v3563
    %3964 = vmatpush1.bf16.msra.mxu0 %v3562
    %3965 = vmatprep.subr.bf16.mxu0 0
    %3966 = vmatpush1.bf16.msra.mxu0 0
    %3967 = vmatprep.subr.bf16.mxu0 0
    %3968 = vmatpush1.bf16.msra.mxu0 0
    %3969 = vmatprep.subr.bf16.mxu0 0
    %3970 = vmatpush1.bf16.msra.mxu0 0
    %3971 = vmatprep.subr.bf16.mxu0 0
    %3972 = vmatpush1.bf16.msra.mxu0 0
    %3973 = vmatprep.subr.bf16.mxu0 0
    %3974 = vmatpush1.bf16.msra.mxu0 0
    %3975 = vmatprep.subr.bf16.mxu0 0
    %3976 = vmatpush1.bf16.msra.mxu0 0
    %3977 = vmatprep.subr.bf16.mxu0 0
    %3978 = vmatpush1.bf16.msra.mxu0 0
    %3979 = vmatprep.subr.bf16.mxu0 0
    %3980 = vmatpush1.bf16.msra.mxu0 0
    %3981 = vmatprep.mubr.bf16.mxu0 0
    %3982 = vmatmul.mubr.bf16.gmra.mrb[0].mxu0 %v3948
    %v3983 = vpop.f32.mrb[0].mxu0
    %v3984 = vadd.f32 0.0, %v3983
    %v3985 = vpop.f32.mrb[0].mxu0
    %v3986 = vadd.f32 0.0, %v3985
    %v3987 = vpop.f32.mrb[0].mxu0
    %v3988 = vpop.f32.mrb[0].mxu0
    %3989 = vdwg.mxu0
    %3990 = vmatprep.subr.bf16.mxu0 %v3537
    %3991 = vmatpush1.bf16.msra.mxu0 %v3536
    %3992 = vmatprep.subr.bf16.mxu0 %v3541
    %3993 = vmatpush1.bf16.msra.mxu0 %v3540
    %3994 = vmatprep.subr.bf16.mxu0 %v3545
    %3995 = vmatpush1.bf16.msra.mxu0 %v3544
    %3996 = vmatprep.subr.bf16.mxu0 %v3549
    %3997 = vmatpush1.bf16.msra.mxu0 %v3548
    %3998 = vmatprep.subr.bf16.mxu0 %v3553
    %3999 = vmatpush1.bf16.msra.mxu0 %v3552
    %4000 = vmatprep.subr.bf16.mxu0 %v3557
    %4001 = vmatpush1.bf16.msra.mxu0 %v3556
    %4002 = vmatprep.subr.bf16.mxu0 %v3561
    %4003 = vmatpush1.bf16.msra.mxu0 %v3560
    %4004 = vmatprep.subr.bf16.mxu0 %v3565
    %4005 = vmatpush1.bf16.msra.mxu0 %v3564
    %4006 = vmatprep.subr.bf16.mxu0 0
    %4007 = vmatpush1.bf16.msra.mxu0 0
    %4008 = vmatprep.subr.bf16.mxu0 0
    %4009 = vmatpush1.bf16.msra.mxu0 0
    %4010 = vmatprep.subr.bf16.mxu0 0
    %4011 = vmatpush1.bf16.msra.mxu0 0
    %4012 = vmatprep.subr.bf16.mxu0 0
    %4013 = vmatpush1.bf16.msra.mxu0 0
    %4014 = vmatprep.subr.bf16.mxu0 0
    %4015 = vmatpush1.bf16.msra.mxu0 0
    %4016 = vmatprep.subr.bf16.mxu0 0
    %4017 = vmatpush1.bf16.msra.mxu0 0
    %4018 = vmatprep.subr.bf16.mxu0 0
    %4019 = vmatpush1.bf16.msra.mxu0 0
    %4020 = vmatprep.subr.bf16.mxu0 0
    %4021 = vmatpush1.bf16.msra.mxu0 0
    %4022 = vmatprep.mubr.bf16.mxu0 0
    %4023 = vmatmul.mubr.bf16.gmra.mrb[0].mxu0 %v3948
    %v4024 = vpop.f32.mrb[0].mxu0
    %v4025 = vadd.f32 0.0, %v4024
    %v4026 = vpop.f32.mrb[0].mxu0
    %v4027 = vadd.f32 0.0, %v4026
    %v4028 = vpop.f32.mrb[0].mxu0
    %v4029 = vpop.f32.mrb[0].mxu0
    %4030 = vdwg.mxu0
    %v4031 = vadd.f32 %v3944, %v3984
    %v4032 = vadd.f32 %v3945, %v3986
    %v4033 = vadd.f32 %v3946, %v4025
    %v4034 = vadd.f32 %v3947, %v4027
    %v4035 = vxor.u32 %v4031, 2147483648
    %v4036 = vmul.f32 %v4035, 1.442695
    %v4037 = vpow.pop %v4036
    %v4038 = vadd.f32 %v4037, 1.0
    %v4039 = vrcp.pop %v4038
    %v4040 = vmul.f32 1.0, %v4039
    %v4041 = vxor.u32 %v4032, 2147483648
    %v4042 = vmul.f32 %v4041, 1.442695
    %v4043 = vpow.pop %v4042
    %v4044 = vadd.f32 %v4043, 1.0
    %v4045 = vrcp.pop %v4044
    %v4046 = vmul.f32 1.0, %v4045
    %v4047 = vtanh.pop %v4033
    %v4048 = vxor.u32 %v4034, 2147483648
    %v4049 = vmul.f32 %v4048, 1.442695
    %v4050 = vpow.pop %v4049
    %v4051 = vadd.f32 %v4050, 1.0
    %v4052 = vrcp.pop %v4051
    %v4053 = vmul.f32 1.0, %v4052
    %v4054 = vmul.f32 %v4046, %v3943
    %v4055 = vmul.f32 %v4040, %v4047
    %v4056 = vadd.f32 %v4054, %v4055
    %v4057 = vtanh.pop %v4056
    %v4058 = vmul.f32 %v4053, %v4057
    %v4059 = vsel %vm1718, %v4058, %v3942
    %v4060 = vsel %vm1718, %v4056, %v3943
    %v4061 = vld [vmem:[%s1723] sm:$0xff]
    %v4062 = vld [vmem:[%s1723 + $0x8] sm:$0xff]
    %v4063 = vld [vmem:[%s1723 + $0x10] sm:$0xff]
    %v4064 = vld [vmem:[%s1723 + $0x18] sm:$0xff]
    %v4065 = vpack.c.bf16 %v4059, %v4059
    %4066 = vmatprep.subr.bf16.mxu0 %v3535
    %4067 = vmatpush1.bf16.msra.mxu0 %v3534
    %4068 = vmatprep.subr.bf16.mxu0 %v3539
    %4069 = vmatpush1.bf16.msra.mxu0 %v3538
    %4070 = vmatprep.subr.bf16.mxu0 %v3543
    %4071 = vmatpush1.bf16.msra.mxu0 %v3542
    %4072 = vmatprep.subr.bf16.mxu0 %v3547
    %4073 = vmatpush1.bf16.msra.mxu0 %v3546
    %4074 = vmatprep.subr.bf16.mxu0 %v3551
    %4075 = vmatpush1.bf16.msra.mxu0 %v3550
    %4076 = vmatprep.subr.bf16.mxu0 %v3555
    %4077 = vmatpush1.bf16.msra.mxu0 %v3554
    %4078 = vmatprep.subr.bf16.mxu0 %v3559
    %4079 = vmatpush1.bf16.msra.mxu0 %v3558
    %4080 = vmatprep.subr.bf16.mxu0 %v3563
    %4081 = vmatpush1.bf16.msra.mxu0 %v3562
    %4082 = vmatprep.subr.bf16.mxu0 0
    %4083 = vmatpush1.bf16.msra.mxu0 0
    %4084 = vmatprep.subr.bf16.mxu0 0
    %4085 = vmatpush1.bf16.msra.mxu0 0
    %4086 = vmatprep.subr.bf16.mxu0 0
    %4087 = vmatpush1.bf16.msra.mxu0 0
    %4088 = vmatprep.subr.bf16.mxu0 0
    %4089 = vmatpush1.bf16.msra.mxu0 0
    %4090 = vmatprep.subr.bf16.mxu0 0
    %4091 = vmatpush1.bf16.msra.mxu0 0
    %4092 = vmatprep.subr.bf16.mxu0 0
    %4093 = vmatpush1.bf16.msra.mxu0 0
    %4094 = vmatprep.subr.bf16.mxu0 0
    %4095 = vmatpush1.bf16.msra.mxu0 0
    %4096 = vmatprep.subr.bf16.mxu0 0
    %4097 = vmatpush1.bf16.msra.mxu0 0
    %4098 = vmatprep.mubr.bf16.mxu0 0
    %4099 = vmatmul.mubr.bf16.gmra.mrb[0].mxu0 %v4065
    %v4100 = vpop.f32.mrb[0].mxu0
    %v4101 = vadd.f32 0.0, %v4100
    %v4102 = vpop.f32.mrb[0].mxu0
    %v4103 = vadd.f32 0.0, %v4102
    %v4104 = vpop.f32.mrb[0].mxu0
    %v4105 = vpop.f32.mrb[0].mxu0
    %4106 = vdwg.mxu0
    %4107 = vmatprep.subr.bf16.mxu0 %v3537
    %4108 = vmatpush1.bf16.msra.mxu0 %v3536
    %4109 = vmatprep.subr.bf16.mxu0 %v3541
    %4110 = vmatpush1.bf16.msra.mxu0 %v3540
    %4111 = vmatprep.subr.bf16.mxu0 %v3545
    %4112 = vmatpush1.bf16.msra.mxu0 %v3544
    %4113 = vmatprep.subr.bf16.mxu0 %v3549
    %4114 = vmatpush1.bf16.msra.mxu0 %v3548
    %4115 = vmatprep.subr.bf16.mxu0 %v3553
    %4116 = vmatpush1.bf16.msra.mxu0 %v3552
    %4117 = vmatprep.subr.bf16.mxu0 %v3557
    %4118 = vmatpush1.bf16.msra.mxu0 %v3556
    %4119 = vmatprep.subr.bf16.mxu0 %v3561
    %4120 = vmatpush1.bf16.msra.mxu0 %v3560
    %4121 = vmatprep.subr.bf16.mxu0 %v3565
    %4122 = vmatpush1.bf16.msra.mxu0 %v3564
    %4123 = vmatprep.subr.bf16.mxu0 0
    %4124 = vmatpush1.bf16.msra.mxu0 0
    %4125 = vmatprep.subr.bf16.mxu0 0
    %4126 = vmatpush1.bf16.msra.mxu0 0
    %4127 = vmatprep.subr.bf16.mxu0 0
    %4128 = vmatpush1.bf16.msra.mxu0 0
    %4129 = vmatprep.subr.bf16.mxu0 0
    %4130 = vmatpush1.bf16.msra.mxu0 0
    %4131 = vmatprep.subr.bf16.mxu0 0
    %4132 = vmatpush1.bf16.msra.mxu0 0
    %4133 = vmatprep.subr.bf16.mxu0 0
    %4134 = vmatpush1.bf16.msra.mxu0 0
    %4135 = vmatprep.subr.bf16.mxu0 0
    %4136 = vmatpush1.bf16.msra.mxu0 0
    %4137 = vmatprep.subr.bf16.mxu0 0
    %4138 = vmatpush1.bf16.msra.mxu0 0
    %4139 = vmatprep.mubr.bf16.mxu0 0
    %4140 = vmatmul.mubr.bf16.gmra.mrb[0].mxu0 %v4065
    %v4141 = vpop.f32.mrb[0].mxu0
    %v4142 = vadd.f32 0.0, %v4141
    %v4143 = vpop.f32.mrb[0].mxu0
    %v4144 = vadd.f32 0.0, %v4143
    %v4145 = vpop.f32.mrb[0].mxu0
    %v4146 = vpop.f32.mrb[0].mxu0
    %4147 = vdwg.mxu0
    %v4148 = vadd.f32 %v4061, %v4101
    %v4149 = vadd.f32 %v4062, %v4103
    %v4150 = vadd.f32 %v4063, %v4142
    %v4151 = vadd.f32 %v4064, %v4144
    %v4152 = vxor.u32 %v4148, 2147483648
    %v4153 = vmul.f32 %v4152, 1.442695
    %v4154 = vpow.pop %v4153
    %v4155 = vadd.f32 %v4154, 1.0
    %v4156 = vrcp.pop %v4155
    %v4157 = vmul.f32 1.0, %v4156
    %v4158 = vxor.u32 %v4149, 2147483648
    %v4159 = vmul.f32 %v4158, 1.442695
    %v4160 = vpow.pop %v4159
    %v4161 = vadd.f32 %v4160, 1.0
    %v4162 = vrcp.pop %v4161
    %v4163 = vmul.f32 1.0, %v4162
    %v4164 = vtanh.pop %v4150
    %v4165 = vxor.u32 %v4151, 2147483648
    %v4166 = vmul.f32 %v4165, 1.442695
    %v4167 = vpow.pop %v4166
    %v4168 = vadd.f32 %v4167, 1.0
    %v4169 = vrcp.pop %v4168
    %v4170 = vmul.f32 1.0, %v4169
    %v4171 = vmul.f32 %v4163, %v4060
    %v4172 = vmul.f32 %v4157, %v4164
    %v4173 = vadd.f32 %v4171, %v4172
    %v4174 = vtanh.pop %v4173
    %v4175 = vmul.f32 %v4170, %v4174
    %v4176 = vsel %vm2035, %v4175, %v4059
    %v4177 = vsel %vm2035, %v4173, %v4060
    %v4178 = vld [vmem:[%s2040] sm:$0xff]
    %v4179 = vld [vmem:[%s2040 + $0x8] sm:$0xff]
    %v4180 = vld [vmem:[%s2040 + $0x10] sm:$0xff]
    %v4181 = vld [vmem:[%s2040 + $0x18] sm:$0xff]
    %v4182 = vpack.c.bf16 %v4176, %v4176
    %4183 = vmatprep.subr.bf16.mxu0 %v3535
    %4184 = vmatpush1.bf16.msra.mxu0 %v3534
    %4185 = vmatprep.subr.bf16.mxu0 %v3539
    %4186 = vmatpush1.bf16.msra.mxu0 %v3538
    %4187 = vmatprep.subr.bf16.mxu0 %v3543
    %4188 = vmatpush1.bf16.msra.mxu0 %v3542
    %4189 = vmatprep.subr.bf16.mxu0 %v3547
    %4190 = vmatpush1.bf16.msra.mxu0 %v3546
    %4191 = vmatprep.subr.bf16.mxu0 %v3551
    %4192 = vmatpush1.bf16.msra.mxu0 %v3550
    %4193 = vmatprep.subr.bf16.mxu0 %v3555
    %4194 = vmatpush1.bf16.msra.mxu0 %v3554
    %4195 = vmatprep.subr.bf16.mxu0 %v3559
    %4196 = vmatpush1.bf16.msra.mxu0 %v3558
    %4197 = vmatprep.subr.bf16.mxu0 %v3563
    %4198 = vmatpush1.bf16.msra.mxu0 %v3562
    %4199 = vmatprep.subr.bf16.mxu0 0
    %4200 = vmatpush1.bf16.msra.mxu0 0
    %4201 = vmatprep.subr.bf16.mxu0 0
    %4202 = vmatpush1.bf16.msra.mxu0 0
    %4203 = vmatprep.subr.bf16.mxu0 0
    %4204 = vmatpush1.bf16.msra.mxu0 0
    %4205 = vmatprep.subr.bf16.mxu0 0
    %4206 = vmatpush1.bf16.msra.mxu0 0
    %4207 = vmatprep.subr.bf16.mxu0 0
    %4208 = vmatpush1.bf16.msra.mxu0 0
    %4209 = vmatprep.subr.bf16.mxu0 0
    %4210 = vmatpush1.bf16.msra.mxu0 0
    %4211 = vmatprep.subr.bf16.mxu0 0
    %4212 = vmatpush1.bf16.msra.mxu0 0
    %4213 = vmatprep.subr.bf16.mxu0 0
    %4214 = vmatpush1.bf16.msra.mxu0 0
    %4215 = vmatprep.mubr.bf16.mxu0 0
    %4216 = vmatmul.mubr.bf16.gmra.mrb[0].mxu0 %v4182
    %v4217 = vpop.f32.mrb[0].mxu0
    %v4218 = vadd.f32 0.0, %v4217
    %v4219 = vpop.f32.mrb[0].mxu0
    %v4220 = vadd.f32 0.0, %v4219
    %v4221 = vpop.f32.mrb[0].mxu0
    %v4222 = vpop.f32.mrb[0].mxu0
    %4223 = vdwg.mxu0
    %4224 = vmatprep.subr.bf16.mxu0 %v3537
    %4225 = vmatpush1.bf16.msra.mxu0 %v3536
    %4226 = vmatprep.subr.bf16.mxu0 %v3541
    %4227 = vmatpush1.bf16.msra.mxu0 %v3540
    %4228 = vmatprep.subr.bf16.mxu0 %v3545
    %4229 = vmatpush1.bf16.msra.mxu0 %v3544
    %4230 = vmatprep.subr.bf16.mxu0 %v3549
    %4231 = vmatpush1.bf16.msra.mxu0 %v3548
    %4232 = vmatprep.subr.bf16.mxu0 %v3553
    %4233 = vmatpush1.bf16.msra.mxu0 %v3552
    %4234 = vmatprep.subr.bf16.mxu0 %v3557
    %4235 = vmatpush1.bf16.msra.mxu0 %v3556
    %4236 = vmatprep.subr.bf16.mxu0 %v3561
    %4237 = vmatpush1.bf16.msra.mxu0 %v3560
    %4238 = vmatprep.subr.bf16.mxu0 %v3565
    %4239 = vmatpush1.bf16.msra.mxu0 %v3564
    %4240 = vmatprep.subr.bf16.mxu0 0
    %4241 = vmatpush1.bf16.msra.mxu0 0
    %4242 = vmatprep.subr.bf16.mxu0 0
    %4243 = vmatpush1.bf16.msra.mxu0 0
    %4244 = vmatprep.subr.bf16.mxu0 0
    %4245 = vmatpush1.bf16.msra.mxu0 0
    %4246 = vmatprep.subr.bf16.mxu0 0
    %4247 = vmatpush1.bf16.msra.mxu0 0
    %4248 = vmatprep.subr.bf16.mxu0 0
    %4249 = vmatpush1.bf16.msra.mxu0 0
    %4250 = vmatprep.subr.bf16.mxu0 0
    %4251 = vmatpush1.bf16.msra.mxu0 0
    %4252 = vmatprep.subr.bf16.mxu0 0
    %4253 = vmatpush1.bf16.msra.mxu0 0
    %4254 = vmatprep.subr.bf16.mxu0 0
    %4255 = vmatpush1.bf16.msra.mxu0 0
    %4256 = vmatprep.mubr.bf16.mxu0 0
    %4257 = vmatmul.mubr.bf16.gmra.mrb[0].mxu0 %v4182
    %v4258 = vpop.f32.mrb[0].mxu0
    %v4259 = vadd.f32 0.0, %v4258
    %v4260 = vpop.f32.mrb[0].mxu0
    %v4261 = vadd.f32 0.0, %v4260
    %v4262 = vpop.f32.mrb[0].mxu0
    %v4263 = vpop.f32.mrb[0].mxu0
    %4264 = vdwg.mxu0
    %v4265 = vadd.f32 %v4178, %v4218
    %v4266 = vadd.f32 %v4179, %v4220
    %v4267 = vadd.f32 %v4180, %v4259
    %v4268 = vadd.f32 %v4181, %v4261
    %v4269 = vxor.u32 %v4265, 2147483648
    %v4270 = vmul.f32 %v4269, 1.442695
    %v4271 = vpow.pop %v4270
    %v4272 = vadd.f32 %v4271, 1.0
    %v4273 = vrcp.pop %v4272
    %v4274 = vmul.f32 1.0, %v4273
    %v4275 = vxor.u32 %v4266, 2147483648
    %v4276 = vmul.f32 %v4275, 1.442695
    %v4277 = vpow.pop %v4276
    %v4278 = vadd.f32 %v4277, 1.0
    %v4279 = vrcp.pop %v4278
    %v4280 = vmul.f32 1.0, %v4279
    %v4281 = vtanh.pop %v4267
    %v4282 = vxor.u32 %v4268, 2147483648
    %v4283 = vmul.f32 %v4282, 1.442695
    %v4284 = vpow.pop %v4283
    %v4285 = vadd.f32 %v4284, 1.0
    %v4286 = vrcp.pop %v4285
    %v4287 = vmul.f32 1.0, %v4286
    %v4288 = vmul.f32 %v4280, %v4177
    %v4289 = vmul.f32 %v4274, %v4281
    %v4290 = vadd.f32 %v4288, %v4289
    %v4291 = vtanh.pop %v4290
    %v4292 = vmul.f32 %v4287, %v4291
    %v4293 = vsel %vm2352, %v4292, %v4176
    %v4294 = vsel %vm2352, %v4290, %v4177
    %v4295 = vld [vmem:[%s2357] sm:$0xff]
    %v4296 = vld [vmem:[%s2357 + $0x8] sm:$0xff]
    %v4297 = vld [vmem:[%s2357 + $0x10] sm:$0xff]
    %v4298 = vld [vmem:[%s2357 + $0x18] sm:$0xff]
    %v4299 = vpack.c.bf16 %v4293, %v4293
    %4300 = vmatprep.subr.bf16.mxu0 %v3535
    %4301 = vmatpush1.bf16.msra.mxu0 %v3534
    %4302 = vmatprep.subr.bf16.mxu0 %v3539
    %4303 = vmatpush1.bf16.msra.mxu0 %v3538
    %4304 = vmatprep.subr.bf16.mxu0 %v3543
    %4305 = vmatpush1.bf16.msra.mxu0 %v3542
    %4306 = vmatprep.subr.bf16.mxu0 %v3547
    %4307 = vmatpush1.bf16.msra.mxu0 %v3546
    %4308 = vmatprep.subr.bf16.mxu0 %v3551
    %4309 = vmatpush1.bf16.msra.mxu0 %v3550
    %4310 = vmatprep.subr.bf16.mxu0 %v3555
    %4311 = vmatpush1.bf16.msra.mxu0 %v3554
    %4312 = vmatprep.subr.bf16.mxu0 %v3559
    %4313 = vmatpush1.bf16.msra.mxu0 %v3558
    %4314 = vmatprep.subr.bf16.mxu0 %v3563
    %4315 = vmatpush1.bf16.msra.mxu0 %v3562
    %4316 = vmatprep.subr.bf16.mxu0 0
    %4317 = vmatpush1.bf16.msra.mxu0 0
    %4318 = vmatprep.subr.bf16.mxu0 0
    %4319 = vmatpush1.bf16.msra.mxu0 0
    %4320 = vmatprep.subr.bf16.mxu0 0
    %4321 = vmatpush1.bf16.msra.mxu0 0
    %4322 = vmatprep.subr.bf16.mxu0 0
    %4323 = vmatpush1.bf16.msra.mxu0 0
    %4324 = vmatprep.subr.bf16.mxu0 0
    %4325 = vmatpush1.bf16.msra.mxu0 0
    %4326 = vmatprep.subr.bf16.mxu0 0
    %4327 = vmatpush1.bf16.msra.mxu0 0
    %4328 = vmatprep.subr.bf16.mxu0 0
    %4329 = vmatpush1.bf16.msra.mxu0 0
    %4330 = vmatprep.subr.bf16.mxu0 0
    %4331 = vmatpush1.bf16.msra.mxu0 0
    %4332 = vmatprep.mubr.bf16.mxu0 0
    %4333 = vmatmul.mubr.bf16.gmra.mrb[0].mxu0 %v4299
    %v4334 = vpop.f32.mrb[0].mxu0
    %v4335 = vadd.f32 0.0, %v4334
    %v4336 = vpop.f32.mrb[0].mxu0
    %v4337 = vadd.f32 0.0, %v4336
    %v4338 = vpop.f32.mrb[0].mxu0
    %v4339 = vpop.f32.mrb[0].mxu0
    %4340 = vdwg.mxu0
    %4341 = vmatprep.subr.bf16.mxu0 %v3537
    %4342 = vmatpush1.bf16.msra.mxu0 %v3536
    %4343 = vmatprep.subr.bf16.mxu0 %v3541
    %4344 = vmatpush1.bf16.msra.mxu0 %v3540
    %4345 = vmatprep.subr.bf16.mxu0 %v3545
    %4346 = vmatpush1.bf16.msra.mxu0 %v3544
    %4347 = vmatprep.subr.bf16.mxu0 %v3549
    %4348 = vmatpush1.bf16.msra.mxu0 %v3548
    %4349 = vmatprep.subr.bf16.mxu0 %v3553
    %4350 = vmatpush1.bf16.msra.mxu0 %v3552
    %4351 = vmatprep.subr.bf16.mxu0 %v3557
    %4352 = vmatpush1.bf16.msra.mxu0 %v3556
    %4353 = vmatprep.subr.bf16.mxu0 %v3561
    %4354 = vmatpush1.bf16.msra.mxu0 %v3560
    %4355 = vmatprep.subr.bf16.mxu0 %v3565
    %4356 = vmatpush1.bf16.msra.mxu0 %v3564
    %4357 = vmatprep.subr.bf16.mxu0 0
    %4358 = vmatpush1.bf16.msra.mxu0 0
    %4359 = vmatprep.subr.bf16.mxu0 0
    %4360 = vmatpush1.bf16.msra.mxu0 0
    %4361 = vmatprep.subr.bf16.mxu0 0
    %4362 = vmatpush1.bf16.msra.mxu0 0
    %4363 = vmatprep.subr.bf16.mxu0 0
    %4364 = vmatpush1.bf16.msra.mxu0 0
    %4365 = vmatprep.subr.bf16.mxu0 0
    %4366 = vmatpush1.bf16.msra.mxu0 0
    %4367 = vmatprep.subr.bf16.mxu0 0
    %4368 = vmatpush1.bf16.msra.mxu0 0
    %4369 = vmatprep.subr.bf16.mxu0 0
    %4370 = vmatpush1.bf16.msra.mxu0 0
    %4371 = vmatprep.subr.bf16.mxu0 0
    %4372 = vmatpush1.bf16.msra.mxu0 0
    %4373 = vmatprep.mubr.bf16.mxu0 0
    %4374 = vmatmul.mubr.bf16.gmra.mrb[0].mxu0 %v4299
    %v4375 = vpop.f32.mrb[0].mxu0
    %v4376 = vadd.f32 0.0, %v4375
    %v4377 = vpop.f32.mrb[0].mxu0
    %v4378 = vadd.f32 0.0, %v4377
    %v4379 = vpop.f32.mrb[0].mxu0
    %v4380 = vpop.f32.mrb[0].mxu0
    %4381 = vdwg.mxu0
    %v4382 = vadd.f32 %v4295, %v4335
    %v4383 = vadd.f32 %v4296, %v4337
    %v4384 = vadd.f32 %v4297, %v4376
    %v4385 = vadd.f32 %v4298, %v4378
    %v4386 = vxor.u32 %v4382, 2147483648
    %v4387 = vmul.f32 %v4386, 1.442695
    %v4388 = vpow.pop %v4387
    %v4389 = vadd.f32 %v4388, 1.0
    %v4390 = vrcp.pop %v4389
    %v4391 = vmul.f32 1.0, %v4390
    %v4392 = vxor.u32 %v4383, 2147483648
    %v4393 = vmul.f32 %v4392, 1.442695
    %v4394 = vpow.pop %v4393
    %v4395 = vadd.f32 %v4394, 1.0
    %v4396 = vrcp.pop %v4395
    %v4397 = vmul.f32 1.0, %v4396
    %v4398 = vtanh.pop %v4384
    %v4399 = vxor.u32 %v4385, 2147483648
    %v4400 = vmul.f32 %v4399, 1.442695
    %v4401 = vpow.pop %v4400
    %v4402 = vadd.f32 %v4401, 1.0
    %v4403 = vrcp.pop %v4402
    %v4404 = vmul.f32 1.0, %v4403
    %v4405 = vmul.f32 %v4397, %v4294
    %v4406 = vmul.f32 %v4391, %v4398
    %v4407 = vadd.f32 %v4405, %v4406
    %v4408 = vtanh.pop %v4407
    %v4409 = vmul.f32 %v4404, %v4408
    %v4410 = vsel %vm2669, %v4409, %v4293
    %v4411 = vsel %vm2669, %v4407, %v4294
    %v4412 = vld [vmem:[%s2674] sm:$0xff]
    %v4413 = vld [vmem:[%s2674 + $0x8] sm:$0xff]
    %v4414 = vld [vmem:[%s2674 + $0x10] sm:$0xff]
    %v4415 = vld [vmem:[%s2674 + $0x18] sm:$0xff]
    %v4416 = vpack.c.bf16 %v4410, %v4410
    %4417 = vmatprep.subr.bf16.mxu0 %v3535
    %4418 = vmatpush1.bf16.msra.mxu0 %v3534
    %4419 = vmatprep.subr.bf16.mxu0 %v3539
    %4420 = vmatpush1.bf16.msra.mxu0 %v3538
    %4421 = vmatprep.subr.bf16.mxu0 %v3543
    %4422 = vmatpush1.bf16.msra.mxu0 %v3542
    %4423 = vmatprep.subr.bf16.mxu0 %v3547
    %4424 = vmatpush1.bf16.msra.mxu0 %v3546
    %4425 = vmatprep.subr.bf16.mxu0 %v3551
    %4426 = vmatpush1.bf16.msra.mxu0 %v3550
    %4427 = vmatprep.subr.bf16.mxu0 %v3555
    %4428 = vmatpush1.bf16.msra.mxu0 %v3554
    %4429 = vmatprep.subr.bf16.mxu0 %v3559
    %4430 = vmatpush1.bf16.msra.mxu0 %v3558
    %4431 = vmatprep.subr.bf16.mxu0 %v3563
    %4432 = vmatpush1.bf16.msra.mxu0 %v3562
    %4433 = vmatprep.subr.bf16.mxu0 0
    %4434 = vmatpush1.bf16.msra.mxu0 0
    %4435 = vmatprep.subr.bf16.mxu0 0
    %4436 = vmatpush1.bf16.msra.mxu0 0
    %4437 = vmatprep.subr.bf16.mxu0 0
    %4438 = vmatpush1.bf16.msra.mxu0 0
    %4439 = vmatprep.subr.bf16.mxu0 0
    %4440 = vmatpush1.bf16.msra.mxu0 0
    %4441 = vmatprep.subr.bf16.mxu0 0
    %4442 = vmatpush1.bf16.msra.mxu0 0
    %4443 = vmatprep.subr.bf16.mxu0 0
    %4444 = vmatpush1.bf16.msra.mxu0 0
    %4445 = vmatprep.subr.bf16.mxu0 0
    %4446 = vmatpush1.bf16.msra.mxu0 0
    %4447 = vmatprep.subr.bf16.mxu0 0
    %4448 = vmatpush1.bf16.msra.mxu0 0
    %4449 = vmatprep.mubr.bf16.mxu0 0
    %4450 = vmatmul.mubr.bf16.gmra.mrb[0].mxu0 %v4416
    %v4451 = vpop.f32.mrb[0].mxu0
    %v4452 = vadd.f32 0.0, %v4451
    %v4453 = vpop.f32.mrb[0].mxu0
    %v4454 = vadd.f32 0.0, %v4453
    %v4455 = vpop.f32.mrb[0].mxu0
    %v4456 = vpop.f32.mrb[0].mxu0
    %4457 = vdwg.mxu0
    %4458 = vmatprep.subr.bf16.mxu0 %v3537
    %4459 = vmatpush1.bf16.msra.mxu0 %v3536
    %4460 = vmatprep.subr.bf16.mxu0 %v3541
    %4461 = vmatpush1.bf16.msra.mxu0 %v3540
    %4462 = vmatprep.subr.bf16.mxu0 %v3545
    %4463 = vmatpush1.bf16.msra.mxu0 %v3544
    %4464 = vmatprep.subr.bf16.mxu0 %v3549
    %4465 = vmatpush1.bf16.msra.mxu0 %v3548
    %4466 = vmatprep.subr.bf16.mxu0 %v3553
    %4467 = vmatpush1.bf16.msra.mxu0 %v3552
    %4468 = vmatprep.subr.bf16.mxu0 %v3557
    %4469 = vmatpush1.bf16.msra.mxu0 %v3556
    %4470 = vmatprep.subr.bf16.mxu0 %v3561
    %4471 = vmatpush1.bf16.msra.mxu0 %v3560
    %4472 = vmatprep.subr.bf16.mxu0 %v3565
    %4473 = vmatpush1.bf16.msra.mxu0 %v3564
    %4474 = vmatprep.subr.bf16.mxu0 0
    %4475 = vmatpush1.bf16.msra.mxu0 0
    %4476 = vmatprep.subr.bf16.mxu0 0
    %4477 = vmatpush1.bf16.msra.mxu0 0
    %4478 = vmatprep.subr.bf16.mxu0 0
    %4479 = vmatpush1.bf16.msra.mxu0 0
    %4480 = vmatprep.subr.bf16.mxu0 0
    %4481 = vmatpush1.bf16.msra.mxu0 0
    %4482 = vmatprep.subr.bf16.mxu0 0
    %4483 = vmatpush1.bf16.msra.mxu0 0
    %4484 = vmatprep.subr.bf16.mxu0 0
    %4485 = vmatpush1.bf16.msra.mxu0 0
    %4486 = vmatprep.subr.bf16.mxu0 0
    %4487 = vmatpush1.bf16.msra.mxu0 0
    %4488 = vmatprep.subr.bf16.mxu0 0
    %4489 = vmatpush1.bf16.msra.mxu0 0
    %4490 = vmatprep.mubr.bf16.mxu0 0
    %4491 = vmatmul.mubr.bf16.gmra.mrb[0].mxu0 %v4416
    %v4492 = vpop.f32.mrb[0].mxu0
    %v4493 = vadd.f32 0.0, %v4492
    %v4494 = vpop.f32.mrb[0].mxu0
    %v4495 = vadd.f32 0.0, %v4494
    %v4496 = vpop.f32.mrb[0].mxu0
    %v4497 = vpop.f32.mrb[0].mxu0
    %4498 = vdwg.mxu0
    %v4499 = vadd.f32 %v4412, %v4452
    %v4500 = vadd.f32 %v4413, %v4454
    %v4501 = vadd.f32 %v4414, %v4493
    %v4502 = vadd.f32 %v4415, %v4495
    %v4503 = vxor.u32 %v4499, 2147483648
    %v4504 = vmul.f32 %v4503, 1.442695
    %v4505 = vpow.pop %v4504
    %v4506 = vadd.f32 %v4505, 1.0
    %v4507 = vrcp.pop %v4506
    %v4508 = vmul.f32 1.0, %v4507
    %v4509 = vxor.u32 %v4500, 2147483648
    %v4510 = vmul.f32 %v4509, 1.442695
    %v4511 = vpow.pop %v4510
    %v4512 = vadd.f32 %v4511, 1.0
    %v4513 = vrcp.pop %v4512
    %v4514 = vmul.f32 1.0, %v4513
    %v4515 = vtanh.pop %v4501
    %v4516 = vxor.u32 %v4502, 2147483648
    %v4517 = vmul.f32 %v4516, 1.442695
    %v4518 = vpow.pop %v4517
    %v4519 = vadd.f32 %v4518, 1.0
    %v4520 = vrcp.pop %v4519
    %v4521 = vmul.f32 1.0, %v4520
    %v4522 = vmul.f32 %v4514, %v4411
    %v4523 = vmul.f32 %v4508, %v4515
    %v4524 = vadd.f32 %v4522, %v4523
    %v4525 = vtanh.pop %v4524
    %v4526 = vmul.f32 %v4521, %v4525
    %v4527 = vsel %vm2986, %v4526, %v4410
    %v4528 = vsel %vm2986, %v4524, %v4411
    %4529 = vst [vmem:[%s3397] sm:$0xff] %v4527
    %4530 = vst [vmem:[%s3399] sm:$0xff] %v4528
    // Predicated region
    $region38: #{_encoder_forward_jit.1} parent=1 // pred_check
      _
    $region39: #{_encoder_forward_jit.1} parent=1 // pred_check_branch
      %4532 = sbr.rel (0) target = $region41
    $region40: #{_encoder_forward_jit.1} parent=1 // pred_region
      _
    $region41: #{_encoder_forward_jit.1} parent=1 // pred_fallthru
      _
    // Predicated region
    $region42: #{_encoder_forward_jit.1} parent=1 // pred_check
      _
    $region43: #{_encoder_forward_jit.1} parent=1 // pred_check_branch
      %4534 = sbr.rel (0) target = $region45
    $region44: #{_encoder_forward_jit.1} parent=1 // pred_region
      _
    $region45: #{_encoder_forward_jit.1} parent=1 // pred_fallthru
      _
    // Predicated region
    $region46: #{_encoder_forward_jit.1} parent=1 // pred_check
      _
    $region47: #{_encoder_forward_jit.1} parent=1 // pred_check_branch
      %4536 = sbr.rel (0) target = $region49
    $region48: #{_encoder_forward_jit.1} parent=1 // pred_region
      _
    $region49: #{_encoder_forward_jit.1} parent=1 // pred_fallthru
      _
    // Predicated region
    $region50: #{_encoder_forward_jit.1} parent=1 // pred_check
      _
    $region51: #{_encoder_forward_jit.1} parent=1 // pred_check_branch
      %4538 = sbr.rel (0) target = $region53
    $region52: #{_encoder_forward_jit.1} parent=1 // pred_region
      _
    $region53: #{_encoder_forward_jit.1} parent=1 // pred_fallthru
      _
    %4539 = vsyncpa [#allocation5], 1

</llo_original>
